<compile_context>
chip_gen: v6e
topology: v6e:2x2x1
jax: 0.10.0
libtpu: 0.0.40
codegen_flags: <defaults>
</compile_context>

<pallas_src>
import functools

import jax
import jax.numpy as jnp
from jax import lax
from jax.experimental import pallas as pl
from jax.experimental.pallas import tpu as pltpu


def _round_up(x, m):
    return ((x + m - 1) // m) * m


def _rnn_decoder_kernel(emb_ref, w_ref, b_ref, e2dw_ref, e2db_ref, out_ref, *,
                        out_seq_len, hp, vp):
    """Full greedy-decoding loop (eval path of RNNDecoder.forward).

    emb_ref : [N, Hp]        initial GRU state (embedding, zero-padded H->Hp)
    w_ref   : [Vp+Hp, 6*Hp]  block weight: rows 0:Vp -> fused (d2e @ w_ih.T)
                             into gate blocks 0..2; rows Vp: -> w_hh.T into
                             gate blocks 3..5.  Each gate owns a 128-lane block.
    b_ref   : [1, 6*Hp]      [b_ih | b_hh], gate-block padded
    e2dw_ref: [Hp, Vp]       output projection weight (transposed, padded)
    e2db_ref: [1, Vp]        output projection bias (-1e30 in padded lanes)
    out_ref : [T, N]         int32 utterance
    """
    N = emb_ref.shape[0]

    state = emb_ref[...]                                   # [N, Hp] f32
    col = lax.broadcasted_iota(jnp.int32, (N, vp), 1)
    onehot = (col == 0).astype(jnp.float32)                # start token = 0

    W = w_ref[...]                                         # [Vp+Hp, 6*Hp]
    b = b_ref[...]                                         # [1, 6*Hp]
    e2dw = e2dw_ref[...]                                   # [Hp, Vp]
    e2db = e2db_ref[...]                                   # [1, Vp]

    # Static unroll: T is small and fixed; gives the scheduler cross-step
    # visibility so stores / one-hot builds hide under MXU+EUP latency.
    for t in range(out_seq_len):
        xcat = jnp.concatenate([onehot, state], axis=-1)   # [N, Vp+Hp]
        gates = jnp.dot(xcat, W, preferred_element_type=jnp.float32) + b
        # 128-lane-aligned gate views (PyTorch gate order r, z, n).
        i_r = gates[:, 0 * hp:1 * hp]
        i_z = gates[:, 1 * hp:2 * hp]
        i_n = gates[:, 2 * hp:3 * hp]
        h_r = gates[:, 3 * hp:4 * hp]
        h_z = gates[:, 4 * hp:5 * hp]
        h_n = gates[:, 5 * hp:6 * hp]

        r = jax.nn.sigmoid(i_r + h_r)
        z = jax.nn.sigmoid(i_z + h_z)
        n = jnp.tanh(i_n + r * h_n)
        state = (1.0 - z) * n + z * state                  # [N, Hp]

        # Output projection + greedy argmax (softmax dropped: argmax-invariant).
        logits = jnp.dot(state, e2dw, preferred_element_type=jnp.float32) + e2db
        token = jnp.argmax(logits, axis=-1).astype(jnp.int32)   # [N]

        out_ref[t, :] = token                              # off the carry chain
        onehot = (col == token[:, None]).astype(jnp.float32)

    # TODO(synk): training-mode StochasticTrajectory (categorical sampling +
    # log-prob bookkeeping) is not implemented; eval path only.


def rnn_decoder_forward(embedding, params, out_seq_len):
    """Pallas implementation of RNNDecoder.forward (eval mode).

    Returns (utterance [T, N] int32, None).
    """
    N, E = embedding.shape
    V = params["d2e"].shape[0]
    H = E
    Hp = _round_up(H, 128)        # each gate / the hidden state gets a full lane tile
    Vp = _round_up(V, 128)        # lane-dense vocab axis
    f32 = jnp.float32

    # --- fuse embedding lookup into the GRU input projection ----------------
    fused_wih = jnp.dot(params["d2e"].astype(f32), params["w_ih"].T.astype(f32))  # [V, 3H]
    w_hh_t = params["w_hh"].T.astype(f32)                                         # [H, 3H]

    def gate_pad_w(w):            # [rows, 3H] -> [rows, 3*Hp], gate-block aligned
        rows = w.shape[0]
        out = jnp.zeros((rows, 3 * Hp), f32)
        for g in range(3):
            out = out.at[:, g * Hp:g * Hp + H].set(w[:, g * H:(g + 1) * H])
        return out

    def gate_pad_b(bv):           # [3H] -> [3*Hp]
        out = jnp.zeros((3 * Hp,), f32)
        for g in range(3):
            out = out.at[g * Hp:g * Hp + H].set(bv[g * H:(g + 1) * H].astype(f32))
        return out

    Wi = jnp.pad(gate_pad_w(fused_wih), ((0, Vp - V), (0, 0)))   # [Vp, 3Hp]
    Wh = jnp.pad(gate_pad_w(w_hh_t), ((0, Hp - H), (0, 0)))      # [Hp, 3Hp]

    # --- merge input & hidden projections into one block matrix -------------
    W_big = jnp.zeros((Vp + Hp, 6 * Hp), f32)
    W_big = W_big.at[:Vp, :3 * Hp].set(Wi)
    W_big = W_big.at[Vp:, 3 * Hp:].set(Wh)
    b_big = jnp.concatenate([gate_pad_b(params["b_ih"]),
                             gate_pad_b(params["b_hh"])]).reshape(1, 6 * Hp)

    # --- output projection, lane-padded; padded vocab lanes can never win ---
    e2dw_pad = jnp.zeros((Hp, Vp), f32).at[:H, :V].set(params["e2d_w"].T.astype(f32))
    e2db_pad = jnp.full((1, Vp), -1e30, f32).at[:, :V].set(params["e2d_b"].astype(f32))

    emb_pad = jnp.pad(embedding.astype(f32), ((0, 0), (0, Hp - H)))  # [N, Hp]

    vmem = pl.BlockSpec(memory_space=pltpu.MemorySpace.VMEM)
    utterance = pl.pallas_call(
        functools.partial(_rnn_decoder_kernel,
                          out_seq_len=out_seq_len, hp=Hp, vp=Vp),
        out_shape=jax.ShapeDtypeStruct((out_seq_len, N), jnp.int32),
        in_specs=[vmem] * 5,
        out_specs=vmem,
    )(emb_pad, W_big, b_big, e2dw_pad, e2db_pad)
    return utterance, None


def init_params(key, embedding_size, vocab_size):
    """Deterministic synthetic parameters matching the module's shapes."""
    E, V, H = embedding_size, vocab_size, embedding_size
    ks = jax.random.split(key, 7)
    bound = 1.0 / jnp.sqrt(jnp.float32(H))
    u = lambda k, shape: jax.random.uniform(k, shape, jnp.float32, -bound, bound)
    return {
        "d2e": jax.random.normal(ks[0], (V, E), jnp.float32),   # nn.Embedding
        "w_ih": u(ks[1], (3 * H, E)),                           # GRUCell.weight_ih
        "w_hh": u(ks[2], (3 * H, H)),                           # GRUCell.weight_hh
        "b_ih": u(ks[3], (3 * H,)),                             # GRUCell.bias_ih
        "b_hh": u(ks[4], (3 * H,)),                             # GRUCell.bias_hh
        "e2d_w": u(ks[5], (V, E)),                              # Linear.weight
        "e2d_b": u(ks[6], (V,)),                                # Linear.bias
    }


if __name__ == "__main__":
    batch = 8
    embedding_size = 32
    vocab_size = 16
    out_seq_len = 8

    key = jax.random.PRNGKey(0)
    k_emb, k_par = jax.random.split(key)
    embedding = jax.random.normal(k_emb, (batch, embedding_size), jnp.float32)
    params = init_params(k_par, embedding_size, vocab_size)

    utterance, traj = rnn_decoder_forward(embedding, params, out_seq_len)
    utterance = jax.block_until_ready(utterance)

    assert utterance.shape == (out_seq_len, batch)
    assert utterance.dtype == jnp.int32
    assert traj is None
    assert bool(jnp.all((utterance >= 0) & (utterance < vocab_size)))
    print("KERNEL_OK")
</pallas_src>

<mosaic_0001>
module attributes {stable_mosaic.version = 11 : i64} {
  func.func @_rnn_decoder_kernel(%arg0: memref<8x128xf32, #tpu.memory_space<vmem>>, %arg1: memref<256x768xf32, #tpu.memory_space<vmem>>, %arg2: memref<1x768xf32, #tpu.memory_space<vmem>>, %arg3: memref<128x128xf32, #tpu.memory_space<vmem>>, %arg4: memref<1x128xf32, #tpu.memory_space<vmem>>, %arg5: memref<8x8xi32, #tpu.memory_space<vmem>>) attributes {dimension_semantics = [], scalar_prefetch = 0 : i64, scratch_operands = 0 : i64, tpu.core_type = #tpu.core_type<tc>} {
    %c0 = arith.constant 0 : index
    %c0_0 = arith.constant 0 : index
    %0 = vector.load %arg0[%c0, %c0_0] : memref<8x128xf32, #tpu.memory_space<vmem>>, vector<8x128xf32>
    %1 = tpu.iota {dimensions = array<i32: 1>} : vector<8x128xi32>
    %c0_i32 = arith.constant 0 : i32
    %2 = vector.broadcast %c0_i32 : i32 to vector<8x128xi32>
    %3 = arith.cmpi eq, %1, %2 : vector<8x128xi32>
    %4 = arith.extui %3 : vector<8x128xi1> to vector<8x128xi32>
    %5 = arith.sitofp %4 : vector<8x128xi32> to vector<8x128xf32>
    %c0_1 = arith.constant 0 : index
    %c0_2 = arith.constant 0 : index
    %6 = vector.load %arg1[%c0_1, %c0_2] : memref<256x768xf32, #tpu.memory_space<vmem>>, vector<256x768xf32>
    %c0_3 = arith.constant 0 : index
    %c0_4 = arith.constant 0 : index
    %7 = vector.load %arg2[%c0_3, %c0_4] : memref<1x768xf32, #tpu.memory_space<vmem>>, vector<1x768xf32>
    %c0_5 = arith.constant 0 : index
    %c0_6 = arith.constant 0 : index
    %8 = vector.load %arg3[%c0_5, %c0_6] : memref<128x128xf32, #tpu.memory_space<vmem>>, vector<128x128xf32>
    %c0_7 = arith.constant 0 : index
    %c0_8 = arith.constant 0 : index
    %9 = vector.load %arg4[%c0_7, %c0_8] : memref<1x128xf32, #tpu.memory_space<vmem>>, vector<1x128xf32>
    %10 = tpu.concatenate %5, %0 in 1 : vector<8x128xf32>, vector<8x128xf32> -> vector<8x256xf32>
    %cst = arith.constant dense<0.000000e+00> : vector<8x768xf32>
    %11 = tpu.matmul %10, %6, %cst {dimension_numbers = #tpu.dot_dimension_numbers<[1], [0], [0], [1], [0, 0, 1, 1], [], []>} : vector<8x256xf32>, vector<256x768xf32>, vector<8x768xf32> -> vector<8x768xf32>
    %12 = vector.broadcast %7 : vector<1x768xf32> to vector<8x768xf32>
    %13 = arith.addf %11, %12 : vector<8x768xf32>
    %14 = vector.extract_strided_slice %13 {offsets = [0, 0], sizes = [8, 128], strides = [1, 1]} : vector<8x768xf32> to vector<8x128xf32>
    %15 = vector.extract_strided_slice %13 {offsets = [0, 128], sizes = [8, 128], strides = [1, 1]} : vector<8x768xf32> to vector<8x128xf32>
    %16 = vector.extract_strided_slice %13 {offsets = [0, 256], sizes = [8, 128], strides = [1, 1]} : vector<8x768xf32> to vector<8x128xf32>
    %17 = vector.extract_strided_slice %13 {offsets = [0, 384], sizes = [8, 128], strides = [1, 1]} : vector<8x768xf32> to vector<8x128xf32>
    %18 = vector.extract_strided_slice %13 {offsets = [0, 512], sizes = [8, 128], strides = [1, 1]} : vector<8x768xf32> to vector<8x128xf32>
    %19 = vector.extract_strided_slice %13 {offsets = [0, 640], sizes = [8, 128], strides = [1, 1]} : vector<8x768xf32> to vector<8x128xf32>
    %20 = arith.addf %14, %17 : vector<8x128xf32>
    %21 = arith.negf %20 : vector<8x128xf32>
    %22 = math.exp %21 : vector<8x128xf32>
    %cst_9 = arith.constant 1.000000e+00 : f32
    %23 = vector.broadcast %cst_9 : f32 to vector<8x128xf32>
    %24 = arith.addf %23, %22 : vector<8x128xf32>
    %25 = arith.divf %23, %24 : vector<8x128xf32>
    %26 = arith.addf %15, %18 : vector<8x128xf32>
    %27 = arith.negf %26 : vector<8x128xf32>
    %28 = math.exp %27 : vector<8x128xf32>
    %cst_10 = arith.constant 1.000000e+00 : f32
    %29 = vector.broadcast %cst_10 : f32 to vector<8x128xf32>
    %30 = arith.addf %29, %28 : vector<8x128xf32>
    %31 = arith.divf %29, %30 : vector<8x128xf32>
    %32 = arith.mulf %25, %19 : vector<8x128xf32>
    %33 = arith.addf %16, %32 : vector<8x128xf32>
    %34 = math.tanh %33 : vector<8x128xf32>
    %cst_11 = arith.constant 1.000000e+00 : f32
    %35 = vector.broadcast %cst_11 : f32 to vector<8x128xf32>
    %36 = arith.subf %35, %31 : vector<8x128xf32>
    %37 = arith.mulf %36, %34 : vector<8x128xf32>
    %38 = arith.mulf %31, %0 : vector<8x128xf32>
    %39 = arith.addf %37, %38 : vector<8x128xf32>
    %cst_12 = arith.constant dense<0.000000e+00> : vector<8x128xf32>
    %40 = tpu.matmul %39, %8, %cst_12 {dimension_numbers = #tpu.dot_dimension_numbers<[1], [0], [0], [1], [0, 0, 1, 1], [], []>} : vector<8x128xf32>, vector<128x128xf32>, vector<8x128xf32> -> vector<8x128xf32>
    %41 = vector.broadcast %9 : vector<1x128xf32> to vector<8x128xf32>
    %42 = arith.addf %40, %41 : vector<8x128xf32>
    %43 = tpu.reduce_index %42 {axis = 1 : i32, kind = #tpu.reduction_kind<arg_max>} : vector<8x128xf32> -> vector<8xi32>
    %c0_13 = arith.constant 0 : index
    %c0_14 = arith.constant 0 : index
    %44 = vector.load %arg5[%c0_13, %c0_14] : memref<8x8xi32, #tpu.memory_space<vmem>>, vector<1x8xi32>
    %45 = vector.shape_cast %44 : vector<1x8xi32> to vector<8xi32>
    %46 = vector.shape_cast %43 : vector<8xi32> to vector<1x8xi32>
    tpu.vector_store %arg5[%c0_13, %c0_14], %46 {strides = array<i32>} : memref<8x8xi32, #tpu.memory_space<vmem>>, vector<1x8xi32>,
    %47 = vector.shape_cast %43 : vector<8xi32> to vector<8x1xi32>
    %48 = vector.broadcast %47 : vector<8x1xi32> to vector<8x128xi32>
    %49 = arith.cmpi eq, %1, %48 : vector<8x128xi32>
    %50 = arith.extui %49 : vector<8x128xi1> to vector<8x128xi32>
    %51 = arith.sitofp %50 : vector<8x128xi32> to vector<8x128xf32>
    %52 = tpu.concatenate %51, %39 in 1 : vector<8x128xf32>, vector<8x128xf32> -> vector<8x256xf32>
    %cst_15 = arith.constant dense<0.000000e+00> : vector<8x768xf32>
    %53 = tpu.matmul %52, %6, %cst_15 {dimension_numbers = #tpu.dot_dimension_numbers<[1], [0], [0], [1], [0, 0, 1, 1], [], []>} : vector<8x256xf32>, vector<256x768xf32>, vector<8x768xf32> -> vector<8x768xf32>
    %54 = vector.broadcast %7 : vector<1x768xf32> to vector<8x768xf32>
    %55 = arith.addf %53, %54 : vector<8x768xf32>
    %56 = vector.extract_strided_slice %55 {offsets = [0, 0], sizes = [8, 128], strides = [1, 1]} : vector<8x768xf32> to vector<8x128xf32>
    %57 = vector.extract_strided_slice %55 {offsets = [0, 128], sizes = [8, 128], strides = [1, 1]} : vector<8x768xf32> to vector<8x128xf32>
    %58 = vector.extract_strided_slice %55 {offsets = [0, 256], sizes = [8, 128], strides = [1, 1]} : vector<8x768xf32> to vector<8x128xf32>
    %59 = vector.extract_strided_slice %55 {offsets = [0, 384], sizes = [8, 128], strides = [1, 1]} : vector<8x768xf32> to vector<8x128xf32>
    %60 = vector.extract_strided_slice %55 {offsets = [0, 512], sizes = [8, 128], strides = [1, 1]} : vector<8x768xf32> to vector<8x128xf32>
    %61 = vector.extract_strided_slice %55 {offsets = [0, 640], sizes = [8, 128], strides = [1, 1]} : vector<8x768xf32> to vector<8x128xf32>
    %62 = arith.addf %56, %59 : vector<8x128xf32>
    %63 = arith.negf %62 : vector<8x128xf32>
    %64 = math.exp %63 : vector<8x128xf32>
    %cst_16 = arith.constant 1.000000e+00 : f32
    %65 = vector.broadcast %cst_16 : f32 to vector<8x128xf32>
    %66 = arith.addf %65, %64 : vector<8x128xf32>
    %67 = arith.divf %65, %66 : vector<8x128xf32>
    %68 = arith.addf %57, %60 : vector<8x128xf32>
    %69 = arith.negf %68 : vector<8x128xf32>
    %70 = math.exp %69 : vector<8x128xf32>
    %cst_17 = arith.constant 1.000000e+00 : f32
    %71 = vector.broadcast %cst_17 : f32 to vector<8x128xf32>
    %72 = arith.addf %71, %70 : vector<8x128xf32>
    %73 = arith.divf %71, %72 : vector<8x128xf32>
    %74 = arith.mulf %67, %61 : vector<8x128xf32>
    %75 = arith.addf %58, %74 : vector<8x128xf32>
    %76 = math.tanh %75 : vector<8x128xf32>
    %cst_18 = arith.constant 1.000000e+00 : f32
    %77 = vector.broadcast %cst_18 : f32 to vector<8x128xf32>
    %78 = arith.subf %77, %73 : vector<8x128xf32>
    %79 = arith.mulf %78, %76 : vector<8x128xf32>
    %80 = arith.mulf %73, %39 : vector<8x128xf32>
    %81 = arith.addf %79, %80 : vector<8x128xf32>
    %cst_19 = arith.constant dense<0.000000e+00> : vector<8x128xf32>
    %82 = tpu.matmul %81, %8, %cst_19 {dimension_numbers = #tpu.dot_dimension_numbers<[1], [0], [0], [1], [0, 0, 1, 1], [], []>} : vector<8x128xf32>, vector<128x128xf32>, vector<8x128xf32> -> vector<8x128xf32>
    %83 = vector.broadcast %9 : vector<1x128xf32> to vector<8x128xf32>
    %84 = arith.addf %82, %83 : vector<8x128xf32>
    %85 = tpu.reduce_index %84 {axis = 1 : i32, kind = #tpu.reduction_kind<arg_max>} : vector<8x128xf32> -> vector<8xi32>
    %c1 = arith.constant 1 : index
    %c0_20 = arith.constant 0 : index
    %86 = vector.load %arg5[%c1, %c0_20] : memref<8x8xi32, #tpu.memory_space<vmem>>, vector<1x8xi32>
    %87 = vector.shape_cast %86 : vector<1x8xi32> to vector<8xi32>
    %88 = vector.shape_cast %85 : vector<8xi32> to vector<1x8xi32>
    tpu.vector_store %arg5[%c1, %c0_20], %88 {strides = array<i32>} : memref<8x8xi32, #tpu.memory_space<vmem>>, vector<1x8xi32>,
    %89 = vector.shape_cast %85 : vector<8xi32> to vector<8x1xi32>
    %90 = vector.broadcast %89 : vector<8x1xi32> to vector<8x128xi32>
    %91 = arith.cmpi eq, %1, %90 : vector<8x128xi32>
    %92 = arith.extui %91 : vector<8x128xi1> to vector<8x128xi32>
    %93 = arith.sitofp %92 : vector<8x128xi32> to vector<8x128xf32>
    %94 = tpu.concatenate %93, %81 in 1 : vector<8x128xf32>, vector<8x128xf32> -> vector<8x256xf32>
    %cst_21 = arith.constant dense<0.000000e+00> : vector<8x768xf32>
    %95 = tpu.matmul %94, %6, %cst_21 {dimension_numbers = #tpu.dot_dimension_numbers<[1], [0], [0], [1], [0, 0, 1, 1], [], []>} : vector<8x256xf32>, vector<256x768xf32>, vector<8x768xf32> -> vector<8x768xf32>
    %96 = vector.broadcast %7 : vector<1x768xf32> to vector<8x768xf32>
    %97 = arith.addf %95, %96 : vector<8x768xf32>
    %98 = vector.extract_strided_slice %97 {offsets = [0, 0], sizes = [8, 128], strides = [1, 1]} : vector<8x768xf32> to vector<8x128xf32>
    %99 = vector.extract_strided_slice %97 {offsets = [0, 128], sizes = [8, 128], strides = [1, 1]} : vector<8x768xf32> to vector<8x128xf32>
    %100 = vector.extract_strided_slice %97 {offsets = [0, 256], sizes = [8, 128], strides = [1, 1]} : vector<8x768xf32> to vector<8x128xf32>
    %101 = vector.extract_strided_slice %97 {offsets = [0, 384], sizes = [8, 128], strides = [1, 1]} : vector<8x768xf32> to vector<8x128xf32>
    %102 = vector.extract_strided_slice %97 {offsets = [0, 512], sizes = [8, 128], strides = [1, 1]} : vector<8x768xf32> to vector<8x128xf32>
    %103 = vector.extract_strided_slice %97 {offsets = [0, 640], sizes = [8, 128], strides = [1, 1]} : vector<8x768xf32> to vector<8x128xf32>
    %104 = arith.addf %98, %101 : vector<8x128xf32>
    %105 = arith.negf %104 : vector<8x128xf32>
    %106 = math.exp %105 : vector<8x128xf32>
    %cst_22 = arith.constant 1.000000e+00 : f32
    %107 = vector.broadcast %cst_22 : f32 to vector<8x128xf32>
    %108 = arith.addf %107, %106 : vector<8x128xf32>
    %109 = arith.divf %107, %108 : vector<8x128xf32>
    %110 = arith.addf %99, %102 : vector<8x128xf32>
    %111 = arith.negf %110 : vector<8x128xf32>
    %112 = math.exp %111 : vector<8x128xf32>
    %cst_23 = arith.constant 1.000000e+00 : f32
    %113 = vector.broadcast %cst_23 : f32 to vector<8x128xf32>
    %114 = arith.addf %113, %112 : vector<8x128xf32>
    %115 = arith.divf %113, %114 : vector<8x128xf32>
    %116 = arith.mulf %109, %103 : vector<8x128xf32>
    %117 = arith.addf %100, %116 : vector<8x128xf32>
    %118 = math.tanh %117 : vector<8x128xf32>
    %cst_24 = arith.constant 1.000000e+00 : f32
    %119 = vector.broadcast %cst_24 : f32 to vector<8x128xf32>
    %120 = arith.subf %119, %115 : vector<8x128xf32>
    %121 = arith.mulf %120, %118 : vector<8x128xf32>
    %122 = arith.mulf %115, %81 : vector<8x128xf32>
    %123 = arith.addf %121, %122 : vector<8x128xf32>
    %cst_25 = arith.constant dense<0.000000e+00> : vector<8x128xf32>
    %124 = tpu.matmul %123, %8, %cst_25 {dimension_numbers = #tpu.dot_dimension_numbers<[1], [0], [0], [1], [0, 0, 1, 1], [], []>} : vector<8x128xf32>, vector<128x128xf32>, vector<8x128xf32> -> vector<8x128xf32>
    %125 = vector.broadcast %9 : vector<1x128xf32> to vector<8x128xf32>
    %126 = arith.addf %124, %125 : vector<8x128xf32>
    %127 = tpu.reduce_index %126 {axis = 1 : i32, kind = #tpu.reduction_kind<arg_max>} : vector<8x128xf32> -> vector<8xi32>
    %c2 = arith.constant 2 : index
    %c0_26 = arith.constant 0 : index
    %128 = vector.load %arg5[%c2, %c0_26] : memref<8x8xi32, #tpu.memory_space<vmem>>, vector<1x8xi32>
    %129 = vector.shape_cast %128 : vector<1x8xi32> to vector<8xi32>
    %130 = vector.shape_cast %127 : vector<8xi32> to vector<1x8xi32>
    tpu.vector_store %arg5[%c2, %c0_26], %130 {strides = array<i32>} : memref<8x8xi32, #tpu.memory_space<vmem>>, vector<1x8xi32>,
    %131 = vector.shape_cast %127 : vector<8xi32> to vector<8x1xi32>
    %132 = vector.broadcast %131 : vector<8x1xi32> to vector<8x128xi32>
    %133 = arith.cmpi eq, %1, %132 : vector<8x128xi32>
    %134 = arith.extui %133 : vector<8x128xi1> to vector<8x128xi32>
    %135 = arith.sitofp %134 : vector<8x128xi32> to vector<8x128xf32>
    %136 = tpu.concatenate %135, %123 in 1 : vector<8x128xf32>, vector<8x128xf32> -> vector<8x256xf32>
    %cst_27 = arith.constant dense<0.000000e+00> : vector<8x768xf32>
    %137 = tpu.matmul %136, %6, %cst_27 {dimension_numbers = #tpu.dot_dimension_numbers<[1], [0], [0], [1], [0, 0, 1, 1], [], []>} : vector<8x256xf32>, vector<256x768xf32>, vector<8x768xf32> -> vector<8x768xf32>
    %138 = vector.broadcast %7 : vector<1x768xf32> to vector<8x768xf32>
    %139 = arith.addf %137, %138 : vector<8x768xf32>
    %140 = vector.extract_strided_slice %139 {offsets = [0, 0], sizes = [8, 128], strides = [1, 1]} : vector<8x768xf32> to vector<8x128xf32>
    %141 = vector.extract_strided_slice %139 {offsets = [0, 128], sizes = [8, 128], strides = [1, 1]} : vector<8x768xf32> to vector<8x128xf32>
    %142 = vector.extract_strided_slice %139 {offsets = [0, 256], sizes = [8, 128], strides = [1, 1]} : vector<8x768xf32> to vector<8x128xf32>
    %143 = vector.extract_strided_slice %139 {offsets = [0, 384], sizes = [8, 128], strides = [1, 1]} : vector<8x768xf32> to vector<8x128xf32>
    %144 = vector.extract_strided_slice %139 {offsets = [0, 512], sizes = [8, 128], strides = [1, 1]} : vector<8x768xf32> to vector<8x128xf32>
    %145 = vector.extract_strided_slice %139 {offsets = [0, 640], sizes = [8, 128], strides = [1, 1]} : vector<8x768xf32> to vector<8x128xf32>
    %146 = arith.addf %140, %143 : vector<8x128xf32>
    %147 = arith.negf %146 : vector<8x128xf32>
    %148 = math.exp %147 : vector<8x128xf32>
    %cst_28 = arith.constant 1.000000e+00 : f32
    %149 = vector.broadcast %cst_28 : f32 to vector<8x128xf32>
    %150 = arith.addf %149, %148 : vector<8x128xf32>
    %151 = arith.divf %149, %150 : vector<8x128xf32>
    %152 = arith.addf %141, %144 : vector<8x128xf32>
    %153 = arith.negf %152 : vector<8x128xf32>
    %154 = math.exp %153 : vector<8x128xf32>
    %cst_29 = arith.constant 1.000000e+00 : f32
    %155 = vector.broadcast %cst_29 : f32 to vector<8x128xf32>
    %156 = arith.addf %155, %154 : vector<8x128xf32>
    %157 = arith.divf %155, %156 : vector<8x128xf32>
    %158 = arith.mulf %151, %145 : vector<8x128xf32>
    %159 = arith.addf %142, %158 : vector<8x128xf32>
    %160 = math.tanh %159 : vector<8x128xf32>
    %cst_30 = arith.constant 1.000000e+00 : f32
    %161 = vector.broadcast %cst_30 : f32 to vector<8x128xf32>
    %162 = arith.subf %161, %157 : vector<8x128xf32>
    %163 = arith.mulf %162, %160 : vector<8x128xf32>
    %164 = arith.mulf %157, %123 : vector<8x128xf32>
    %165 = arith.addf %163, %164 : vector<8x128xf32>
    %cst_31 = arith.constant dense<0.000000e+00> : vector<8x128xf32>
    %166 = tpu.matmul %165, %8, %cst_31 {dimension_numbers = #tpu.dot_dimension_numbers<[1], [0], [0], [1], [0, 0, 1, 1], [], []>} : vector<8x128xf32>, vector<128x128xf32>, vector<8x128xf32> -> vector<8x128xf32>
    %167 = vector.broadcast %9 : vector<1x128xf32> to vector<8x128xf32>
    %168 = arith.addf %166, %167 : vector<8x128xf32>
    %169 = tpu.reduce_index %168 {axis = 1 : i32, kind = #tpu.reduction_kind<arg_max>} : vector<8x128xf32> -> vector<8xi32>
    %c3 = arith.constant 3 : index
    %c0_32 = arith.constant 0 : index
    %170 = vector.load %arg5[%c3, %c0_32] : memref<8x8xi32, #tpu.memory_space<vmem>>, vector<1x8xi32>
    %171 = vector.shape_cast %170 : vector<1x8xi32> to vector<8xi32>
    %172 = vector.shape_cast %169 : vector<8xi32> to vector<1x8xi32>
    tpu.vector_store %arg5[%c3, %c0_32], %172 {strides = array<i32>} : memref<8x8xi32, #tpu.memory_space<vmem>>, vector<1x8xi32>,
    %173 = vector.shape_cast %169 : vector<8xi32> to vector<8x1xi32>
    %174 = vector.broadcast %173 : vector<8x1xi32> to vector<8x128xi32>
    %175 = arith.cmpi eq, %1, %174 : vector<8x128xi32>
    %176 = arith.extui %175 : vector<8x128xi1> to vector<8x128xi32>
    %177 = arith.sitofp %176 : vector<8x128xi32> to vector<8x128xf32>
    %178 = tpu.concatenate %177, %165 in 1 : vector<8x128xf32>, vector<8x128xf32> -> vector<8x256xf32>
    %cst_33 = arith.constant dense<0.000000e+00> : vector<8x768xf32>
    %179 = tpu.matmul %178, %6, %cst_33 {dimension_numbers = #tpu.dot_dimension_numbers<[1], [0], [0], [1], [0, 0, 1, 1], [], []>} : vector<8x256xf32>, vector<256x768xf32>, vector<8x768xf32> -> vector<8x768xf32>
    %180 = vector.broadcast %7 : vector<1x768xf32> to vector<8x768xf32>
    %181 = arith.addf %179, %180 : vector<8x768xf32>
    %182 = vector.extract_strided_slice %181 {offsets = [0, 0], sizes = [8, 128], strides = [1, 1]} : vector<8x768xf32> to vector<8x128xf32>
    %183 = vector.extract_strided_slice %181 {offsets = [0, 128], sizes = [8, 128], strides = [1, 1]} : vector<8x768xf32> to vector<8x128xf32>
    %184 = vector.extract_strided_slice %181 {offsets = [0, 256], sizes = [8, 128], strides = [1, 1]} : vector<8x768xf32> to vector<8x128xf32>
    %185 = vector.extract_strided_slice %181 {offsets = [0, 384], sizes = [8, 128], strides = [1, 1]} : vector<8x768xf32> to vector<8x128xf32>
    %186 = vector.extract_strided_slice %181 {offsets = [0, 512], sizes = [8, 128], strides = [1, 1]} : vector<8x768xf32> to vector<8x128xf32>
    %187 = vector.extract_strided_slice %181 {offsets = [0, 640], sizes = [8, 128], strides = [1, 1]} : vector<8x768xf32> to vector<8x128xf32>
    %188 = arith.addf %182, %185 : vector<8x128xf32>
    %189 = arith.negf %188 : vector<8x128xf32>
    %190 = math.exp %189 : vector<8x128xf32>
    %cst_34 = arith.constant 1.000000e+00 : f32
    %191 = vector.broadcast %cst_34 : f32 to vector<8x128xf32>
    %192 = arith.addf %191, %190 : vector<8x128xf32>
    %193 = arith.divf %191, %192 : vector<8x128xf32>
    %194 = arith.addf %183, %186 : vector<8x128xf32>
    %195 = arith.negf %194 : vector<8x128xf32>
    %196 = math.exp %195 : vector<8x128xf32>
    %cst_35 = arith.constant 1.000000e+00 : f32
    %197 = vector.broadcast %cst_35 : f32 to vector<8x128xf32>
    %198 = arith.addf %197, %196 : vector<8x128xf32>
    %199 = arith.divf %197, %198 : vector<8x128xf32>
    %200 = arith.mulf %193, %187 : vector<8x128xf32>
    %201 = arith.addf %184, %200 : vector<8x128xf32>
    %202 = math.tanh %201 : vector<8x128xf32>
    %cst_36 = arith.constant 1.000000e+00 : f32
    %203 = vector.broadcast %cst_36 : f32 to vector<8x128xf32>
    %204 = arith.subf %203, %199 : vector<8x128xf32>
    %205 = arith.mulf %204, %202 : vector<8x128xf32>
    %206 = arith.mulf %199, %165 : vector<8x128xf32>
    %207 = arith.addf %205, %206 : vector<8x128xf32>
    %cst_37 = arith.constant dense<0.000000e+00> : vector<8x128xf32>
    %208 = tpu.matmul %207, %8, %cst_37 {dimension_numbers = #tpu.dot_dimension_numbers<[1], [0], [0], [1], [0, 0, 1, 1], [], []>} : vector<8x128xf32>, vector<128x128xf32>, vector<8x128xf32> -> vector<8x128xf32>
    %209 = vector.broadcast %9 : vector<1x128xf32> to vector<8x128xf32>
    %210 = arith.addf %208, %209 : vector<8x128xf32>
    %211 = tpu.reduce_index %210 {axis = 1 : i32, kind = #tpu.reduction_kind<arg_max>} : vector<8x128xf32> -> vector<8xi32>
    %c4 = arith.constant 4 : index
    %c0_38 = arith.constant 0 : index
    %212 = vector.load %arg5[%c4, %c0_38] : memref<8x8xi32, #tpu.memory_space<vmem>>, vector<1x8xi32>
    %213 = vector.shape_cast %212 : vector<1x8xi32> to vector<8xi32>
    %214 = vector.shape_cast %211 : vector<8xi32> to vector<1x8xi32>
    tpu.vector_store %arg5[%c4, %c0_38], %214 {strides = array<i32>} : memref<8x8xi32, #tpu.memory_space<vmem>>, vector<1x8xi32>,
    %215 = vector.shape_cast %211 : vector<8xi32> to vector<8x1xi32>
    %216 = vector.broadcast %215 : vector<8x1xi32> to vector<8x128xi32>
    %217 = arith.cmpi eq, %1, %216 : vector<8x128xi32>
    %218 = arith.extui %217 : vector<8x128xi1> to vector<8x128xi32>
    %219 = arith.sitofp %218 : vector<8x128xi32> to vector<8x128xf32>
    %220 = tpu.concatenate %219, %207 in 1 : vector<8x128xf32>, vector<8x128xf32> -> vector<8x256xf32>
    %cst_39 = arith.constant dense<0.000000e+00> : vector<8x768xf32>
    %221 = tpu.matmul %220, %6, %cst_39 {dimension_numbers = #tpu.dot_dimension_numbers<[1], [0], [0], [1], [0, 0, 1, 1], [], []>} : vector<8x256xf32>, vector<256x768xf32>, vector<8x768xf32> -> vector<8x768xf32>
    %222 = vector.broadcast %7 : vector<1x768xf32> to vector<8x768xf32>
    %223 = arith.addf %221, %222 : vector<8x768xf32>
    %224 = vector.extract_strided_slice %223 {offsets = [0, 0], sizes = [8, 128], strides = [1, 1]} : vector<8x768xf32> to vector<8x128xf32>
    %225 = vector.extract_strided_slice %223 {offsets = [0, 128], sizes = [8, 128], strides = [1, 1]} : vector<8x768xf32> to vector<8x128xf32>
    %226 = vector.extract_strided_slice %223 {offsets = [0, 256], sizes = [8, 128], strides = [1, 1]} : vector<8x768xf32> to vector<8x128xf32>
    %227 = vector.extract_strided_slice %223 {offsets = [0, 384], sizes = [8, 128], strides = [1, 1]} : vector<8x768xf32> to vector<8x128xf32>
    %228 = vector.extract_strided_slice %223 {offsets = [0, 512], sizes = [8, 128], strides = [1, 1]} : vector<8x768xf32> to vector<8x128xf32>
    %229 = vector.extract_strided_slice %223 {offsets = [0, 640], sizes = [8, 128], strides = [1, 1]} : vector<8x768xf32> to vector<8x128xf32>
    %230 = arith.addf %224, %227 : vector<8x128xf32>
    %231 = arith.negf %230 : vector<8x128xf32>
    %232 = math.exp %231 : vector<8x128xf32>
    %cst_40 = arith.constant 1.000000e+00 : f32
    %233 = vector.broadcast %cst_40 : f32 to vector<8x128xf32>
    %234 = arith.addf %233, %232 : vector<8x128xf32>
    %235 = arith.divf %233, %234 : vector<8x128xf32>
    %236 = arith.addf %225, %228 : vector<8x128xf32>
    %237 = arith.negf %236 : vector<8x128xf32>
    %238 = math.exp %237 : vector<8x128xf32>
    %cst_41 = arith.constant 1.000000e+00 : f32
    %239 = vector.broadcast %cst_41 : f32 to vector<8x128xf32>
    %240 = arith.addf %239, %238 : vector<8x128xf32>
    %241 = arith.divf %239, %240 : vector<8x128xf32>
    %242 = arith.mulf %235, %229 : vector<8x128xf32>
    %243 = arith.addf %226, %242 : vector<8x128xf32>
    %244 = math.tanh %243 : vector<8x128xf32>
    %cst_42 = arith.constant 1.000000e+00 : f32
    %245 = vector.broadcast %cst_42 : f32 to vector<8x128xf32>
    %246 = arith.subf %245, %241 : vector<8x128xf32>
    %247 = arith.mulf %246, %244 : vector<8x128xf32>
    %248 = arith.mulf %241, %207 : vector<8x128xf32>
    %249 = arith.addf %247, %248 : vector<8x128xf32>
    %cst_43 = arith.constant dense<0.000000e+00> : vector<8x128xf32>
    %250 = tpu.matmul %249, %8, %cst_43 {dimension_numbers = #tpu.dot_dimension_numbers<[1], [0], [0], [1], [0, 0, 1, 1], [], []>} : vector<8x128xf32>, vector<128x128xf32>, vector<8x128xf32> -> vector<8x128xf32>
    %251 = vector.broadcast %9 : vector<1x128xf32> to vector<8x128xf32>
    %252 = arith.addf %250, %251 : vector<8x128xf32>
    %253 = tpu.reduce_index %252 {axis = 1 : i32, kind = #tpu.reduction_kind<arg_max>} : vector<8x128xf32> -> vector<8xi32>
    %c5 = arith.constant 5 : index
    %c0_44 = arith.constant 0 : index
    %254 = vector.load %arg5[%c5, %c0_44] : memref<8x8xi32, #tpu.memory_space<vmem>>, vector<1x8xi32>
    %255 = vector.shape_cast %254 : vector<1x8xi32> to vector<8xi32>
    %256 = vector.shape_cast %253 : vector<8xi32> to vector<1x8xi32>
    tpu.vector_store %arg5[%c5, %c0_44], %256 {strides = array<i32>} : memref<8x8xi32, #tpu.memory_space<vmem>>, vector<1x8xi32>,
    %257 = vector.shape_cast %253 : vector<8xi32> to vector<8x1xi32>
    %258 = vector.broadcast %257 : vector<8x1xi32> to vector<8x128xi32>
    %259 = arith.cmpi eq, %1, %258 : vector<8x128xi32>
    %260 = arith.extui %259 : vector<8x128xi1> to vector<8x128xi32>
    %261 = arith.sitofp %260 : vector<8x128xi32> to vector<8x128xf32>
    %262 = tpu.concatenate %261, %249 in 1 : vector<8x128xf32>, vector<8x128xf32> -> vector<8x256xf32>
    %cst_45 = arith.constant dense<0.000000e+00> : vector<8x768xf32>
    %263 = tpu.matmul %262, %6, %cst_45 {dimension_numbers = #tpu.dot_dimension_numbers<[1], [0], [0], [1], [0, 0, 1, 1], [], []>} : vector<8x256xf32>, vector<256x768xf32>, vector<8x768xf32> -> vector<8x768xf32>
    %264 = vector.broadcast %7 : vector<1x768xf32> to vector<8x768xf32>
    %265 = arith.addf %263, %264 : vector<8x768xf32>
    %266 = vector.extract_strided_slice %265 {offsets = [0, 0], sizes = [8, 128], strides = [1, 1]} : vector<8x768xf32> to vector<8x128xf32>
    %267 = vector.extract_strided_slice %265 {offsets = [0, 128], sizes = [8, 128], strides = [1, 1]} : vector<8x768xf32> to vector<8x128xf32>
    %268 = vector.extract_strided_slice %265 {offsets = [0, 256], sizes = [8, 128], strides = [1, 1]} : vector<8x768xf32> to vector<8x128xf32>
    %269 = vector.extract_strided_slice %265 {offsets = [0, 384], sizes = [8, 128], strides = [1, 1]} : vector<8x768xf32> to vector<8x128xf32>
    %270 = vector.extract_strided_slice %265 {offsets = [0, 512], sizes = [8, 128], strides = [1, 1]} : vector<8x768xf32> to vector<8x128xf32>
    %271 = vector.extract_strided_slice %265 {offsets = [0, 640], sizes = [8, 128], strides = [1, 1]} : vector<8x768xf32> to vector<8x128xf32>
    %272 = arith.addf %266, %269 : vector<8x128xf32>
    %273 = arith.negf %272 : vector<8x128xf32>
    %274 = math.exp %273 : vector<8x128xf32>
    %cst_46 = arith.constant 1.000000e+00 : f32
    %275 = vector.broadcast %cst_46 : f32 to vector<8x128xf32>
    %276 = arith.addf %275, %274 : vector<8x128xf32>
    %277 = arith.divf %275, %276 : vector<8x128xf32>
    %278 = arith.addf %267, %270 : vector<8x128xf32>
    %279 = arith.negf %278 : vector<8x128xf32>
    %280 = math.exp %279 : vector<8x128xf32>
    %cst_47 = arith.constant 1.000000e+00 : f32
    %281 = vector.broadcast %cst_47 : f32 to vector<8x128xf32>
    %282 = arith.addf %281, %280 : vector<8x128xf32>
    %283 = arith.divf %281, %282 : vector<8x128xf32>
    %284 = arith.mulf %277, %271 : vector<8x128xf32>
    %285 = arith.addf %268, %284 : vector<8x128xf32>
    %286 = math.tanh %285 : vector<8x128xf32>
    %cst_48 = arith.constant 1.000000e+00 : f32
    %287 = vector.broadcast %cst_48 : f32 to vector<8x128xf32>
    %288 = arith.subf %287, %283 : vector<8x128xf32>
    %289 = arith.mulf %288, %286 : vector<8x128xf32>
    %290 = arith.mulf %283, %249 : vector<8x128xf32>
    %291 = arith.addf %289, %290 : vector<8x128xf32>
    %cst_49 = arith.constant dense<0.000000e+00> : vector<8x128xf32>
    %292 = tpu.matmul %291, %8, %cst_49 {dimension_numbers = #tpu.dot_dimension_numbers<[1], [0], [0], [1], [0, 0, 1, 1], [], []>} : vector<8x128xf32>, vector<128x128xf32>, vector<8x128xf32> -> vector<8x128xf32>
    %293 = vector.broadcast %9 : vector<1x128xf32> to vector<8x128xf32>
    %294 = arith.addf %292, %293 : vector<8x128xf32>
    %295 = tpu.reduce_index %294 {axis = 1 : i32, kind = #tpu.reduction_kind<arg_max>} : vector<8x128xf32> -> vector<8xi32>
    %c6 = arith.constant 6 : index
    %c0_50 = arith.constant 0 : index
    %296 = vector.load %arg5[%c6, %c0_50] : memref<8x8xi32, #tpu.memory_space<vmem>>, vector<1x8xi32>
    %297 = vector.shape_cast %296 : vector<1x8xi32> to vector<8xi32>
    %298 = vector.shape_cast %295 : vector<8xi32> to vector<1x8xi32>
    tpu.vector_store %arg5[%c6, %c0_50], %298 {strides = array<i32>} : memref<8x8xi32, #tpu.memory_space<vmem>>, vector<1x8xi32>,
    %299 = vector.shape_cast %295 : vector<8xi32> to vector<8x1xi32>
    %300 = vector.broadcast %299 : vector<8x1xi32> to vector<8x128xi32>
    %301 = arith.cmpi eq, %1, %300 : vector<8x128xi32>
    %302 = arith.extui %301 : vector<8x128xi1> to vector<8x128xi32>
    %303 = arith.sitofp %302 : vector<8x128xi32> to vector<8x128xf32>
    %304 = tpu.concatenate %303, %291 in 1 : vector<8x128xf32>, vector<8x128xf32> -> vector<8x256xf32>
    %cst_51 = arith.constant dense<0.000000e+00> : vector<8x768xf32>
    %305 = tpu.matmul %304, %6, %cst_51 {dimension_numbers = #tpu.dot_dimension_numbers<[1], [0], [0], [1], [0, 0, 1, 1], [], []>} : vector<8x256xf32>, vector<256x768xf32>, vector<8x768xf32> -> vector<8x768xf32>
    %306 = vector.broadcast %7 : vector<1x768xf32> to vector<8x768xf32>
    %307 = arith.addf %305, %306 : vector<8x768xf32>
    %308 = vector.extract_strided_slice %307 {offsets = [0, 0], sizes = [8, 128], strides = [1, 1]} : vector<8x768xf32> to vector<8x128xf32>
    %309 = vector.extract_strided_slice %307 {offsets = [0, 128], sizes = [8, 128], strides = [1, 1]} : vector<8x768xf32> to vector<8x128xf32>
    %310 = vector.extract_strided_slice %307 {offsets = [0, 256], sizes = [8, 128], strides = [1, 1]} : vector<8x768xf32> to vector<8x128xf32>
    %311 = vector.extract_strided_slice %307 {offsets = [0, 384], sizes = [8, 128], strides = [1, 1]} : vector<8x768xf32> to vector<8x128xf32>
    %312 = vector.extract_strided_slice %307 {offsets = [0, 512], sizes = [8, 128], strides = [1, 1]} : vector<8x768xf32> to vector<8x128xf32>
    %313 = vector.extract_strided_slice %307 {offsets = [0, 640], sizes = [8, 128], strides = [1, 1]} : vector<8x768xf32> to vector<8x128xf32>
    %314 = arith.addf %308, %311 : vector<8x128xf32>
    %315 = arith.negf %314 : vector<8x128xf32>
    %316 = math.exp %315 : vector<8x128xf32>
    %cst_52 = arith.constant 1.000000e+00 : f32
    %317 = vector.broadcast %cst_52 : f32 to vector<8x128xf32>
    %318 = arith.addf %317, %316 : vector<8x128xf32>
    %319 = arith.divf %317, %318 : vector<8x128xf32>
    %320 = arith.addf %309, %312 : vector<8x128xf32>
    %321 = arith.negf %320 : vector<8x128xf32>
    %322 = math.exp %321 : vector<8x128xf32>
    %cst_53 = arith.constant 1.000000e+00 : f32
    %323 = vector.broadcast %cst_53 : f32 to vector<8x128xf32>
    %324 = arith.addf %323, %322 : vector<8x128xf32>
    %325 = arith.divf %323, %324 : vector<8x128xf32>
    %326 = arith.mulf %319, %313 : vector<8x128xf32>
    %327 = arith.addf %310, %326 : vector<8x128xf32>
    %328 = math.tanh %327 : vector<8x128xf32>
    %cst_54 = arith.constant 1.000000e+00 : f32
    %329 = vector.broadcast %cst_54 : f32 to vector<8x128xf32>
    %330 = arith.subf %329, %325 : vector<8x128xf32>
    %331 = arith.mulf %330, %328 : vector<8x128xf32>
    %332 = arith.mulf %325, %291 : vector<8x128xf32>
    %333 = arith.addf %331, %332 : vector<8x128xf32>
    %cst_55 = arith.constant dense<0.000000e+00> : vector<8x128xf32>
    %334 = tpu.matmul %333, %8, %cst_55 {dimension_numbers = #tpu.dot_dimension_numbers<[1], [0], [0], [1], [0, 0, 1, 1], [], []>} : vector<8x128xf32>, vector<128x128xf32>, vector<8x128xf32> -> vector<8x128xf32>
    %335 = vector.broadcast %9 : vector<1x128xf32> to vector<8x128xf32>
    %336 = arith.addf %334, %335 : vector<8x128xf32>
    %337 = tpu.reduce_index %336 {axis = 1 : i32, kind = #tpu.reduction_kind<arg_max>} : vector<8x128xf32> -> vector<8xi32>
    %c7 = arith.constant 7 : index
    %c0_56 = arith.constant 0 : index
    %338 = vector.load %arg5[%c7, %c0_56] : memref<8x8xi32, #tpu.memory_space<vmem>>, vector<1x8xi32>
    %339 = vector.shape_cast %338 : vector<1x8xi32> to vector<8xi32>
    %340 = vector.shape_cast %337 : vector<8xi32> to vector<1x8xi32>
    tpu.vector_store %arg5[%c7, %c0_56], %340 {strides = array<i32>} : memref<8x8xi32, #tpu.memory_space<vmem>>, vector<1x8xi32>,
    return
  }
}

</mosaic_0001>

<llo_original>
// kernel: tpu_custom_call.1
$region0: #{tpu_custom_call.1}
  #allocation0 [shape = 'u32[]', space=smem, size = 0x4, offset = 0x4, fixed_abs, tag = 'smem constant byte address 0x4 - core index']
  #allocation1 [shape = 'u32[144,128]{1,0:T(1,128)}', space=vmem, size = 0x12000, scoped, tag = 'internal scratch']
  %s0 = inlined_call_operand.hbm [shape: f32[8,128], index: 0, kind: input, shape index: {}]
  %s1 = inlined_call_operand.hbm [shape: f32[256,768], index: 1, kind: input, shape index: {}]
  %s2 = inlined_call_operand.hbm [shape: f32[1,768], index: 2, kind: input, shape index: {}]
  %s3 = inlined_call_operand.hbm [shape: f32[128,128], index: 3, kind: input, shape index: {}]
  %s4 = inlined_call_operand.vmem [shape: f32[1,128], index: 4, kind: input, shape index: {}]
  %s5 = inlined_call_operand.hbm [shape: s32[8,8], index: 5, kind: output, shape index: {}]
  %s6 = sld [smem:[#allocation0]]
  $region46: #{tpu_custom_call.1} parent=0
    _
  %s8 = ssub.s32 1, %s6
  %s9 = scalar_select 0, %s8, %s6
  $region1: #{tpu_custom_call.1} parent=0
    #allocation2 [shape = 'u8[4096]{0}', space=vmem, size = 0x1000, scoped, tag = 'input window, operand 0, single buffered']
    #allocation3 [shape = 's32[1]{0}', space=sflag, size = 0x4, scoped, tag = 'scoped memory for tpu_custom_call.1']
    #allocation4 [shape = 's32[1]{0}', space=sflag, size = 0x4, scoped, tag = 'scoped memory for tpu_custom_call.1']
    #allocation5 [shape = 'u8[786432]{0}', space=vmem, size = 0xc0000, scoped, tag = 'input window, operand 1, single buffered']
    #allocation6 [shape = 's32[1]{0}', space=sflag, size = 0x4, scoped, tag = 'scoped memory for tpu_custom_call.1']
    #allocation7 [shape = 'u8[3072]{0}', space=vmem, size = 0xc00, scoped, tag = 'input window, operand 2, single buffered']
    #allocation8 [shape = 'u8[65536]{0}', space=vmem, size = 0x10000, scoped, tag = 'input window, operand 3, single buffered']
    #allocation9 [shape = 's32[1]{0}', space=sflag, size = 0x4, scoped, tag = 'scoped memory for tpu_custom_call.1']
    #allocation10 [shape = 'u8[4096]{0}', space=vmem, size = 0x1000, scoped, tag = 'output window, operand 0, single buffered']
    %10 = vsyncpa [#allocation3], 0
    %11 = vsyncpa [#allocation6], 0
    %12 = vsyncpa [#allocation9], 0
    %13 = vsyncpa [#allocation4], 0
    // Predicated region
    $region2: #{tpu_custom_call.1} parent=1 // pred_check
      _
    $region3: #{tpu_custom_call.1} parent=1 // pred_check_branch
      %15 = sbr.rel (0) target = $region5
    $region4: #{tpu_custom_call.1} parent=1 // pred_region
      %s17 = ssub.s32 128, 128
      %18 = vsyncadd [#allocation3], %s17
      %s20 = sshll.u32 [#allocation2], 4
      %s21 = int_to_ptr.vmem [resolvable:$true] %s20
      %23 = dma.hbm_to_vmem [thread:$0]  %s0, 128, %s21, [#allocation3]
    $region5: #{tpu_custom_call.1} parent=1 // pred_fallthru
      _
    // Predicated region
    $region6: #{tpu_custom_call.1} parent=1 // pred_check
      _
    $region7: #{tpu_custom_call.1} parent=1 // pred_check_branch
      %25 = sbr.rel (0) target = $region9
    $region8: #{tpu_custom_call.1} parent=1 // pred_region
      %s27 = ssub.s32 24576, 24576
      %28 = vsyncadd [#allocation6], %s27
      %s29 = sshll.u32 [#allocation5], 4
      %s30 = int_to_ptr.vmem [resolvable:$true] %s29
      %35 = dma.hbm_to_vmem [thread:$0]  %s1, 24576, %s30, [#allocation6], 768, 768, 48
    $region9: #{tpu_custom_call.1} parent=1 // pred_fallthru
      _
    // Predicated region
    $region10: #{tpu_custom_call.1} parent=1 // pred_check
      _
    $region11: #{tpu_custom_call.1} parent=1 // pred_check_branch
      %37 = sbr.rel (0) target = $region13
    $region12: #{tpu_custom_call.1} parent=1 // pred_region
      %s39 = ssub.s32 96, 96
      %40 = vsyncadd [#allocation6], %s39
      %s42 = sshll.u32 [#allocation7], 4
      %s43 = int_to_ptr.vmem [resolvable:$true] %s42
      %45 = dma.hbm_to_vmem [thread:$0]  %s2, 96, %s43, [#allocation6]
    $region13: #{tpu_custom_call.1} parent=1 // pred_fallthru
      _
    // Predicated region
    $region14: #{tpu_custom_call.1} parent=1 // pred_check
      _
    $region15: #{tpu_custom_call.1} parent=1 // pred_check_branch
      %47 = sbr.rel (0) target = $region17
    $region16: #{tpu_custom_call.1} parent=1 // pred_region
      %s49 = ssub.s32 2048, 2048
      %50 = vsyncadd [#allocation9], %s49
      %s51 = sshll.u32 [#allocation8], 4
      %s52 = int_to_ptr.vmem [resolvable:$true] %s51
      %57 = dma.hbm_to_vmem [thread:$0]  %s3, 2048, %s52, [#allocation9], 128, 128, 8
    $region17: #{tpu_custom_call.1} parent=1 // pred_fallthru
      _
    // Predicated region
    $region18: #{tpu_custom_call.1} parent=1 // pred_check
      _
    $region19: #{tpu_custom_call.1} parent=1 // pred_check_branch
      %59 = sbr.rel (0) target = $region21
    $region20: #{tpu_custom_call.1} parent=1 // pred_region
      _
    $region21: #{tpu_custom_call.1} parent=1 // pred_fallthru
      _
    // Predicated region
    $region22: #{tpu_custom_call.1} parent=1 // pred_check
      _
    $region23: #{tpu_custom_call.1} parent=1 // pred_check_branch
      %61 = sbr.rel (0) target = $region25
    $region24: #{tpu_custom_call.1} parent=1 // pred_region
      %62 = dma.done [#allocation3], 128
    $region25: #{tpu_custom_call.1} parent=1 // pred_fallthru
      _
    // Predicated region
    $region26: #{tpu_custom_call.1} parent=1 // pred_check
      _
    $region27: #{tpu_custom_call.1} parent=1 // pred_check_branch
      %64 = sbr.rel (0) target = $region29
    $region28: #{tpu_custom_call.1} parent=1 // pred_region
      %65 = dma.done [#allocation6], 24576
    $region29: #{tpu_custom_call.1} parent=1 // pred_fallthru
      _
    // Predicated region
    $region30: #{tpu_custom_call.1} parent=1 // pred_check
      _
    $region31: #{tpu_custom_call.1} parent=1 // pred_check_branch
      %67 = sbr.rel (0) target = $region33
    $region32: #{tpu_custom_call.1} parent=1 // pred_region
      %68 = dma.done [#allocation6], 96
    $region33: #{tpu_custom_call.1} parent=1 // pred_fallthru
      _
    // Predicated region
    $region34: #{tpu_custom_call.1} parent=1 // pred_check
      _
    $region35: #{tpu_custom_call.1} parent=1 // pred_check_branch
      %70 = sbr.rel (0) target = $region37
    $region36: #{tpu_custom_call.1} parent=1 // pred_region
      %71 = dma.done [#allocation9], 2048
    $region37: #{tpu_custom_call.1} parent=1 // pred_fallthru
      _
    %v72 = vld [vmem:[#allocation2] sm:$0xff]
    %v73 = vlaneseq
    %v74 = vand.u32 %v73, 127
    %vm75 = vcmp.eq.s32.totalorder %v74, 0
    %v76 = vsel %vm75, 1, 0
    %v77 = vcvt.s32.f32 %v76
    %v78 = vld [vmem:[#allocation5] sm:$0xff]
    %v79 = vld [vmem:[#allocation5 + $0x8] sm:$0xff]
    %v80 = vld [vmem:[#allocation5 + $0x10] sm:$0xff]
    %v81 = vld [vmem:[#allocation5 + $0x18] sm:$0xff]
    %v82 = vld [vmem:[#allocation5 + $0x20] sm:$0xff]
    %v83 = vld [vmem:[#allocation5 + $0x28] sm:$0xff]
    %v84 = vld [vmem:[#allocation5 + $0x30] sm:$0xff]
    %v85 = vld [vmem:[#allocation5 + $0x38] sm:$0xff]
    %v86 = vld [vmem:[#allocation5 + $0x40] sm:$0xff]
    %v87 = vld [vmem:[#allocation5 + $0x48] sm:$0xff]
    %v88 = vld [vmem:[#allocation5 + $0x50] sm:$0xff]
    %v89 = vld [vmem:[#allocation5 + $0x58] sm:$0xff]
    %v90 = vld [vmem:[#allocation5 + $0x60] sm:$0xff]
    %v91 = vld [vmem:[#allocation5 + $0x68] sm:$0xff]
    %v92 = vld [vmem:[#allocation5 + $0x70] sm:$0xff]
    %v93 = vld [vmem:[#allocation5 + $0x78] sm:$0xff]
    %v94 = vld [vmem:[#allocation5 + $0x80] sm:$0xff]
    %v95 = vld [vmem:[#allocation5 + $0x88] sm:$0xff]
    %v96 = vld [vmem:[#allocation5 + $0x90] sm:$0xff]
    %v97 = vld [vmem:[#allocation5 + $0x98] sm:$0xff]
    %v98 = vld [vmem:[#allocation5 + $0xa0] sm:$0xff]
    %v99 = vld [vmem:[#allocation5 + $0xa8] sm:$0xff]
    %v100 = vld [vmem:[#allocation5 + $0xb0] sm:$0xff]
    %v101 = vld [vmem:[#allocation5 + $0xb8] sm:$0xff]
    %v102 = vld [vmem:[#allocation5 + $0xc0] sm:$0xff]
    %v103 = vld [vmem:[#allocation5 + $0xc8] sm:$0xff]
    %v104 = vld [vmem:[#allocation5 + $0xd0] sm:$0xff]
    %v105 = vld [vmem:[#allocation5 + $0xd8] sm:$0xff]
    %v106 = vld [vmem:[#allocation5 + $0xe0] sm:$0xff]
    %v107 = vld [vmem:[#allocation5 + $0xe8] sm:$0xff]
    %v108 = vld [vmem:[#allocation5 + $0xf0] sm:$0xff]
    %v109 = vld [vmem:[#allocation5 + $0xf8] sm:$0xff]
    %v110 = vld [vmem:[#allocation5 + $0x100] sm:$0xff]
    %v111 = vld [vmem:[#allocation5 + $0x108] sm:$0xff]
    %v112 = vld [vmem:[#allocation5 + $0x110] sm:$0xff]
    %v113 = vld [vmem:[#allocation5 + $0x118] sm:$0xff]
    %v114 = vld [vmem:[#allocation5 + $0x120] sm:$0xff]
    %v115 = vld [vmem:[#allocation5 + $0x128] sm:$0xff]
    %v116 = vld [vmem:[#allocation5 + $0x130] sm:$0xff]
    %v117 = vld [vmem:[#allocation5 + $0x138] sm:$0xff]
    %v118 = vld [vmem:[#allocation5 + $0x140] sm:$0xff]
    %v119 = vld [vmem:[#allocation5 + $0x148] sm:$0xff]
    %v120 = vld [vmem:[#allocation5 + $0x150] sm:$0xff]
    %v121 = vld [vmem:[#allocation5 + $0x158] sm:$0xff]
    %v122 = vld [vmem:[#allocation5 + $0x160] sm:$0xff]
    %v123 = vld [vmem:[#allocation5 + $0x168] sm:$0xff]
    %v124 = vld [vmem:[#allocation5 + $0x170] sm:$0xff]
    %v125 = vld [vmem:[#allocation5 + $0x178] sm:$0xff]
    %v126 = vld [vmem:[#allocation5 + $0x180] sm:$0xff]
    %v127 = vld [vmem:[#allocation5 + $0x188] sm:$0xff]
    %v128 = vld [vmem:[#allocation5 + $0x190] sm:$0xff]
    %v129 = vld [vmem:[#allocation5 + $0x198] sm:$0xff]
    %v130 = vld [vmem:[#allocation5 + $0x1a0] sm:$0xff]
    %v131 = vld [vmem:[#allocation5 + $0x1a8] sm:$0xff]
    %v132 = vld [vmem:[#allocation5 + $0x1b0] sm:$0xff]
    %v133 = vld [vmem:[#allocation5 + $0x1b8] sm:$0xff]
    %v134 = vld [vmem:[#allocation5 + $0x1c0] sm:$0xff]
    %v135 = vld [vmem:[#allocation5 + $0x1c8] sm:$0xff]
    %v136 = vld [vmem:[#allocation5 + $0x1d0] sm:$0xff]
    %v137 = vld [vmem:[#allocation5 + $0x1d8] sm:$0xff]
    %v138 = vld [vmem:[#allocation5 + $0x1e0] sm:$0xff]
    %v139 = vld [vmem:[#allocation5 + $0x1e8] sm:$0xff]
    %v140 = vld [vmem:[#allocation5 + $0x1f0] sm:$0xff]
    %v141 = vld [vmem:[#allocation5 + $0x1f8] sm:$0xff]
    %v142 = vld [vmem:[#allocation5 + $0x200] sm:$0xff]
    %v143 = vld [vmem:[#allocation5 + $0x208] sm:$0xff]
    %v144 = vld [vmem:[#allocation5 + $0x210] sm:$0xff]
    %v145 = vld [vmem:[#allocation5 + $0x218] sm:$0xff]
    %v146 = vld [vmem:[#allocation5 + $0x220] sm:$0xff]
    %v147 = vld [vmem:[#allocation5 + $0x228] sm:$0xff]
    %v148 = vld [vmem:[#allocation5 + $0x230] sm:$0xff]
    %v149 = vld [vmem:[#allocation5 + $0x238] sm:$0xff]
    %v150 = vld [vmem:[#allocation5 + $0x240] sm:$0xff]
    %v151 = vld [vmem:[#allocation5 + $0x248] sm:$0xff]
    %v152 = vld [vmem:[#allocation5 + $0x250] sm:$0xff]
    %v153 = vld [vmem:[#allocation5 + $0x258] sm:$0xff]
    %v154 = vld [vmem:[#allocation5 + $0x260] sm:$0xff]
    %v155 = vld [vmem:[#allocation5 + $0x268] sm:$0xff]
    %v156 = vld [vmem:[#allocation5 + $0x270] sm:$0xff]
    %v157 = vld [vmem:[#allocation5 + $0x278] sm:$0xff]
    %v158 = vld [vmem:[#allocation5 + $0x280] sm:$0xff]
    %v159 = vld [vmem:[#allocation5 + $0x288] sm:$0xff]
    %v160 = vld [vmem:[#allocation5 + $0x290] sm:$0xff]
    %v161 = vld [vmem:[#allocation5 + $0x298] sm:$0xff]
    %v162 = vld [vmem:[#allocation5 + $0x2a0] sm:$0xff]
    %v163 = vld [vmem:[#allocation5 + $0x2a8] sm:$0xff]
    %v164 = vld [vmem:[#allocation5 + $0x2b0] sm:$0xff]
    %v165 = vld [vmem:[#allocation5 + $0x2b8] sm:$0xff]
    %v166 = vld [vmem:[#allocation5 + $0x2c0] sm:$0xff]
    %v167 = vld [vmem:[#allocation5 + $0x2c8] sm:$0xff]
    %v168 = vld [vmem:[#allocation5 + $0x2d0] sm:$0xff]
    %v169 = vld [vmem:[#allocation5 + $0x2d8] sm:$0xff]
    %v170 = vld [vmem:[#allocation5 + $0x2e0] sm:$0xff]
    %v171 = vld [vmem:[#allocation5 + $0x2e8] sm:$0xff]
    %v172 = vld [vmem:[#allocation5 + $0x2f0] sm:$0xff]
    %v173 = vld [vmem:[#allocation5 + $0x2f8] sm:$0xff]
    %v174 = vld [vmem:[#allocation5 + $0x300] sm:$0xff]
    %v175 = vld [vmem:[#allocation5 + $0x308] sm:$0xff]
    %v176 = vld [vmem:[#allocation5 + $0x310] sm:$0xff]
    %v177 = vld [vmem:[#allocation5 + $0x318] sm:$0xff]
    %v178 = vld [vmem:[#allocation5 + $0x320] sm:$0xff]
    %v179 = vld [vmem:[#allocation5 + $0x328] sm:$0xff]
    %v180 = vld [vmem:[#allocation5 + $0x330] sm:$0xff]
    %v181 = vld [vmem:[#allocation5 + $0x338] sm:$0xff]
    %v182 = vld [vmem:[#allocation5 + $0x340] sm:$0xff]
    %v183 = vld [vmem:[#allocation5 + $0x348] sm:$0xff]
    %v184 = vld [vmem:[#allocation5 + $0x350] sm:$0xff]
    %v185 = vld [vmem:[#allocation5 + $0x358] sm:$0xff]
    %v186 = vld [vmem:[#allocation5 + $0x360] sm:$0xff]
    %v187 = vld [vmem:[#allocation5 + $0x368] sm:$0xff]
    %v188 = vld [vmem:[#allocation5 + $0x370] sm:$0xff]
    %v189 = vld [vmem:[#allocation5 + $0x378] sm:$0xff]
    %v190 = vld [vmem:[#allocation5 + $0x380] sm:$0xff]
    %v191 = vld [vmem:[#allocation5 + $0x388] sm:$0xff]
    %v192 = vld [vmem:[#allocation5 + $0x390] sm:$0xff]
    %v193 = vld [vmem:[#allocation5 + $0x398] sm:$0xff]
    %v194 = vld [vmem:[#allocation5 + $0x3a0] sm:$0xff]
    %v195 = vld [vmem:[#allocation5 + $0x3a8] sm:$0xff]
    %v196 = vld [vmem:[#allocation5 + $0x3b0] sm:$0xff]
    %v197 = vld [vmem:[#allocation5 + $0x3b8] sm:$0xff]
    %v198 = vld [vmem:[#allocation5 + $0x3c0] sm:$0xff]
    %v199 = vld [vmem:[#allocation5 + $0x3c8] sm:$0xff]
    %v200 = vld [vmem:[#allocation5 + $0x3d0] sm:$0xff]
    %v201 = vld [vmem:[#allocation5 + $0x3d8] sm:$0xff]
    %v202 = vld [vmem:[#allocation5 + $0x3e0] sm:$0xff]
    %v203 = vld [vmem:[#allocation5 + $0x3e8] sm:$0xff]
    %v204 = vld [vmem:[#allocation5 + $0x3f0] sm:$0xff]
    %v205 = vld [vmem:[#allocation5 + $0x3f8] sm:$0xff]
    %v206 = vld [vmem:[#allocation5 + $0x400] sm:$0xff]
    %v207 = vld [vmem:[#allocation5 + $0x408] sm:$0xff]
    %v208 = vld [vmem:[#allocation5 + $0x410] sm:$0xff]
    %v209 = vld [vmem:[#allocation5 + $0x418] sm:$0xff]
    %v210 = vld [vmem:[#allocation5 + $0x420] sm:$0xff]
    %v211 = vld [vmem:[#allocation5 + $0x428] sm:$0xff]
    %v212 = vld [vmem:[#allocation5 + $0x430] sm:$0xff]
    %v213 = vld [vmem:[#allocation5 + $0x438] sm:$0xff]
    %v214 = vld [vmem:[#allocation5 + $0x440] sm:$0xff]
    %v215 = vld [vmem:[#allocation5 + $0x448] sm:$0xff]
    %v216 = vld [vmem:[#allocation5 + $0x450] sm:$0xff]
    %v217 = vld [vmem:[#allocation5 + $0x458] sm:$0xff]
    %v218 = vld [vmem:[#allocation5 + $0x460] sm:$0xff]
    %v219 = vld [vmem:[#allocation5 + $0x468] sm:$0xff]
    %v220 = vld [vmem:[#allocation5 + $0x470] sm:$0xff]
    %v221 = vld [vmem:[#allocation5 + $0x478] sm:$0xff]
    %v222 = vld [vmem:[#allocation5 + $0x480] sm:$0xff]
    %v223 = vld [vmem:[#allocation5 + $0x488] sm:$0xff]
    %v224 = vld [vmem:[#allocation5 + $0x490] sm:$0xff]
    %v225 = vld [vmem:[#allocation5 + $0x498] sm:$0xff]
    %v226 = vld [vmem:[#allocation5 + $0x4a0] sm:$0xff]
    %v227 = vld [vmem:[#allocation5 + $0x4a8] sm:$0xff]
    %v228 = vld [vmem:[#allocation5 + $0x4b0] sm:$0xff]
    %v229 = vld [vmem:[#allocation5 + $0x4b8] sm:$0xff]
    %v230 = vld [vmem:[#allocation5 + $0x4c0] sm:$0xff]
    %v231 = vld [vmem:[#allocation5 + $0x4c8] sm:$0xff]
    %v232 = vld [vmem:[#allocation5 + $0x4d0] sm:$0xff]
    %v233 = vld [vmem:[#allocation5 + $0x4d8] sm:$0xff]
    %v234 = vld [vmem:[#allocation5 + $0x4e0] sm:$0xff]
    %v235 = vld [vmem:[#allocation5 + $0x4e8] sm:$0xff]
    %v236 = vld [vmem:[#allocation5 + $0x4f0] sm:$0xff]
    %v237 = vld [vmem:[#allocation5 + $0x4f8] sm:$0xff]
    %v238 = vld [vmem:[#allocation5 + $0x500] sm:$0xff]
    %v239 = vld [vmem:[#allocation5 + $0x508] sm:$0xff]
    %v240 = vld [vmem:[#allocation5 + $0x510] sm:$0xff]
    %v241 = vld [vmem:[#allocation5 + $0x518] sm:$0xff]
    %v242 = vld [vmem:[#allocation5 + $0x520] sm:$0xff]
    %v243 = vld [vmem:[#allocation5 + $0x528] sm:$0xff]
    %v244 = vld [vmem:[#allocation5 + $0x530] sm:$0xff]
    %v245 = vld [vmem:[#allocation5 + $0x538] sm:$0xff]
    %v246 = vld [vmem:[#allocation5 + $0x540] sm:$0xff]
    %v247 = vld [vmem:[#allocation5 + $0x548] sm:$0xff]
    %v248 = vld [vmem:[#allocation5 + $0x550] sm:$0xff]
    %v249 = vld [vmem:[#allocation5 + $0x558] sm:$0xff]
    %v250 = vld [vmem:[#allocation5 + $0x560] sm:$0xff]
    %v251 = vld [vmem:[#allocation5 + $0x568] sm:$0xff]
    %v252 = vld [vmem:[#allocation5 + $0x570] sm:$0xff]
    %v253 = vld [vmem:[#allocation5 + $0x578] sm:$0xff]
    %v254 = vld [vmem:[#allocation5 + $0x580] sm:$0xff]
    %v255 = vld [vmem:[#allocation5 + $0x588] sm:$0xff]
    %v256 = vld [vmem:[#allocation5 + $0x590] sm:$0xff]
    %v257 = vld [vmem:[#allocation5 + $0x598] sm:$0xff]
    %v258 = vld [vmem:[#allocation5 + $0x5a0] sm:$0xff]
    %v259 = vld [vmem:[#allocation5 + $0x5a8] sm:$0xff]
    %v260 = vld [vmem:[#allocation5 + $0x5b0] sm:$0xff]
    %v261 = vld [vmem:[#allocation5 + $0x5b8] sm:$0xff]
    %v262 = vld [vmem:[#allocation5 + $0x5c0] sm:$0xff]
    %v263 = vld [vmem:[#allocation5 + $0x5c8] sm:$0xff]
    %v264 = vld [vmem:[#allocation5 + $0x5d0] sm:$0xff]
    %v265 = vld [vmem:[#allocation5 + $0x5d8] sm:$0xff]
    %v266 = vld [vmem:[#allocation5 + $0x5e0] sm:$0xff]
    %v267 = vld [vmem:[#allocation5 + $0x5e8] sm:$0xff]
    %v268 = vld [vmem:[#allocation5 + $0x5f0] sm:$0xff]
    %v269 = vld [vmem:[#allocation5 + $0x5f8] sm:$0xff]
    %v270 = vld [vmem:[#allocation7] sm:$0x3f]
    %v271 = vld [vmem:[#allocation8] sm:$0xff]
    %v272 = vld [vmem:[#allocation8 + $0x8] sm:$0xff]
    %v273 = vld [vmem:[#allocation8 + $0x10] sm:$0xff]
    %v274 = vld [vmem:[#allocation8 + $0x18] sm:$0xff]
    %v275 = vld [vmem:[#allocation8 + $0x20] sm:$0xff]
    %v276 = vld [vmem:[#allocation8 + $0x28] sm:$0xff]
    %v277 = vld [vmem:[#allocation8 + $0x30] sm:$0xff]
    %v278 = vld [vmem:[#allocation8 + $0x38] sm:$0xff]
    %v279 = vld [vmem:[#allocation8 + $0x40] sm:$0xff]
    %v280 = vld [vmem:[#allocation8 + $0x48] sm:$0xff]
    %v281 = vld [vmem:[#allocation8 + $0x50] sm:$0xff]
    %v282 = vld [vmem:[#allocation8 + $0x58] sm:$0xff]
    %v283 = vld [vmem:[#allocation8 + $0x60] sm:$0xff]
    %v284 = vld [vmem:[#allocation8 + $0x68] sm:$0xff]
    %v285 = vld [vmem:[#allocation8 + $0x70] sm:$0xff]
    %v286 = vld [vmem:[#allocation8 + $0x78] sm:$0xff]
    %v287 = vld [vmem:[%s4] sm:$0x1]
    %v289 = vlaneseq
    %v290 = vshrl.u32 %v289, 7
    %v291 = vsub.s32 0, %v290
    %v292 = vrot.slane %v270, %v291
    %v293 = vlaneseq
    %v294 = vshrl.u32 %v293, 7
    %v295 = vsub.s32 1, %v294
    %v296 = vrot.slane %v270, %v295
    %v297 = vlaneseq
    %v298 = vshrl.u32 %v297, 7
    %v299 = vsub.s32 2, %v298
    %v300 = vrot.slane %v270, %v299
    %v301 = vlaneseq
    %v302 = vshrl.u32 %v301, 7
    %v303 = vsub.s32 3, %v302
    %v304 = vrot.slane %v270, %v303
    %v305 = vlaneseq
    %v306 = vshrl.u32 %v305, 7
    %v307 = vsub.s32 4, %v306
    %v308 = vrot.slane %v270, %v307
    %v309 = vlaneseq
    %v310 = vshrl.u32 %v309, 7
    %v311 = vsub.s32 5, %v310
    %v312 = vrot.slane %v270, %v311
    %319 = vmatprep.subr.mxu0 %v169
    %320 = vmatpush1.msra.mxu0 %v168
    %321 = vmatprep.subr.mxu0 %v163
    %322 = vmatpush1.msra.mxu0 %v162
    %323 = vmatprep.subr.mxu0 %v157
    %324 = vmatpush1.msra.mxu0 %v156
    %325 = vmatprep.subr.mxu0 %v151
    %326 = vmatpush1.msra.mxu0 %v150
    %327 = vmatprep.subr.mxu0 %v145
    %328 = vmatpush1.msra.mxu0 %v144
    %329 = vmatprep.subr.mxu0 %v139
    %330 = vmatpush1.msra.mxu0 %v138
    %331 = vmatprep.subr.mxu0 %v133
    %332 = vmatpush1.msra.mxu0 %v132
    %333 = vmatprep.subr.mxu0 %v127
    %334 = vmatpush1.msra.mxu0 %v126
    %335 = vmatprep.subr.mxu0 %v121
    %336 = vmatpush1.msra.mxu0 %v120
    %337 = vmatprep.subr.mxu0 %v115
    %338 = vmatpush1.msra.mxu0 %v114
    %339 = vmatprep.subr.mxu0 %v109
    %340 = vmatpush1.msra.mxu0 %v108
    %341 = vmatprep.subr.mxu0 %v103
    %342 = vmatpush1.msra.mxu0 %v102
    %343 = vmatprep.subr.mxu0 %v97
    %344 = vmatpush1.msra.mxu0 %v96
    %345 = vmatprep.subr.mxu0 %v91
    %346 = vmatpush1.msra.mxu0 %v90
    %347 = vmatprep.subr.mxu0 %v85
    %348 = vmatpush1.msra.mxu0 %v84
    %349 = vmatprep.subr.mxu0 %v79
    %350 = vmatpush1.msra.mxu0 %v78
    %351 = vmatprep.subr.mxu0 %v265
    %352 = vmatpush2.msra.mxu0 %v264
    %353 = vmatprep.subr.mxu0 %v259
    %354 = vmatpush2.msra.mxu0 %v258
    %355 = vmatprep.subr.mxu0 %v253
    %356 = vmatpush2.msra.mxu0 %v252
    %357 = vmatprep.subr.mxu0 %v247
    %358 = vmatpush2.msra.mxu0 %v246
    %359 = vmatprep.subr.mxu0 %v241
    %360 = vmatpush2.msra.mxu0 %v240
    %361 = vmatprep.subr.mxu0 %v235
    %362 = vmatpush2.msra.mxu0 %v234
    %363 = vmatprep.subr.mxu0 %v229
    %364 = vmatpush2.msra.mxu0 %v228
    %365 = vmatprep.subr.mxu0 %v223
    %366 = vmatpush2.msra.mxu0 %v222
    %367 = vmatprep.subr.mxu0 %v217
    %368 = vmatpush2.msra.mxu0 %v216
    %369 = vmatprep.subr.mxu0 %v211
    %370 = vmatpush2.msra.mxu0 %v210
    %371 = vmatprep.subr.mxu0 %v205
    %372 = vmatpush2.msra.mxu0 %v204
    %373 = vmatprep.subr.mxu0 %v199
    %374 = vmatpush2.msra.mxu0 %v198
    %375 = vmatprep.subr.mxu0 %v193
    %376 = vmatpush2.msra.mxu0 %v192
    %377 = vmatprep.subr.mxu0 %v187
    %378 = vmatpush2.msra.mxu0 %v186
    %379 = vmatprep.subr.mxu0 %v181
    %380 = vmatpush2.msra.mxu0 %v180
    %381 = vmatprep.subr.mxu0 %v175
    %382 = vmatpush2.msra.mxu0 %v174
    %383 = vmatprep.mubr.f32.mxu0 %v72
    %384 = vmatmul.mubr.f32.gmra.mxu0 %v77
    %v385 = vpop.f32.mrf.mxu0
    %v386 = vadd.f32 %v292, %v385
    %v387 = vpop.f32.mrf.mxu0
    %v388 = vadd.f32 %v296, %v387
    %389 = vdwg.mxu0
    %390 = vmatprep.subr.mxu0 %v171
    %391 = vmatpush1.msra.mxu0 %v170
    %392 = vmatprep.subr.mxu0 %v165
    %393 = vmatpush1.msra.mxu0 %v164
    %394 = vmatprep.subr.mxu0 %v159
    %395 = vmatpush1.msra.mxu0 %v158
    %396 = vmatprep.subr.mxu0 %v153
    %397 = vmatpush1.msra.mxu0 %v152
    %398 = vmatprep.subr.mxu0 %v147
    %399 = vmatpush1.msra.mxu0 %v146
    %400 = vmatprep.subr.mxu0 %v141
    %401 = vmatpush1.msra.mxu0 %v140
    %402 = vmatprep.subr.mxu0 %v135
    %403 = vmatpush1.msra.mxu0 %v134
    %404 = vmatprep.subr.mxu0 %v129
    %405 = vmatpush1.msra.mxu0 %v128
    %406 = vmatprep.subr.mxu0 %v123
    %407 = vmatpush1.msra.mxu0 %v122
    %408 = vmatprep.subr.mxu0 %v117
    %409 = vmatpush1.msra.mxu0 %v116
    %410 = vmatprep.subr.mxu0 %v111
    %411 = vmatpush1.msra.mxu0 %v110
    %412 = vmatprep.subr.mxu0 %v105
    %413 = vmatpush1.msra.mxu0 %v104
    %414 = vmatprep.subr.mxu0 %v99
    %415 = vmatpush1.msra.mxu0 %v98
    %416 = vmatprep.subr.mxu0 %v93
    %417 = vmatpush1.msra.mxu0 %v92
    %418 = vmatprep.subr.mxu0 %v87
    %419 = vmatpush1.msra.mxu0 %v86
    %420 = vmatprep.subr.mxu0 %v81
    %421 = vmatpush1.msra.mxu0 %v80
    %422 = vmatprep.subr.mxu0 %v267
    %423 = vmatpush2.msra.mxu0 %v266
    %424 = vmatprep.subr.mxu0 %v261
    %425 = vmatpush2.msra.mxu0 %v260
    %426 = vmatprep.subr.mxu0 %v255
    %427 = vmatpush2.msra.mxu0 %v254
    %428 = vmatprep.subr.mxu0 %v249
    %429 = vmatpush2.msra.mxu0 %v248
    %430 = vmatprep.subr.mxu0 %v243
    %431 = vmatpush2.msra.mxu0 %v242
    %432 = vmatprep.subr.mxu0 %v237
    %433 = vmatpush2.msra.mxu0 %v236
    %434 = vmatprep.subr.mxu0 %v231
    %435 = vmatpush2.msra.mxu0 %v230
    %436 = vmatprep.subr.mxu0 %v225
    %437 = vmatpush2.msra.mxu0 %v224
    %438 = vmatprep.subr.mxu0 %v219
    %439 = vmatpush2.msra.mxu0 %v218
    %440 = vmatprep.subr.mxu0 %v213
    %441 = vmatpush2.msra.mxu0 %v212
    %442 = vmatprep.subr.mxu0 %v207
    %443 = vmatpush2.msra.mxu0 %v206
    %444 = vmatprep.subr.mxu0 %v201
    %445 = vmatpush2.msra.mxu0 %v200
    %446 = vmatprep.subr.mxu0 %v195
    %447 = vmatpush2.msra.mxu0 %v194
    %448 = vmatprep.subr.mxu0 %v189
    %449 = vmatpush2.msra.mxu0 %v188
    %450 = vmatprep.subr.mxu0 %v183
    %451 = vmatpush2.msra.mxu0 %v182
    %452 = vmatprep.subr.mxu0 %v177
    %453 = vmatpush2.msra.mxu0 %v176
    %454 = vmatprep.mubr.f32.mxu0 %v72
    %455 = vmatmul.mubr.f32.gmra.mxu0 %v77
    %v456 = vpop.f32.mrf.mxu0
    %v457 = vadd.f32 %v300, %v456
    %v458 = vpop.f32.mrf.mxu0
    %v459 = vadd.f32 %v304, %v458
    %460 = vdwg.mxu0
    %461 = vmatprep.subr.mxu0 %v173
    %462 = vmatpush1.msra.mxu0 %v172
    %463 = vmatprep.subr.mxu0 %v167
    %464 = vmatpush1.msra.mxu0 %v166
    %465 = vmatprep.subr.mxu0 %v161
    %466 = vmatpush1.msra.mxu0 %v160
    %467 = vmatprep.subr.mxu0 %v155
    %468 = vmatpush1.msra.mxu0 %v154
    %469 = vmatprep.subr.mxu0 %v149
    %470 = vmatpush1.msra.mxu0 %v148
    %471 = vmatprep.subr.mxu0 %v143
    %472 = vmatpush1.msra.mxu0 %v142
    %473 = vmatprep.subr.mxu0 %v137
    %474 = vmatpush1.msra.mxu0 %v136
    %475 = vmatprep.subr.mxu0 %v131
    %476 = vmatpush1.msra.mxu0 %v130
    %477 = vmatprep.subr.mxu0 %v125
    %478 = vmatpush1.msra.mxu0 %v124
    %479 = vmatprep.subr.mxu0 %v119
    %480 = vmatpush1.msra.mxu0 %v118
    %481 = vmatprep.subr.mxu0 %v113
    %482 = vmatpush1.msra.mxu0 %v112
    %483 = vmatprep.subr.mxu0 %v107
    %484 = vmatpush1.msra.mxu0 %v106
    %485 = vmatprep.subr.mxu0 %v101
    %486 = vmatpush1.msra.mxu0 %v100
    %487 = vmatprep.subr.mxu0 %v95
    %488 = vmatpush1.msra.mxu0 %v94
    %489 = vmatprep.subr.mxu0 %v89
    %490 = vmatpush1.msra.mxu0 %v88
    %491 = vmatprep.subr.mxu0 %v83
    %492 = vmatpush1.msra.mxu0 %v82
    %493 = vmatprep.subr.mxu0 %v269
    %494 = vmatpush2.msra.mxu0 %v268
    %495 = vmatprep.subr.mxu0 %v263
    %496 = vmatpush2.msra.mxu0 %v262
    %497 = vmatprep.subr.mxu0 %v257
    %498 = vmatpush2.msra.mxu0 %v256
    %499 = vmatprep.subr.mxu0 %v251
    %500 = vmatpush2.msra.mxu0 %v250
    %501 = vmatprep.subr.mxu0 %v245
    %502 = vmatpush2.msra.mxu0 %v244
    %503 = vmatprep.subr.mxu0 %v239
    %504 = vmatpush2.msra.mxu0 %v238
    %505 = vmatprep.subr.mxu0 %v233
    %506 = vmatpush2.msra.mxu0 %v232
    %507 = vmatprep.subr.mxu0 %v227
    %508 = vmatpush2.msra.mxu0 %v226
    %509 = vmatprep.subr.mxu0 %v221
    %510 = vmatpush2.msra.mxu0 %v220
    %511 = vmatprep.subr.mxu0 %v215
    %512 = vmatpush2.msra.mxu0 %v214
    %513 = vmatprep.subr.mxu0 %v209
    %514 = vmatpush2.msra.mxu0 %v208
    %515 = vmatprep.subr.mxu0 %v203
    %516 = vmatpush2.msra.mxu0 %v202
    %517 = vmatprep.subr.mxu0 %v197
    %518 = vmatpush2.msra.mxu0 %v196
    %519 = vmatprep.subr.mxu0 %v191
    %520 = vmatpush2.msra.mxu0 %v190
    %521 = vmatprep.subr.mxu0 %v185
    %522 = vmatpush2.msra.mxu0 %v184
    %523 = vmatprep.subr.mxu0 %v179
    %524 = vmatpush2.msra.mxu0 %v178
    %525 = vmatprep.mubr.f32.mxu0 %v72
    %526 = vmatmul.mubr.f32.gmra.mxu0 %v77
    %v527 = vpop.f32.mrf.mxu0
    %v528 = vadd.f32 %v308, %v527
    %v529 = vpop.f32.mrf.mxu0
    %v530 = vadd.f32 %v312, %v529
    %531 = vdwg.mxu0
    %v532 = vadd.f32 %v386, %v459
    %v533 = vxor.u32 %v532, 2147483648
    %v534 = vmul.f32 %v533, 1.442695
    %v535 = vpow.pop %v534
    %v536 = vadd.f32 %v535, 1.0
    %v537 = vrcp.pop %v536
    %v538 = vmul.f32 1.0, %v537
    %v539 = vadd.f32 %v388, %v528
    %v540 = vxor.u32 %v539, 2147483648
    %v541 = vmul.f32 %v540, 1.442695
    %v542 = vpow.pop %v541
    %v543 = vadd.f32 %v542, 1.0
    %v544 = vrcp.pop %v543
    %v545 = vmul.f32 1.0, %v544
    %v546 = vmul.f32 %v538, %v530
    %v547 = vadd.f32 %v457, %v546
    %v548 = vtanh.pop %v547
    %v549 = vsub.f32 1.0, %v545
    %v550 = vmul.f32 %v549, %v548
    %v551 = vmul.f32 %v545, %v72
    %v552 = vadd.f32 %v550, %v551
    %v554 = vlaneseq
    %v555 = vshrl.u32 %v554, 7
    %v556 = vsub.s32 0, %v555
    %v557 = vrot.slane %v287, %v556
    %559 = vmatprep.subr.mxu0 0.0
    %560 = vmatpush1.msra.mxu0 %v286
    %561 = vmatprep.subr.mxu0 0.0
    %562 = vmatpush1.msra.mxu0 %v285
    %563 = vmatprep.subr.mxu0 0.0
    %564 = vmatpush1.msra.mxu0 %v284
    %565 = vmatprep.subr.mxu0 0.0
    %566 = vmatpush1.msra.mxu0 %v283
    %567 = vmatprep.subr.mxu0 0.0
    %568 = vmatpush1.msra.mxu0 %v282
    %569 = vmatprep.subr.mxu0 0.0
    %570 = vmatpush1.msra.mxu0 %v281
    %571 = vmatprep.subr.mxu0 0.0
    %572 = vmatpush1.msra.mxu0 %v280
    %573 = vmatprep.subr.mxu0 0.0
    %574 = vmatpush1.msra.mxu0 %v279
    %575 = vmatprep.subr.mxu0 0.0
    %576 = vmatpush1.msra.mxu0 %v278
    %577 = vmatprep.subr.mxu0 0.0
    %578 = vmatpush1.msra.mxu0 %v277
    %579 = vmatprep.subr.mxu0 0.0
    %580 = vmatpush1.msra.mxu0 %v276
    %581 = vmatprep.subr.mxu0 0.0
    %582 = vmatpush1.msra.mxu0 %v275
    %583 = vmatprep.subr.mxu0 0.0
    %584 = vmatpush1.msra.mxu0 %v274
    %585 = vmatprep.subr.mxu0 0.0
    %586 = vmatpush1.msra.mxu0 %v273
    %587 = vmatprep.subr.mxu0 0.0
    %588 = vmatpush1.msra.mxu0 %v272
    %589 = vmatprep.subr.mxu0 0.0
    %590 = vmatpush1.msra.mxu0 %v271
    %591 = vmatprep.subr.mxu0 0.0
    %592 = vmatpush2.msra.mxu0 0.0
    %593 = vmatprep.subr.mxu0 0.0
    %594 = vmatpush2.msra.mxu0 0.0
    %595 = vmatprep.subr.mxu0 0.0
    %596 = vmatpush2.msra.mxu0 0.0
    %597 = vmatprep.subr.mxu0 0.0
    %598 = vmatpush2.msra.mxu0 0.0
    %599 = vmatprep.subr.mxu0 0.0
    %600 = vmatpush2.msra.mxu0 0.0
    %601 = vmatprep.subr.mxu0 0.0
    %602 = vmatpush2.msra.mxu0 0.0
    %603 = vmatprep.subr.mxu0 0.0
    %604 = vmatpush2.msra.mxu0 0.0
    %605 = vmatprep.subr.mxu0 0.0
    %606 = vmatpush2.msra.mxu0 0.0
    %607 = vmatprep.subr.mxu0 0.0
    %608 = vmatpush2.msra.mxu0 0.0
    %609 = vmatprep.subr.mxu0 0.0
    %610 = vmatpush2.msra.mxu0 0.0
    %611 = vmatprep.subr.mxu0 0.0
    %612 = vmatpush2.msra.mxu0 0.0
    %613 = vmatprep.subr.mxu0 0.0
    %614 = vmatpush2.msra.mxu0 0.0
    %615 = vmatprep.subr.mxu0 0.0
    %616 = vmatpush2.msra.mxu0 0.0
    %617 = vmatprep.subr.mxu0 0.0
    %618 = vmatpush2.msra.mxu0 0.0
    %619 = vmatprep.subr.mxu0 0.0
    %620 = vmatpush2.msra.mxu0 0.0
    %621 = vmatprep.subr.mxu0 0.0
    %622 = vmatpush2.msra.mxu0 0.0
    %623 = vmatprep.mubr.f32.mxu0 0.0
    %624 = vmatmul.mubr.f32.gmra.mxu0 %v552
    %v625 = vpop.f32.mrf.mxu0
    %v626 = vadd.f32 %v557, %v625
    %v627 = vpop.f32.mrf.mxu0
    %628 = vdwg.mxu0
    %629 = vmax.index.xlane.f32.xlu0 %v626
    %v630 = vpop.xlane.xlu0 %629
    %v631 = vlaneseq
    %v632 = vshrl.u32 %v631, 7
    %v633 = vsub.s32 %v74, %v632
    %v634 = vrot.slane %v630, %v633
    %vm635 = vcmask 57344
    %636 = vst.msk [vmem:[#allocation10] sm:$0x1] %vm635, %v634
    %vm637 = vcmp.eq.s32.totalorder %v74, %v630
    %v638 = vsel %vm637, 1, 0
    %v639 = vcvt.s32.f32 %v638
    %640 = vmatprep.subr.mxu0 %v169
    %641 = vmatpush1.msra.mxu0 %v168
    %642 = vmatprep.subr.mxu0 %v163
    %643 = vmatpush1.msra.mxu0 %v162
    %644 = vmatprep.subr.mxu0 %v157
    %645 = vmatpush1.msra.mxu0 %v156
    %646 = vmatprep.subr.mxu0 %v151
    %647 = vmatpush1.msra.mxu0 %v150
    %648 = vmatprep.subr.mxu0 %v145
    %649 = vmatpush1.msra.mxu0 %v144
    %650 = vmatprep.subr.mxu0 %v139
    %651 = vmatpush1.msra.mxu0 %v138
    %652 = vmatprep.subr.mxu0 %v133
    %653 = vmatpush1.msra.mxu0 %v132
    %654 = vmatprep.subr.mxu0 %v127
    %655 = vmatpush1.msra.mxu0 %v126
    %656 = vmatprep.subr.mxu0 %v121
    %657 = vmatpush1.msra.mxu0 %v120
    %658 = vmatprep.subr.mxu0 %v115
    %659 = vmatpush1.msra.mxu0 %v114
    %660 = vmatprep.subr.mxu0 %v109
    %661 = vmatpush1.msra.mxu0 %v108
    %662 = vmatprep.subr.mxu0 %v103
    %663 = vmatpush1.msra.mxu0 %v102
    %664 = vmatprep.subr.mxu0 %v97
    %665 = vmatpush1.msra.mxu0 %v96
    %666 = vmatprep.subr.mxu0 %v91
    %667 = vmatpush1.msra.mxu0 %v90
    %668 = vmatprep.subr.mxu0 %v85
    %669 = vmatpush1.msra.mxu0 %v84
    %670 = vmatprep.subr.mxu0 %v79
    %671 = vmatpush1.msra.mxu0 %v78
    %672 = vmatprep.subr.mxu0 %v265
    %673 = vmatpush2.msra.mxu0 %v264
    %674 = vmatprep.subr.mxu0 %v259
    %675 = vmatpush2.msra.mxu0 %v258
    %676 = vmatprep.subr.mxu0 %v253
    %677 = vmatpush2.msra.mxu0 %v252
    %678 = vmatprep.subr.mxu0 %v247
    %679 = vmatpush2.msra.mxu0 %v246
    %680 = vmatprep.subr.mxu0 %v241
    %681 = vmatpush2.msra.mxu0 %v240
    %682 = vmatprep.subr.mxu0 %v235
    %683 = vmatpush2.msra.mxu0 %v234
    %684 = vmatprep.subr.mxu0 %v229
    %685 = vmatpush2.msra.mxu0 %v228
    %686 = vmatprep.subr.mxu0 %v223
    %687 = vmatpush2.msra.mxu0 %v222
    %688 = vmatprep.subr.mxu0 %v217
    %689 = vmatpush2.msra.mxu0 %v216
    %690 = vmatprep.subr.mxu0 %v211
    %691 = vmatpush2.msra.mxu0 %v210
    %692 = vmatprep.subr.mxu0 %v205
    %693 = vmatpush2.msra.mxu0 %v204
    %694 = vmatprep.subr.mxu0 %v199
    %695 = vmatpush2.msra.mxu0 %v198
    %696 = vmatprep.subr.mxu0 %v193
    %697 = vmatpush2.msra.mxu0 %v192
    %698 = vmatprep.subr.mxu0 %v187
    %699 = vmatpush2.msra.mxu0 %v186
    %700 = vmatprep.subr.mxu0 %v181
    %701 = vmatpush2.msra.mxu0 %v180
    %702 = vmatprep.subr.mxu0 %v175
    %703 = vmatpush2.msra.mxu0 %v174
    %704 = vmatprep.mubr.f32.mxu0 %v552
    %705 = vmatmul.mubr.f32.gmra.mxu0 %v639
    %v706 = vpop.f32.mrf.mxu0
    %v707 = vadd.f32 %v292, %v706
    %v708 = vpop.f32.mrf.mxu0
    %v709 = vadd.f32 %v296, %v708
    %710 = vdwg.mxu0
    %711 = vmatprep.subr.mxu0 %v171
    %712 = vmatpush1.msra.mxu0 %v170
    %713 = vmatprep.subr.mxu0 %v165
    %714 = vmatpush1.msra.mxu0 %v164
    %715 = vmatprep.subr.mxu0 %v159
    %716 = vmatpush1.msra.mxu0 %v158
    %717 = vmatprep.subr.mxu0 %v153
    %718 = vmatpush1.msra.mxu0 %v152
    %719 = vmatprep.subr.mxu0 %v147
    %720 = vmatpush1.msra.mxu0 %v146
    %721 = vmatprep.subr.mxu0 %v141
    %722 = vmatpush1.msra.mxu0 %v140
    %723 = vmatprep.subr.mxu0 %v135
    %724 = vmatpush1.msra.mxu0 %v134
    %725 = vmatprep.subr.mxu0 %v129
    %726 = vmatpush1.msra.mxu0 %v128
    %727 = vmatprep.subr.mxu0 %v123
    %728 = vmatpush1.msra.mxu0 %v122
    %729 = vmatprep.subr.mxu0 %v117
    %730 = vmatpush1.msra.mxu0 %v116
    %731 = vmatprep.subr.mxu0 %v111
    %732 = vmatpush1.msra.mxu0 %v110
    %733 = vmatprep.subr.mxu0 %v105
    %734 = vmatpush1.msra.mxu0 %v104
    %735 = vmatprep.subr.mxu0 %v99
    %736 = vmatpush1.msra.mxu0 %v98
    %737 = vmatprep.subr.mxu0 %v93
    %738 = vmatpush1.msra.mxu0 %v92
    %739 = vmatprep.subr.mxu0 %v87
    %740 = vmatpush1.msra.mxu0 %v86
    %741 = vmatprep.subr.mxu0 %v81
    %742 = vmatpush1.msra.mxu0 %v80
    %743 = vmatprep.subr.mxu0 %v267
    %744 = vmatpush2.msra.mxu0 %v266
    %745 = vmatprep.subr.mxu0 %v261
    %746 = vmatpush2.msra.mxu0 %v260
    %747 = vmatprep.subr.mxu0 %v255
    %748 = vmatpush2.msra.mxu0 %v254
    %749 = vmatprep.subr.mxu0 %v249
    %750 = vmatpush2.msra.mxu0 %v248
    %751 = vmatprep.subr.mxu0 %v243
    %752 = vmatpush2.msra.mxu0 %v242
    %753 = vmatprep.subr.mxu0 %v237
    %754 = vmatpush2.msra.mxu0 %v236
    %755 = vmatprep.subr.mxu0 %v231
    %756 = vmatpush2.msra.mxu0 %v230
    %757 = vmatprep.subr.mxu0 %v225
    %758 = vmatpush2.msra.mxu0 %v224
    %759 = vmatprep.subr.mxu0 %v219
    %760 = vmatpush2.msra.mxu0 %v218
    %761 = vmatprep.subr.mxu0 %v213
    %762 = vmatpush2.msra.mxu0 %v212
    %763 = vmatprep.subr.mxu0 %v207
    %764 = vmatpush2.msra.mxu0 %v206
    %765 = vmatprep.subr.mxu0 %v201
    %766 = vmatpush2.msra.mxu0 %v200
    %767 = vmatprep.subr.mxu0 %v195
    %768 = vmatpush2.msra.mxu0 %v194
    %769 = vmatprep.subr.mxu0 %v189
    %770 = vmatpush2.msra.mxu0 %v188
    %771 = vmatprep.subr.mxu0 %v183
    %772 = vmatpush2.msra.mxu0 %v182
    %773 = vmatprep.subr.mxu0 %v177
    %774 = vmatpush2.msra.mxu0 %v176
    %775 = vmatprep.mubr.f32.mxu0 %v552
    %776 = vmatmul.mubr.f32.gmra.mxu0 %v639
    %v777 = vpop.f32.mrf.mxu0
    %v778 = vadd.f32 %v300, %v777
    %v779 = vpop.f32.mrf.mxu0
    %v780 = vadd.f32 %v304, %v779
    %781 = vdwg.mxu0
    %782 = vmatprep.subr.mxu0 %v173
    %783 = vmatpush1.msra.mxu0 %v172
    %784 = vmatprep.subr.mxu0 %v167
    %785 = vmatpush1.msra.mxu0 %v166
    %786 = vmatprep.subr.mxu0 %v161
    %787 = vmatpush1.msra.mxu0 %v160
    %788 = vmatprep.subr.mxu0 %v155
    %789 = vmatpush1.msra.mxu0 %v154
    %790 = vmatprep.subr.mxu0 %v149
    %791 = vmatpush1.msra.mxu0 %v148
    %792 = vmatprep.subr.mxu0 %v143
    %793 = vmatpush1.msra.mxu0 %v142
    %794 = vmatprep.subr.mxu0 %v137
    %795 = vmatpush1.msra.mxu0 %v136
    %796 = vmatprep.subr.mxu0 %v131
    %797 = vmatpush1.msra.mxu0 %v130
    %798 = vmatprep.subr.mxu0 %v125
    %799 = vmatpush1.msra.mxu0 %v124
    %800 = vmatprep.subr.mxu0 %v119
    %801 = vmatpush1.msra.mxu0 %v118
    %802 = vmatprep.subr.mxu0 %v113
    %803 = vmatpush1.msra.mxu0 %v112
    %804 = vmatprep.subr.mxu0 %v107
    %805 = vmatpush1.msra.mxu0 %v106
    %806 = vmatprep.subr.mxu0 %v101
    %807 = vmatpush1.msra.mxu0 %v100
    %808 = vmatprep.subr.mxu0 %v95
    %809 = vmatpush1.msra.mxu0 %v94
    %810 = vmatprep.subr.mxu0 %v89
    %811 = vmatpush1.msra.mxu0 %v88
    %812 = vmatprep.subr.mxu0 %v83
    %813 = vmatpush1.msra.mxu0 %v82
    %814 = vmatprep.subr.mxu0 %v269
    %815 = vmatpush2.msra.mxu0 %v268
    %816 = vmatprep.subr.mxu0 %v263
    %817 = vmatpush2.msra.mxu0 %v262
    %818 = vmatprep.subr.mxu0 %v257
    %819 = vmatpush2.msra.mxu0 %v256
    %820 = vmatprep.subr.mxu0 %v251
    %821 = vmatpush2.msra.mxu0 %v250
    %822 = vmatprep.subr.mxu0 %v245
    %823 = vmatpush2.msra.mxu0 %v244
    %824 = vmatprep.subr.mxu0 %v239
    %825 = vmatpush2.msra.mxu0 %v238
    %826 = vmatprep.subr.mxu0 %v233
    %827 = vmatpush2.msra.mxu0 %v232
    %828 = vmatprep.subr.mxu0 %v227
    %829 = vmatpush2.msra.mxu0 %v226
    %830 = vmatprep.subr.mxu0 %v221
    %831 = vmatpush2.msra.mxu0 %v220
    %832 = vmatprep.subr.mxu0 %v215
    %833 = vmatpush2.msra.mxu0 %v214
    %834 = vmatprep.subr.mxu0 %v209
    %835 = vmatpush2.msra.mxu0 %v208
    %836 = vmatprep.subr.mxu0 %v203
    %837 = vmatpush2.msra.mxu0 %v202
    %838 = vmatprep.subr.mxu0 %v197
    %839 = vmatpush2.msra.mxu0 %v196
    %840 = vmatprep.subr.mxu0 %v191
    %841 = vmatpush2.msra.mxu0 %v190
    %842 = vmatprep.subr.mxu0 %v185
    %843 = vmatpush2.msra.mxu0 %v184
    %844 = vmatprep.subr.mxu0 %v179
    %845 = vmatpush2.msra.mxu0 %v178
    %846 = vmatprep.mubr.f32.mxu0 %v552
    %847 = vmatmul.mubr.f32.gmra.mxu0 %v639
    %v848 = vpop.f32.mrf.mxu0
    %v849 = vadd.f32 %v308, %v848
    %v850 = vpop.f32.mrf.mxu0
    %v851 = vadd.f32 %v312, %v850
    %852 = vdwg.mxu0
    %v853 = vadd.f32 %v707, %v780
    %v854 = vxor.u32 %v853, 2147483648
    %v855 = vmul.f32 %v854, 1.442695
    %v856 = vpow.pop %v855
    %v857 = vadd.f32 %v856, 1.0
    %v858 = vrcp.pop %v857
    %v859 = vmul.f32 1.0, %v858
    %v860 = vadd.f32 %v709, %v849
    %v861 = vxor.u32 %v860, 2147483648
    %v862 = vmul.f32 %v861, 1.442695
    %v863 = vpow.pop %v862
    %v864 = vadd.f32 %v863, 1.0
    %v865 = vrcp.pop %v864
    %v866 = vmul.f32 1.0, %v865
    %v867 = vmul.f32 %v859, %v851
    %v868 = vadd.f32 %v778, %v867
    %v869 = vtanh.pop %v868
    %v870 = vsub.f32 1.0, %v866
    %v871 = vmul.f32 %v870, %v869
    %v872 = vmul.f32 %v866, %v552
    %v873 = vadd.f32 %v871, %v872
    %874 = vmatprep.subr.mxu0 0.0
    %875 = vmatpush1.msra.mxu0 %v286
    %876 = vmatprep.subr.mxu0 0.0
    %877 = vmatpush1.msra.mxu0 %v285
    %878 = vmatprep.subr.mxu0 0.0
    %879 = vmatpush1.msra.mxu0 %v284
    %880 = vmatprep.subr.mxu0 0.0
    %881 = vmatpush1.msra.mxu0 %v283
    %882 = vmatprep.subr.mxu0 0.0
    %883 = vmatpush1.msra.mxu0 %v282
    %884 = vmatprep.subr.mxu0 0.0
    %885 = vmatpush1.msra.mxu0 %v281
    %886 = vmatprep.subr.mxu0 0.0
    %887 = vmatpush1.msra.mxu0 %v280
    %888 = vmatprep.subr.mxu0 0.0
    %889 = vmatpush1.msra.mxu0 %v279
    %890 = vmatprep.subr.mxu0 0.0
    %891 = vmatpush1.msra.mxu0 %v278
    %892 = vmatprep.subr.mxu0 0.0
    %893 = vmatpush1.msra.mxu0 %v277
    %894 = vmatprep.subr.mxu0 0.0
    %895 = vmatpush1.msra.mxu0 %v276
    %896 = vmatprep.subr.mxu0 0.0
    %897 = vmatpush1.msra.mxu0 %v275
    %898 = vmatprep.subr.mxu0 0.0
    %899 = vmatpush1.msra.mxu0 %v274
    %900 = vmatprep.subr.mxu0 0.0
    %901 = vmatpush1.msra.mxu0 %v273
    %902 = vmatprep.subr.mxu0 0.0
    %903 = vmatpush1.msra.mxu0 %v272
    %904 = vmatprep.subr.mxu0 0.0
    %905 = vmatpush1.msra.mxu0 %v271
    %906 = vmatprep.subr.mxu0 0.0
    %907 = vmatpush2.msra.mxu0 0.0
    %908 = vmatprep.subr.mxu0 0.0
    %909 = vmatpush2.msra.mxu0 0.0
    %910 = vmatprep.subr.mxu0 0.0
    %911 = vmatpush2.msra.mxu0 0.0
    %912 = vmatprep.subr.mxu0 0.0
    %913 = vmatpush2.msra.mxu0 0.0
    %914 = vmatprep.subr.mxu0 0.0
    %915 = vmatpush2.msra.mxu0 0.0
    %916 = vmatprep.subr.mxu0 0.0
    %917 = vmatpush2.msra.mxu0 0.0
    %918 = vmatprep.subr.mxu0 0.0
    %919 = vmatpush2.msra.mxu0 0.0
    %920 = vmatprep.subr.mxu0 0.0
    %921 = vmatpush2.msra.mxu0 0.0
    %922 = vmatprep.subr.mxu0 0.0
    %923 = vmatpush2.msra.mxu0 0.0
    %924 = vmatprep.subr.mxu0 0.0
    %925 = vmatpush2.msra.mxu0 0.0
    %926 = vmatprep.subr.mxu0 0.0
    %927 = vmatpush2.msra.mxu0 0.0
    %928 = vmatprep.subr.mxu0 0.0
    %929 = vmatpush2.msra.mxu0 0.0
    %930 = vmatprep.subr.mxu0 0.0
    %931 = vmatpush2.msra.mxu0 0.0
    %932 = vmatprep.subr.mxu0 0.0
    %933 = vmatpush2.msra.mxu0 0.0
    %934 = vmatprep.subr.mxu0 0.0
    %935 = vmatpush2.msra.mxu0 0.0
    %936 = vmatprep.subr.mxu0 0.0
    %937 = vmatpush2.msra.mxu0 0.0
    %938 = vmatprep.mubr.f32.mxu0 0.0
    %939 = vmatmul.mubr.f32.gmra.mxu0 %v873
    %v940 = vpop.f32.mrf.mxu0
    %v941 = vadd.f32 %v557, %v940
    %v942 = vpop.f32.mrf.mxu0
    %943 = vdwg.mxu0
    %944 = vmax.index.xlane.f32.xlu0 %v941
    %v945 = vpop.xlane.xlu0 %944
    %v946 = vlaneseq
    %v947 = vshrl.u32 %v946, 7
    %v948 = vsub.s32 %v74, %v947
    %v949 = vrot.slane %v945, %v948
    %950 = vst.msk [vmem:[#allocation10 + $0x1] sm:$0x1] %vm635, %v949
    %vm951 = vcmp.eq.s32.totalorder %v74, %v945
    %v952 = vsel %vm951, 1, 0
    %v953 = vcvt.s32.f32 %v952
    %954 = vmatprep.subr.mxu0 %v169
    %955 = vmatpush1.msra.mxu0 %v168
    %956 = vmatprep.subr.mxu0 %v163
    %957 = vmatpush1.msra.mxu0 %v162
    %958 = vmatprep.subr.mxu0 %v157
    %959 = vmatpush1.msra.mxu0 %v156
    %960 = vmatprep.subr.mxu0 %v151
    %961 = vmatpush1.msra.mxu0 %v150
    %962 = vmatprep.subr.mxu0 %v145
    %963 = vmatpush1.msra.mxu0 %v144
    %964 = vmatprep.subr.mxu0 %v139
    %965 = vmatpush1.msra.mxu0 %v138
    %966 = vmatprep.subr.mxu0 %v133
    %967 = vmatpush1.msra.mxu0 %v132
    %968 = vmatprep.subr.mxu0 %v127
    %969 = vmatpush1.msra.mxu0 %v126
    %970 = vmatprep.subr.mxu0 %v121
    %971 = vmatpush1.msra.mxu0 %v120
    %972 = vmatprep.subr.mxu0 %v115
    %973 = vmatpush1.msra.mxu0 %v114
    %974 = vmatprep.subr.mxu0 %v109
    %975 = vmatpush1.msra.mxu0 %v108
    %976 = vmatprep.subr.mxu0 %v103
    %977 = vmatpush1.msra.mxu0 %v102
    %978 = vmatprep.subr.mxu0 %v97
    %979 = vmatpush1.msra.mxu0 %v96
    %980 = vmatprep.subr.mxu0 %v91
    %981 = vmatpush1.msra.mxu0 %v90
    %982 = vmatprep.subr.mxu0 %v85
    %983 = vmatpush1.msra.mxu0 %v84
    %984 = vmatprep.subr.mxu0 %v79
    %985 = vmatpush1.msra.mxu0 %v78
    %986 = vmatprep.subr.mxu0 %v265
    %987 = vmatpush2.msra.mxu0 %v264
    %988 = vmatprep.subr.mxu0 %v259
    %989 = vmatpush2.msra.mxu0 %v258
    %990 = vmatprep.subr.mxu0 %v253
    %991 = vmatpush2.msra.mxu0 %v252
    %992 = vmatprep.subr.mxu0 %v247
    %993 = vmatpush2.msra.mxu0 %v246
    %994 = vmatprep.subr.mxu0 %v241
    %995 = vmatpush2.msra.mxu0 %v240
    %996 = vmatprep.subr.mxu0 %v235
    %997 = vmatpush2.msra.mxu0 %v234
    %998 = vmatprep.subr.mxu0 %v229
    %999 = vmatpush2.msra.mxu0 %v228
    %1000 = vmatprep.subr.mxu0 %v223
    %1001 = vmatpush2.msra.mxu0 %v222
    %1002 = vmatprep.subr.mxu0 %v217
    %1003 = vmatpush2.msra.mxu0 %v216
    %1004 = vmatprep.subr.mxu0 %v211
    %1005 = vmatpush2.msra.mxu0 %v210
    %1006 = vmatprep.subr.mxu0 %v205
    %1007 = vmatpush2.msra.mxu0 %v204
    %1008 = vmatprep.subr.mxu0 %v199
    %1009 = vmatpush2.msra.mxu0 %v198
    %1010 = vmatprep.subr.mxu0 %v193
    %1011 = vmatpush2.msra.mxu0 %v192
    %1012 = vmatprep.subr.mxu0 %v187
    %1013 = vmatpush2.msra.mxu0 %v186
    %1014 = vmatprep.subr.mxu0 %v181
    %1015 = vmatpush2.msra.mxu0 %v180
    %1016 = vmatprep.subr.mxu0 %v175
    %1017 = vmatpush2.msra.mxu0 %v174
    %1018 = vmatprep.mubr.f32.mxu0 %v873
    %1019 = vmatmul.mubr.f32.gmra.mxu0 %v953
    %v1020 = vpop.f32.mrf.mxu0
    %v1021 = vadd.f32 %v292, %v1020
    %v1022 = vpop.f32.mrf.mxu0
    %v1023 = vadd.f32 %v296, %v1022
    %1024 = vdwg.mxu0
    %1025 = vmatprep.subr.mxu0 %v171
    %1026 = vmatpush1.msra.mxu0 %v170
    %1027 = vmatprep.subr.mxu0 %v165
    %1028 = vmatpush1.msra.mxu0 %v164
    %1029 = vmatprep.subr.mxu0 %v159
    %1030 = vmatpush1.msra.mxu0 %v158
    %1031 = vmatprep.subr.mxu0 %v153
    %1032 = vmatpush1.msra.mxu0 %v152
    %1033 = vmatprep.subr.mxu0 %v147
    %1034 = vmatpush1.msra.mxu0 %v146
    %1035 = vmatprep.subr.mxu0 %v141
    %1036 = vmatpush1.msra.mxu0 %v140
    %1037 = vmatprep.subr.mxu0 %v135
    %1038 = vmatpush1.msra.mxu0 %v134
    %1039 = vmatprep.subr.mxu0 %v129
    %1040 = vmatpush1.msra.mxu0 %v128
    %1041 = vmatprep.subr.mxu0 %v123
    %1042 = vmatpush1.msra.mxu0 %v122
    %1043 = vmatprep.subr.mxu0 %v117
    %1044 = vmatpush1.msra.mxu0 %v116
    %1045 = vmatprep.subr.mxu0 %v111
    %1046 = vmatpush1.msra.mxu0 %v110
    %1047 = vmatprep.subr.mxu0 %v105
    %1048 = vmatpush1.msra.mxu0 %v104
    %1049 = vmatprep.subr.mxu0 %v99
    %1050 = vmatpush1.msra.mxu0 %v98
    %1051 = vmatprep.subr.mxu0 %v93
    %1052 = vmatpush1.msra.mxu0 %v92
    %1053 = vmatprep.subr.mxu0 %v87
    %1054 = vmatpush1.msra.mxu0 %v86
    %1055 = vmatprep.subr.mxu0 %v81
    %1056 = vmatpush1.msra.mxu0 %v80
    %1057 = vmatprep.subr.mxu0 %v267
    %1058 = vmatpush2.msra.mxu0 %v266
    %1059 = vmatprep.subr.mxu0 %v261
    %1060 = vmatpush2.msra.mxu0 %v260
    %1061 = vmatprep.subr.mxu0 %v255
    %1062 = vmatpush2.msra.mxu0 %v254
    %1063 = vmatprep.subr.mxu0 %v249
    %1064 = vmatpush2.msra.mxu0 %v248
    %1065 = vmatprep.subr.mxu0 %v243
    %1066 = vmatpush2.msra.mxu0 %v242
    %1067 = vmatprep.subr.mxu0 %v237
    %1068 = vmatpush2.msra.mxu0 %v236
    %1069 = vmatprep.subr.mxu0 %v231
    %1070 = vmatpush2.msra.mxu0 %v230
    %1071 = vmatprep.subr.mxu0 %v225
    %1072 = vmatpush2.msra.mxu0 %v224
    %1073 = vmatprep.subr.mxu0 %v219
    %1074 = vmatpush2.msra.mxu0 %v218
    %1075 = vmatprep.subr.mxu0 %v213
    %1076 = vmatpush2.msra.mxu0 %v212
    %1077 = vmatprep.subr.mxu0 %v207
    %1078 = vmatpush2.msra.mxu0 %v206
    %1079 = vmatprep.subr.mxu0 %v201
    %1080 = vmatpush2.msra.mxu0 %v200
    %1081 = vmatprep.subr.mxu0 %v195
    %1082 = vmatpush2.msra.mxu0 %v194
    %1083 = vmatprep.subr.mxu0 %v189
    %1084 = vmatpush2.msra.mxu0 %v188
    %1085 = vmatprep.subr.mxu0 %v183
    %1086 = vmatpush2.msra.mxu0 %v182
    %1087 = vmatprep.subr.mxu0 %v177
    %1088 = vmatpush2.msra.mxu0 %v176
    %1089 = vmatprep.mubr.f32.mxu0 %v873
    %1090 = vmatmul.mubr.f32.gmra.mxu0 %v953
    %v1091 = vpop.f32.mrf.mxu0
    %v1092 = vadd.f32 %v300, %v1091
    %v1093 = vpop.f32.mrf.mxu0
    %v1094 = vadd.f32 %v304, %v1093
    %1095 = vdwg.mxu0
    %1096 = vmatprep.subr.mxu0 %v173
    %1097 = vmatpush1.msra.mxu0 %v172
    %1098 = vmatprep.subr.mxu0 %v167
    %1099 = vmatpush1.msra.mxu0 %v166
    %1100 = vmatprep.subr.mxu0 %v161
    %1101 = vmatpush1.msra.mxu0 %v160
    %1102 = vmatprep.subr.mxu0 %v155
    %1103 = vmatpush1.msra.mxu0 %v154
    %1104 = vmatprep.subr.mxu0 %v149
    %1105 = vmatpush1.msra.mxu0 %v148
    %1106 = vmatprep.subr.mxu0 %v143
    %1107 = vmatpush1.msra.mxu0 %v142
    %1108 = vmatprep.subr.mxu0 %v137
    %1109 = vmatpush1.msra.mxu0 %v136
    %1110 = vmatprep.subr.mxu0 %v131
    %1111 = vmatpush1.msra.mxu0 %v130
    %1112 = vmatprep.subr.mxu0 %v125
    %1113 = vmatpush1.msra.mxu0 %v124
    %1114 = vmatprep.subr.mxu0 %v119
    %1115 = vmatpush1.msra.mxu0 %v118
    %1116 = vmatprep.subr.mxu0 %v113
    %1117 = vmatpush1.msra.mxu0 %v112
    %1118 = vmatprep.subr.mxu0 %v107
    %1119 = vmatpush1.msra.mxu0 %v106
    %1120 = vmatprep.subr.mxu0 %v101
    %1121 = vmatpush1.msra.mxu0 %v100
    %1122 = vmatprep.subr.mxu0 %v95
    %1123 = vmatpush1.msra.mxu0 %v94
    %1124 = vmatprep.subr.mxu0 %v89
    %1125 = vmatpush1.msra.mxu0 %v88
    %1126 = vmatprep.subr.mxu0 %v83
    %1127 = vmatpush1.msra.mxu0 %v82
    %1128 = vmatprep.subr.mxu0 %v269
    %1129 = vmatpush2.msra.mxu0 %v268
    %1130 = vmatprep.subr.mxu0 %v263
    %1131 = vmatpush2.msra.mxu0 %v262
    %1132 = vmatprep.subr.mxu0 %v257
    %1133 = vmatpush2.msra.mxu0 %v256
    %1134 = vmatprep.subr.mxu0 %v251
    %1135 = vmatpush2.msra.mxu0 %v250
    %1136 = vmatprep.subr.mxu0 %v245
    %1137 = vmatpush2.msra.mxu0 %v244
    %1138 = vmatprep.subr.mxu0 %v239
    %1139 = vmatpush2.msra.mxu0 %v238
    %1140 = vmatprep.subr.mxu0 %v233
    %1141 = vmatpush2.msra.mxu0 %v232
    %1142 = vmatprep.subr.mxu0 %v227
    %1143 = vmatpush2.msra.mxu0 %v226
    %1144 = vmatprep.subr.mxu0 %v221
    %1145 = vmatpush2.msra.mxu0 %v220
    %1146 = vmatprep.subr.mxu0 %v215
    %1147 = vmatpush2.msra.mxu0 %v214
    %1148 = vmatprep.subr.mxu0 %v209
    %1149 = vmatpush2.msra.mxu0 %v208
    %1150 = vmatprep.subr.mxu0 %v203
    %1151 = vmatpush2.msra.mxu0 %v202
    %1152 = vmatprep.subr.mxu0 %v197
    %1153 = vmatpush2.msra.mxu0 %v196
    %1154 = vmatprep.subr.mxu0 %v191
    %1155 = vmatpush2.msra.mxu0 %v190
    %1156 = vmatprep.subr.mxu0 %v185
    %1157 = vmatpush2.msra.mxu0 %v184
    %1158 = vmatprep.subr.mxu0 %v179
    %1159 = vmatpush2.msra.mxu0 %v178
    %1160 = vmatprep.mubr.f32.mxu0 %v873
    %1161 = vmatmul.mubr.f32.gmra.mxu0 %v953
    %v1162 = vpop.f32.mrf.mxu0
    %v1163 = vadd.f32 %v308, %v1162
    %v1164 = vpop.f32.mrf.mxu0
    %v1165 = vadd.f32 %v312, %v1164
    %1166 = vdwg.mxu0
    %v1167 = vadd.f32 %v1021, %v1094
    %v1168 = vxor.u32 %v1167, 2147483648
    %v1169 = vmul.f32 %v1168, 1.442695
    %v1170 = vpow.pop %v1169
    %v1171 = vadd.f32 %v1170, 1.0
    %v1172 = vrcp.pop %v1171
    %v1173 = vmul.f32 1.0, %v1172
    %v1174 = vadd.f32 %v1023, %v1163
    %v1175 = vxor.u32 %v1174, 2147483648
    %v1176 = vmul.f32 %v1175, 1.442695
    %v1177 = vpow.pop %v1176
    %v1178 = vadd.f32 %v1177, 1.0
    %v1179 = vrcp.pop %v1178
    %v1180 = vmul.f32 1.0, %v1179
    %v1181 = vmul.f32 %v1173, %v1165
    %v1182 = vadd.f32 %v1092, %v1181
    %v1183 = vtanh.pop %v1182
    %v1184 = vsub.f32 1.0, %v1180
    %v1185 = vmul.f32 %v1184, %v1183
    %v1186 = vmul.f32 %v1180, %v873
    %v1187 = vadd.f32 %v1185, %v1186
    %1188 = vmatprep.subr.mxu0 0.0
    %1189 = vmatpush1.msra.mxu0 %v286
    %1190 = vmatprep.subr.mxu0 0.0
    %1191 = vmatpush1.msra.mxu0 %v285
    %1192 = vmatprep.subr.mxu0 0.0
    %1193 = vmatpush1.msra.mxu0 %v284
    %1194 = vmatprep.subr.mxu0 0.0
    %1195 = vmatpush1.msra.mxu0 %v283
    %1196 = vmatprep.subr.mxu0 0.0
    %1197 = vmatpush1.msra.mxu0 %v282
    %1198 = vmatprep.subr.mxu0 0.0
    %1199 = vmatpush1.msra.mxu0 %v281
    %1200 = vmatprep.subr.mxu0 0.0
    %1201 = vmatpush1.msra.mxu0 %v280
    %1202 = vmatprep.subr.mxu0 0.0
    %1203 = vmatpush1.msra.mxu0 %v279
    %1204 = vmatprep.subr.mxu0 0.0
    %1205 = vmatpush1.msra.mxu0 %v278
    %1206 = vmatprep.subr.mxu0 0.0
    %1207 = vmatpush1.msra.mxu0 %v277
    %1208 = vmatprep.subr.mxu0 0.0
    %1209 = vmatpush1.msra.mxu0 %v276
    %1210 = vmatprep.subr.mxu0 0.0
    %1211 = vmatpush1.msra.mxu0 %v275
    %1212 = vmatprep.subr.mxu0 0.0
    %1213 = vmatpush1.msra.mxu0 %v274
    %1214 = vmatprep.subr.mxu0 0.0
    %1215 = vmatpush1.msra.mxu0 %v273
    %1216 = vmatprep.subr.mxu0 0.0
    %1217 = vmatpush1.msra.mxu0 %v272
    %1218 = vmatprep.subr.mxu0 0.0
    %1219 = vmatpush1.msra.mxu0 %v271
    %1220 = vmatprep.subr.mxu0 0.0
    %1221 = vmatpush2.msra.mxu0 0.0
    %1222 = vmatprep.subr.mxu0 0.0
    %1223 = vmatpush2.msra.mxu0 0.0
    %1224 = vmatprep.subr.mxu0 0.0
    %1225 = vmatpush2.msra.mxu0 0.0
    %1226 = vmatprep.subr.mxu0 0.0
    %1227 = vmatpush2.msra.mxu0 0.0
    %1228 = vmatprep.subr.mxu0 0.0
    %1229 = vmatpush2.msra.mxu0 0.0
    %1230 = vmatprep.subr.mxu0 0.0
    %1231 = vmatpush2.msra.mxu0 0.0
    %1232 = vmatprep.subr.mxu0 0.0
    %1233 = vmatpush2.msra.mxu0 0.0
    %1234 = vmatprep.subr.mxu0 0.0
    %1235 = vmatpush2.msra.mxu0 0.0
    %1236 = vmatprep.subr.mxu0 0.0
    %1237 = vmatpush2.msra.mxu0 0.0
    %1238 = vmatprep.subr.mxu0 0.0
    %1239 = vmatpush2.msra.mxu0 0.0
    %1240 = vmatprep.subr.mxu0 0.0
    %1241 = vmatpush2.msra.mxu0 0.0
    %1242 = vmatprep.subr.mxu0 0.0
    %1243 = vmatpush2.msra.mxu0 0.0
    %1244 = vmatprep.subr.mxu0 0.0
    %1245 = vmatpush2.msra.mxu0 0.0
    %1246 = vmatprep.subr.mxu0 0.0
    %1247 = vmatpush2.msra.mxu0 0.0
    %1248 = vmatprep.subr.mxu0 0.0
    %1249 = vmatpush2.msra.mxu0 0.0
    %1250 = vmatprep.subr.mxu0 0.0
    %1251 = vmatpush2.msra.mxu0 0.0
    %1252 = vmatprep.mubr.f32.mxu0 0.0
    %1253 = vmatmul.mubr.f32.gmra.mxu0 %v1187
    %v1254 = vpop.f32.mrf.mxu0
    %v1255 = vadd.f32 %v557, %v1254
    %v1256 = vpop.f32.mrf.mxu0
    %1257 = vdwg.mxu0
    %1258 = vmax.index.xlane.f32.xlu0 %v1255
    %v1259 = vpop.xlane.xlu0 %1258
    %v1260 = vlaneseq
    %v1261 = vshrl.u32 %v1260, 7
    %v1262 = vsub.s32 %v74, %v1261
    %v1263 = vrot.slane %v1259, %v1262
    %1264 = vst.msk [vmem:[#allocation10 + $0x2] sm:$0x1] %vm635, %v1263
    %vm1265 = vcmp.eq.s32.totalorder %v74, %v1259
    %v1266 = vsel %vm1265, 1, 0
    %v1267 = vcvt.s32.f32 %v1266
    %1268 = vmatprep.subr.mxu0 %v169
    %1269 = vmatpush1.msra.mxu0 %v168
    %1270 = vmatprep.subr.mxu0 %v163
    %1271 = vmatpush1.msra.mxu0 %v162
    %1272 = vmatprep.subr.mxu0 %v157
    %1273 = vmatpush1.msra.mxu0 %v156
    %1274 = vmatprep.subr.mxu0 %v151
    %1275 = vmatpush1.msra.mxu0 %v150
    %1276 = vmatprep.subr.mxu0 %v145
    %1277 = vmatpush1.msra.mxu0 %v144
    %1278 = vmatprep.subr.mxu0 %v139
    %1279 = vmatpush1.msra.mxu0 %v138
    %1280 = vmatprep.subr.mxu0 %v133
    %1281 = vmatpush1.msra.mxu0 %v132
    %1282 = vmatprep.subr.mxu0 %v127
    %1283 = vmatpush1.msra.mxu0 %v126
    %1284 = vmatprep.subr.mxu0 %v121
    %1285 = vmatpush1.msra.mxu0 %v120
    %1286 = vmatprep.subr.mxu0 %v115
    %1287 = vmatpush1.msra.mxu0 %v114
    %1288 = vmatprep.subr.mxu0 %v109
    %1289 = vmatpush1.msra.mxu0 %v108
    %1290 = vmatprep.subr.mxu0 %v103
    %1291 = vmatpush1.msra.mxu0 %v102
    %1292 = vmatprep.subr.mxu0 %v97
    %1293 = vmatpush1.msra.mxu0 %v96
    %1294 = vmatprep.subr.mxu0 %v91
    %1295 = vmatpush1.msra.mxu0 %v90
    %1296 = vmatprep.subr.mxu0 %v85
    %1297 = vmatpush1.msra.mxu0 %v84
    %1298 = vmatprep.subr.mxu0 %v79
    %1299 = vmatpush1.msra.mxu0 %v78
    %1300 = vmatprep.subr.mxu0 %v265
    %1301 = vmatpush2.msra.mxu0 %v264
    %1302 = vmatprep.subr.mxu0 %v259
    %1303 = vmatpush2.msra.mxu0 %v258
    %1304 = vmatprep.subr.mxu0 %v253
    %1305 = vmatpush2.msra.mxu0 %v252
    %1306 = vmatprep.subr.mxu0 %v247
    %1307 = vmatpush2.msra.mxu0 %v246
    %1308 = vmatprep.subr.mxu0 %v241
    %1309 = vmatpush2.msra.mxu0 %v240
    %1310 = vmatprep.subr.mxu0 %v235
    %1311 = vmatpush2.msra.mxu0 %v234
    %1312 = vmatprep.subr.mxu0 %v229
    %1313 = vmatpush2.msra.mxu0 %v228
    %1314 = vmatprep.subr.mxu0 %v223
    %1315 = vmatpush2.msra.mxu0 %v222
    %1316 = vmatprep.subr.mxu0 %v217
    %1317 = vmatpush2.msra.mxu0 %v216
    %1318 = vmatprep.subr.mxu0 %v211
    %1319 = vmatpush2.msra.mxu0 %v210
    %1320 = vmatprep.subr.mxu0 %v205
    %1321 = vmatpush2.msra.mxu0 %v204
    %1322 = vmatprep.subr.mxu0 %v199
    %1323 = vmatpush2.msra.mxu0 %v198
    %1324 = vmatprep.subr.mxu0 %v193
    %1325 = vmatpush2.msra.mxu0 %v192
    %1326 = vmatprep.subr.mxu0 %v187
    %1327 = vmatpush2.msra.mxu0 %v186
    %1328 = vmatprep.subr.mxu0 %v181
    %1329 = vmatpush2.msra.mxu0 %v180
    %1330 = vmatprep.subr.mxu0 %v175
    %1331 = vmatpush2.msra.mxu0 %v174
    %1332 = vmatprep.mubr.f32.mxu0 %v1187
    %1333 = vmatmul.mubr.f32.gmra.mxu0 %v1267
    %v1334 = vpop.f32.mrf.mxu0
    %v1335 = vadd.f32 %v292, %v1334
    %v1336 = vpop.f32.mrf.mxu0
    %v1337 = vadd.f32 %v296, %v1336
    %1338 = vdwg.mxu0
    %1339 = vmatprep.subr.mxu0 %v171
    %1340 = vmatpush1.msra.mxu0 %v170
    %1341 = vmatprep.subr.mxu0 %v165
    %1342 = vmatpush1.msra.mxu0 %v164
    %1343 = vmatprep.subr.mxu0 %v159
    %1344 = vmatpush1.msra.mxu0 %v158
    %1345 = vmatprep.subr.mxu0 %v153
    %1346 = vmatpush1.msra.mxu0 %v152
    %1347 = vmatprep.subr.mxu0 %v147
    %1348 = vmatpush1.msra.mxu0 %v146
    %1349 = vmatprep.subr.mxu0 %v141
    %1350 = vmatpush1.msra.mxu0 %v140
    %1351 = vmatprep.subr.mxu0 %v135
    %1352 = vmatpush1.msra.mxu0 %v134
    %1353 = vmatprep.subr.mxu0 %v129
    %1354 = vmatpush1.msra.mxu0 %v128
    %1355 = vmatprep.subr.mxu0 %v123
    %1356 = vmatpush1.msra.mxu0 %v122
    %1357 = vmatprep.subr.mxu0 %v117
    %1358 = vmatpush1.msra.mxu0 %v116
    %1359 = vmatprep.subr.mxu0 %v111
    %1360 = vmatpush1.msra.mxu0 %v110
    %1361 = vmatprep.subr.mxu0 %v105
    %1362 = vmatpush1.msra.mxu0 %v104
    %1363 = vmatprep.subr.mxu0 %v99
    %1364 = vmatpush1.msra.mxu0 %v98
    %1365 = vmatprep.subr.mxu0 %v93
    %1366 = vmatpush1.msra.mxu0 %v92
    %1367 = vmatprep.subr.mxu0 %v87
    %1368 = vmatpush1.msra.mxu0 %v86
    %1369 = vmatprep.subr.mxu0 %v81
    %1370 = vmatpush1.msra.mxu0 %v80
    %1371 = vmatprep.subr.mxu0 %v267
    %1372 = vmatpush2.msra.mxu0 %v266
    %1373 = vmatprep.subr.mxu0 %v261
    %1374 = vmatpush2.msra.mxu0 %v260
    %1375 = vmatprep.subr.mxu0 %v255
    %1376 = vmatpush2.msra.mxu0 %v254
    %1377 = vmatprep.subr.mxu0 %v249
    %1378 = vmatpush2.msra.mxu0 %v248
    %1379 = vmatprep.subr.mxu0 %v243
    %1380 = vmatpush2.msra.mxu0 %v242
    %1381 = vmatprep.subr.mxu0 %v237
    %1382 = vmatpush2.msra.mxu0 %v236
    %1383 = vmatprep.subr.mxu0 %v231
    %1384 = vmatpush2.msra.mxu0 %v230
    %1385 = vmatprep.subr.mxu0 %v225
    %1386 = vmatpush2.msra.mxu0 %v224
    %1387 = vmatprep.subr.mxu0 %v219
    %1388 = vmatpush2.msra.mxu0 %v218
    %1389 = vmatprep.subr.mxu0 %v213
    %1390 = vmatpush2.msra.mxu0 %v212
    %1391 = vmatprep.subr.mxu0 %v207
    %1392 = vmatpush2.msra.mxu0 %v206
    %1393 = vmatprep.subr.mxu0 %v201
    %1394 = vmatpush2.msra.mxu0 %v200
    %1395 = vmatprep.subr.mxu0 %v195
    %1396 = vmatpush2.msra.mxu0 %v194
    %1397 = vmatprep.subr.mxu0 %v189
    %1398 = vmatpush2.msra.mxu0 %v188
    %1399 = vmatprep.subr.mxu0 %v183
    %1400 = vmatpush2.msra.mxu0 %v182
    %1401 = vmatprep.subr.mxu0 %v177
    %1402 = vmatpush2.msra.mxu0 %v176
    %1403 = vmatprep.mubr.f32.mxu0 %v1187
    %1404 = vmatmul.mubr.f32.gmra.mxu0 %v1267
    %v1405 = vpop.f32.mrf.mxu0
    %v1406 = vadd.f32 %v300, %v1405
    %v1407 = vpop.f32.mrf.mxu0
    %v1408 = vadd.f32 %v304, %v1407
    %1409 = vdwg.mxu0
    %1410 = vmatprep.subr.mxu0 %v173
    %1411 = vmatpush1.msra.mxu0 %v172
    %1412 = vmatprep.subr.mxu0 %v167
    %1413 = vmatpush1.msra.mxu0 %v166
    %1414 = vmatprep.subr.mxu0 %v161
    %1415 = vmatpush1.msra.mxu0 %v160
    %1416 = vmatprep.subr.mxu0 %v155
    %1417 = vmatpush1.msra.mxu0 %v154
    %1418 = vmatprep.subr.mxu0 %v149
    %1419 = vmatpush1.msra.mxu0 %v148
    %1420 = vmatprep.subr.mxu0 %v143
    %1421 = vmatpush1.msra.mxu0 %v142
    %1422 = vmatprep.subr.mxu0 %v137
    %1423 = vmatpush1.msra.mxu0 %v136
    %1424 = vmatprep.subr.mxu0 %v131
    %1425 = vmatpush1.msra.mxu0 %v130
    %1426 = vmatprep.subr.mxu0 %v125
    %1427 = vmatpush1.msra.mxu0 %v124
    %1428 = vmatprep.subr.mxu0 %v119
    %1429 = vmatpush1.msra.mxu0 %v118
    %1430 = vmatprep.subr.mxu0 %v113
    %1431 = vmatpush1.msra.mxu0 %v112
    %1432 = vmatprep.subr.mxu0 %v107
    %1433 = vmatpush1.msra.mxu0 %v106
    %1434 = vmatprep.subr.mxu0 %v101
    %1435 = vmatpush1.msra.mxu0 %v100
    %1436 = vmatprep.subr.mxu0 %v95
    %1437 = vmatpush1.msra.mxu0 %v94
    %1438 = vmatprep.subr.mxu0 %v89
    %1439 = vmatpush1.msra.mxu0 %v88
    %1440 = vmatprep.subr.mxu0 %v83
    %1441 = vmatpush1.msra.mxu0 %v82
    %1442 = vmatprep.subr.mxu0 %v269
    %1443 = vmatpush2.msra.mxu0 %v268
    %1444 = vmatprep.subr.mxu0 %v263
    %1445 = vmatpush2.msra.mxu0 %v262
    %1446 = vmatprep.subr.mxu0 %v257
    %1447 = vmatpush2.msra.mxu0 %v256
    %1448 = vmatprep.subr.mxu0 %v251
    %1449 = vmatpush2.msra.mxu0 %v250
    %1450 = vmatprep.subr.mxu0 %v245
    %1451 = vmatpush2.msra.mxu0 %v244
    %1452 = vmatprep.subr.mxu0 %v239
    %1453 = vmatpush2.msra.mxu0 %v238
    %1454 = vmatprep.subr.mxu0 %v233
    %1455 = vmatpush2.msra.mxu0 %v232
    %1456 = vmatprep.subr.mxu0 %v227
    %1457 = vmatpush2.msra.mxu0 %v226
    %1458 = vmatprep.subr.mxu0 %v221
    %1459 = vmatpush2.msra.mxu0 %v220
    %1460 = vmatprep.subr.mxu0 %v215
    %1461 = vmatpush2.msra.mxu0 %v214
    %1462 = vmatprep.subr.mxu0 %v209
    %1463 = vmatpush2.msra.mxu0 %v208
    %1464 = vmatprep.subr.mxu0 %v203
    %1465 = vmatpush2.msra.mxu0 %v202
    %1466 = vmatprep.subr.mxu0 %v197
    %1467 = vmatpush2.msra.mxu0 %v196
    %1468 = vmatprep.subr.mxu0 %v191
    %1469 = vmatpush2.msra.mxu0 %v190
    %1470 = vmatprep.subr.mxu0 %v185
    %1471 = vmatpush2.msra.mxu0 %v184
    %1472 = vmatprep.subr.mxu0 %v179
    %1473 = vmatpush2.msra.mxu0 %v178
    %1474 = vmatprep.mubr.f32.mxu0 %v1187
    %1475 = vmatmul.mubr.f32.gmra.mxu0 %v1267
    %v1476 = vpop.f32.mrf.mxu0
    %v1477 = vadd.f32 %v308, %v1476
    %v1478 = vpop.f32.mrf.mxu0
    %v1479 = vadd.f32 %v312, %v1478
    %1480 = vdwg.mxu0
    %v1481 = vadd.f32 %v1335, %v1408
    %v1482 = vxor.u32 %v1481, 2147483648
    %v1483 = vmul.f32 %v1482, 1.442695
    %v1484 = vpow.pop %v1483
    %v1485 = vadd.f32 %v1484, 1.0
    %v1486 = vrcp.pop %v1485
    %v1487 = vmul.f32 1.0, %v1486
    %v1488 = vadd.f32 %v1337, %v1477
    %v1489 = vxor.u32 %v1488, 2147483648
    %v1490 = vmul.f32 %v1489, 1.442695
    %v1491 = vpow.pop %v1490
    %v1492 = vadd.f32 %v1491, 1.0
    %v1493 = vrcp.pop %v1492
    %v1494 = vmul.f32 1.0, %v1493
    %v1495 = vmul.f32 %v1487, %v1479
    %v1496 = vadd.f32 %v1406, %v1495
    %v1497 = vtanh.pop %v1496
    %v1498 = vsub.f32 1.0, %v1494
    %v1499 = vmul.f32 %v1498, %v1497
    %v1500 = vmul.f32 %v1494, %v1187
    %v1501 = vadd.f32 %v1499, %v1500
    %1502 = vmatprep.subr.mxu0 0.0
    %1503 = vmatpush1.msra.mxu0 %v286
    %1504 = vmatprep.subr.mxu0 0.0
    %1505 = vmatpush1.msra.mxu0 %v285
    %1506 = vmatprep.subr.mxu0 0.0
    %1507 = vmatpush1.msra.mxu0 %v284
    %1508 = vmatprep.subr.mxu0 0.0
    %1509 = vmatpush1.msra.mxu0 %v283
    %1510 = vmatprep.subr.mxu0 0.0
    %1511 = vmatpush1.msra.mxu0 %v282
    %1512 = vmatprep.subr.mxu0 0.0
    %1513 = vmatpush1.msra.mxu0 %v281
    %1514 = vmatprep.subr.mxu0 0.0
    %1515 = vmatpush1.msra.mxu0 %v280
    %1516 = vmatprep.subr.mxu0 0.0
    %1517 = vmatpush1.msra.mxu0 %v279
    %1518 = vmatprep.subr.mxu0 0.0
    %1519 = vmatpush1.msra.mxu0 %v278
    %1520 = vmatprep.subr.mxu0 0.0
    %1521 = vmatpush1.msra.mxu0 %v277
    %1522 = vmatprep.subr.mxu0 0.0
    %1523 = vmatpush1.msra.mxu0 %v276
    %1524 = vmatprep.subr.mxu0 0.0
    %1525 = vmatpush1.msra.mxu0 %v275
    %1526 = vmatprep.subr.mxu0 0.0
    %1527 = vmatpush1.msra.mxu0 %v274
    %1528 = vmatprep.subr.mxu0 0.0
    %1529 = vmatpush1.msra.mxu0 %v273
    %1530 = vmatprep.subr.mxu0 0.0
    %1531 = vmatpush1.msra.mxu0 %v272
    %1532 = vmatprep.subr.mxu0 0.0
    %1533 = vmatpush1.msra.mxu0 %v271
    %1534 = vmatprep.subr.mxu0 0.0
    %1535 = vmatpush2.msra.mxu0 0.0
    %1536 = vmatprep.subr.mxu0 0.0
    %1537 = vmatpush2.msra.mxu0 0.0
    %1538 = vmatprep.subr.mxu0 0.0
    %1539 = vmatpush2.msra.mxu0 0.0
    %1540 = vmatprep.subr.mxu0 0.0
    %1541 = vmatpush2.msra.mxu0 0.0
    %1542 = vmatprep.subr.mxu0 0.0
    %1543 = vmatpush2.msra.mxu0 0.0
    %1544 = vmatprep.subr.mxu0 0.0
    %1545 = vmatpush2.msra.mxu0 0.0
    %1546 = vmatprep.subr.mxu0 0.0
    %1547 = vmatpush2.msra.mxu0 0.0
    %1548 = vmatprep.subr.mxu0 0.0
    %1549 = vmatpush2.msra.mxu0 0.0
    %1550 = vmatprep.subr.mxu0 0.0
    %1551 = vmatpush2.msra.mxu0 0.0
    %1552 = vmatprep.subr.mxu0 0.0
    %1553 = vmatpush2.msra.mxu0 0.0
    %1554 = vmatprep.subr.mxu0 0.0
    %1555 = vmatpush2.msra.mxu0 0.0
    %1556 = vmatprep.subr.mxu0 0.0
    %1557 = vmatpush2.msra.mxu0 0.0
    %1558 = vmatprep.subr.mxu0 0.0
    %1559 = vmatpush2.msra.mxu0 0.0
    %1560 = vmatprep.subr.mxu0 0.0
    %1561 = vmatpush2.msra.mxu0 0.0
    %1562 = vmatprep.subr.mxu0 0.0
    %1563 = vmatpush2.msra.mxu0 0.0
    %1564 = vmatprep.subr.mxu0 0.0
    %1565 = vmatpush2.msra.mxu0 0.0
    %1566 = vmatprep.mubr.f32.mxu0 0.0
    %1567 = vmatmul.mubr.f32.gmra.mxu0 %v1501
    %v1568 = vpop.f32.mrf.mxu0
    %v1569 = vadd.f32 %v557, %v1568
    %v1570 = vpop.f32.mrf.mxu0
    %1571 = vdwg.mxu0
    %1572 = vmax.index.xlane.f32.xlu0 %v1569
    %v1573 = vpop.xlane.xlu0 %1572
    %v1574 = vlaneseq
    %v1575 = vshrl.u32 %v1574, 7
    %v1576 = vsub.s32 %v74, %v1575
    %v1577 = vrot.slane %v1573, %v1576
    %1578 = vst.msk [vmem:[#allocation10 + $0x3] sm:$0x1] %vm635, %v1577
    %vm1579 = vcmp.eq.s32.totalorder %v74, %v1573
    %v1580 = vsel %vm1579, 1, 0
    %v1581 = vcvt.s32.f32 %v1580
    %1582 = vmatprep.subr.mxu0 %v169
    %1583 = vmatpush1.msra.mxu0 %v168
    %1584 = vmatprep.subr.mxu0 %v163
    %1585 = vmatpush1.msra.mxu0 %v162
    %1586 = vmatprep.subr.mxu0 %v157
    %1587 = vmatpush1.msra.mxu0 %v156
    %1588 = vmatprep.subr.mxu0 %v151
    %1589 = vmatpush1.msra.mxu0 %v150
    %1590 = vmatprep.subr.mxu0 %v145
    %1591 = vmatpush1.msra.mxu0 %v144
    %1592 = vmatprep.subr.mxu0 %v139
    %1593 = vmatpush1.msra.mxu0 %v138
    %1594 = vmatprep.subr.mxu0 %v133
    %1595 = vmatpush1.msra.mxu0 %v132
    %1596 = vmatprep.subr.mxu0 %v127
    %1597 = vmatpush1.msra.mxu0 %v126
    %1598 = vmatprep.subr.mxu0 %v121
    %1599 = vmatpush1.msra.mxu0 %v120
    %1600 = vmatprep.subr.mxu0 %v115
    %1601 = vmatpush1.msra.mxu0 %v114
    %1602 = vmatprep.subr.mxu0 %v109
    %1603 = vmatpush1.msra.mxu0 %v108
    %1604 = vmatprep.subr.mxu0 %v103
    %1605 = vmatpush1.msra.mxu0 %v102
    %1606 = vmatprep.subr.mxu0 %v97
    %1607 = vmatpush1.msra.mxu0 %v96
    %1608 = vmatprep.subr.mxu0 %v91
    %1609 = vmatpush1.msra.mxu0 %v90
    %1610 = vmatprep.subr.mxu0 %v85
    %1611 = vmatpush1.msra.mxu0 %v84
    %1612 = vmatprep.subr.mxu0 %v79
    %1613 = vmatpush1.msra.mxu0 %v78
    %1614 = vmatprep.subr.mxu0 %v265
    %1615 = vmatpush2.msra.mxu0 %v264
    %1616 = vmatprep.subr.mxu0 %v259
    %1617 = vmatpush2.msra.mxu0 %v258
    %1618 = vmatprep.subr.mxu0 %v253
    %1619 = vmatpush2.msra.mxu0 %v252
    %1620 = vmatprep.subr.mxu0 %v247
    %1621 = vmatpush2.msra.mxu0 %v246
    %1622 = vmatprep.subr.mxu0 %v241
    %1623 = vmatpush2.msra.mxu0 %v240
    %1624 = vmatprep.subr.mxu0 %v235
    %1625 = vmatpush2.msra.mxu0 %v234
    %1626 = vmatprep.subr.mxu0 %v229
    %1627 = vmatpush2.msra.mxu0 %v228
    %1628 = vmatprep.subr.mxu0 %v223
    %1629 = vmatpush2.msra.mxu0 %v222
    %1630 = vmatprep.subr.mxu0 %v217
    %1631 = vmatpush2.msra.mxu0 %v216
    %1632 = vmatprep.subr.mxu0 %v211
    %1633 = vmatpush2.msra.mxu0 %v210
    %1634 = vmatprep.subr.mxu0 %v205
    %1635 = vmatpush2.msra.mxu0 %v204
    %1636 = vmatprep.subr.mxu0 %v199
    %1637 = vmatpush2.msra.mxu0 %v198
    %1638 = vmatprep.subr.mxu0 %v193
    %1639 = vmatpush2.msra.mxu0 %v192
    %1640 = vmatprep.subr.mxu0 %v187
    %1641 = vmatpush2.msra.mxu0 %v186
    %1642 = vmatprep.subr.mxu0 %v181
    %1643 = vmatpush2.msra.mxu0 %v180
    %1644 = vmatprep.subr.mxu0 %v175
    %1645 = vmatpush2.msra.mxu0 %v174
    %1646 = vmatprep.mubr.f32.mxu0 %v1501
    %1647 = vmatmul.mubr.f32.gmra.mxu0 %v1581
    %v1648 = vpop.f32.mrf.mxu0
    %v1649 = vadd.f32 %v292, %v1648
    %v1650 = vpop.f32.mrf.mxu0
    %v1651 = vadd.f32 %v296, %v1650
    %1652 = vdwg.mxu0
    %1653 = vmatprep.subr.mxu0 %v171
    %1654 = vmatpush1.msra.mxu0 %v170
    %1655 = vmatprep.subr.mxu0 %v165
    %1656 = vmatpush1.msra.mxu0 %v164
    %1657 = vmatprep.subr.mxu0 %v159
    %1658 = vmatpush1.msra.mxu0 %v158
    %1659 = vmatprep.subr.mxu0 %v153
    %1660 = vmatpush1.msra.mxu0 %v152
    %1661 = vmatprep.subr.mxu0 %v147
    %1662 = vmatpush1.msra.mxu0 %v146
    %1663 = vmatprep.subr.mxu0 %v141
    %1664 = vmatpush1.msra.mxu0 %v140
    %1665 = vmatprep.subr.mxu0 %v135
    %1666 = vmatpush1.msra.mxu0 %v134
    %1667 = vmatprep.subr.mxu0 %v129
    %1668 = vmatpush1.msra.mxu0 %v128
    %1669 = vmatprep.subr.mxu0 %v123
    %1670 = vmatpush1.msra.mxu0 %v122
    %1671 = vmatprep.subr.mxu0 %v117
    %1672 = vmatpush1.msra.mxu0 %v116
    %1673 = vmatprep.subr.mxu0 %v111
    %1674 = vmatpush1.msra.mxu0 %v110
    %1675 = vmatprep.subr.mxu0 %v105
    %1676 = vmatpush1.msra.mxu0 %v104
    %1677 = vmatprep.subr.mxu0 %v99
    %1678 = vmatpush1.msra.mxu0 %v98
    %1679 = vmatprep.subr.mxu0 %v93
    %1680 = vmatpush1.msra.mxu0 %v92
    %1681 = vmatprep.subr.mxu0 %v87
    %1682 = vmatpush1.msra.mxu0 %v86
    %1683 = vmatprep.subr.mxu0 %v81
    %1684 = vmatpush1.msra.mxu0 %v80
    %1685 = vmatprep.subr.mxu0 %v267
    %1686 = vmatpush2.msra.mxu0 %v266
    %1687 = vmatprep.subr.mxu0 %v261
    %1688 = vmatpush2.msra.mxu0 %v260
    %1689 = vmatprep.subr.mxu0 %v255
    %1690 = vmatpush2.msra.mxu0 %v254
    %1691 = vmatprep.subr.mxu0 %v249
    %1692 = vmatpush2.msra.mxu0 %v248
    %1693 = vmatprep.subr.mxu0 %v243
    %1694 = vmatpush2.msra.mxu0 %v242
    %1695 = vmatprep.subr.mxu0 %v237
    %1696 = vmatpush2.msra.mxu0 %v236
    %1697 = vmatprep.subr.mxu0 %v231
    %1698 = vmatpush2.msra.mxu0 %v230
    %1699 = vmatprep.subr.mxu0 %v225
    %1700 = vmatpush2.msra.mxu0 %v224
    %1701 = vmatprep.subr.mxu0 %v219
    %1702 = vmatpush2.msra.mxu0 %v218
    %1703 = vmatprep.subr.mxu0 %v213
    %1704 = vmatpush2.msra.mxu0 %v212
    %1705 = vmatprep.subr.mxu0 %v207
    %1706 = vmatpush2.msra.mxu0 %v206
    %1707 = vmatprep.subr.mxu0 %v201
    %1708 = vmatpush2.msra.mxu0 %v200
    %1709 = vmatprep.subr.mxu0 %v195
    %1710 = vmatpush2.msra.mxu0 %v194
    %1711 = vmatprep.subr.mxu0 %v189
    %1712 = vmatpush2.msra.mxu0 %v188
    %1713 = vmatprep.subr.mxu0 %v183
    %1714 = vmatpush2.msra.mxu0 %v182
    %1715 = vmatprep.subr.mxu0 %v177
    %1716 = vmatpush2.msra.mxu0 %v176
    %1717 = vmatprep.mubr.f32.mxu0 %v1501
    %1718 = vmatmul.mubr.f32.gmra.mxu0 %v1581
    %v1719 = vpop.f32.mrf.mxu0
    %v1720 = vadd.f32 %v300, %v1719
    %v1721 = vpop.f32.mrf.mxu0
    %v1722 = vadd.f32 %v304, %v1721
    %1723 = vdwg.mxu0
    %1724 = vmatprep.subr.mxu0 %v173
    %1725 = vmatpush1.msra.mxu0 %v172
    %1726 = vmatprep.subr.mxu0 %v167
    %1727 = vmatpush1.msra.mxu0 %v166
    %1728 = vmatprep.subr.mxu0 %v161
    %1729 = vmatpush1.msra.mxu0 %v160
    %1730 = vmatprep.subr.mxu0 %v155
    %1731 = vmatpush1.msra.mxu0 %v154
    %1732 = vmatprep.subr.mxu0 %v149
    %1733 = vmatpush1.msra.mxu0 %v148
    %1734 = vmatprep.subr.mxu0 %v143
    %1735 = vmatpush1.msra.mxu0 %v142
    %1736 = vmatprep.subr.mxu0 %v137
    %1737 = vmatpush1.msra.mxu0 %v136
    %1738 = vmatprep.subr.mxu0 %v131
    %1739 = vmatpush1.msra.mxu0 %v130
    %1740 = vmatprep.subr.mxu0 %v125
    %1741 = vmatpush1.msra.mxu0 %v124
    %1742 = vmatprep.subr.mxu0 %v119
    %1743 = vmatpush1.msra.mxu0 %v118
    %1744 = vmatprep.subr.mxu0 %v113
    %1745 = vmatpush1.msra.mxu0 %v112
    %1746 = vmatprep.subr.mxu0 %v107
    %1747 = vmatpush1.msra.mxu0 %v106
    %1748 = vmatprep.subr.mxu0 %v101
    %1749 = vmatpush1.msra.mxu0 %v100
    %1750 = vmatprep.subr.mxu0 %v95
    %1751 = vmatpush1.msra.mxu0 %v94
    %1752 = vmatprep.subr.mxu0 %v89
    %1753 = vmatpush1.msra.mxu0 %v88
    %1754 = vmatprep.subr.mxu0 %v83
    %1755 = vmatpush1.msra.mxu0 %v82
    %1756 = vmatprep.subr.mxu0 %v269
    %1757 = vmatpush2.msra.mxu0 %v268
    %1758 = vmatprep.subr.mxu0 %v263
    %1759 = vmatpush2.msra.mxu0 %v262
    %1760 = vmatprep.subr.mxu0 %v257
    %1761 = vmatpush2.msra.mxu0 %v256
    %1762 = vmatprep.subr.mxu0 %v251
    %1763 = vmatpush2.msra.mxu0 %v250
    %1764 = vmatprep.subr.mxu0 %v245
    %1765 = vmatpush2.msra.mxu0 %v244
    %1766 = vmatprep.subr.mxu0 %v239
    %1767 = vmatpush2.msra.mxu0 %v238
    %1768 = vmatprep.subr.mxu0 %v233
    %1769 = vmatpush2.msra.mxu0 %v232
    %1770 = vmatprep.subr.mxu0 %v227
    %1771 = vmatpush2.msra.mxu0 %v226
    %1772 = vmatprep.subr.mxu0 %v221
    %1773 = vmatpush2.msra.mxu0 %v220
    %1774 = vmatprep.subr.mxu0 %v215
    %1775 = vmatpush2.msra.mxu0 %v214
    %1776 = vmatprep.subr.mxu0 %v209
    %1777 = vmatpush2.msra.mxu0 %v208
    %1778 = vmatprep.subr.mxu0 %v203
    %1779 = vmatpush2.msra.mxu0 %v202
    %1780 = vmatprep.subr.mxu0 %v197
    %1781 = vmatpush2.msra.mxu0 %v196
    %1782 = vmatprep.subr.mxu0 %v191
    %1783 = vmatpush2.msra.mxu0 %v190
    %1784 = vmatprep.subr.mxu0 %v185
    %1785 = vmatpush2.msra.mxu0 %v184
    %1786 = vmatprep.subr.mxu0 %v179
    %1787 = vmatpush2.msra.mxu0 %v178
    %1788 = vmatprep.mubr.f32.mxu0 %v1501
    %1789 = vmatmul.mubr.f32.gmra.mxu0 %v1581
    %v1790 = vpop.f32.mrf.mxu0
    %v1791 = vadd.f32 %v308, %v1790
    %v1792 = vpop.f32.mrf.mxu0
    %v1793 = vadd.f32 %v312, %v1792
    %1794 = vdwg.mxu0
    %v1795 = vadd.f32 %v1649, %v1722
    %v1796 = vxor.u32 %v1795, 2147483648
    %v1797 = vmul.f32 %v1796, 1.442695
    %v1798 = vpow.pop %v1797
    %v1799 = vadd.f32 %v1798, 1.0
    %v1800 = vrcp.pop %v1799
    %v1801 = vmul.f32 1.0, %v1800
    %v1802 = vadd.f32 %v1651, %v1791
    %v1803 = vxor.u32 %v1802, 2147483648
    %v1804 = vmul.f32 %v1803, 1.442695
    %v1805 = vpow.pop %v1804
    %v1806 = vadd.f32 %v1805, 1.0
    %v1807 = vrcp.pop %v1806
    %v1808 = vmul.f32 1.0, %v1807
    %v1809 = vmul.f32 %v1801, %v1793
    %v1810 = vadd.f32 %v1720, %v1809
    %v1811 = vtanh.pop %v1810
    %v1812 = vsub.f32 1.0, %v1808
    %v1813 = vmul.f32 %v1812, %v1811
    %v1814 = vmul.f32 %v1808, %v1501
    %v1815 = vadd.f32 %v1813, %v1814
    %1816 = vmatprep.subr.mxu0 0.0
    %1817 = vmatpush1.msra.mxu0 %v286
    %1818 = vmatprep.subr.mxu0 0.0
    %1819 = vmatpush1.msra.mxu0 %v285
    %1820 = vmatprep.subr.mxu0 0.0
    %1821 = vmatpush1.msra.mxu0 %v284
    %1822 = vmatprep.subr.mxu0 0.0
    %1823 = vmatpush1.msra.mxu0 %v283
    %1824 = vmatprep.subr.mxu0 0.0
    %1825 = vmatpush1.msra.mxu0 %v282
    %1826 = vmatprep.subr.mxu0 0.0
    %1827 = vmatpush1.msra.mxu0 %v281
    %1828 = vmatprep.subr.mxu0 0.0
    %1829 = vmatpush1.msra.mxu0 %v280
    %1830 = vmatprep.subr.mxu0 0.0
    %1831 = vmatpush1.msra.mxu0 %v279
    %1832 = vmatprep.subr.mxu0 0.0
    %1833 = vmatpush1.msra.mxu0 %v278
    %1834 = vmatprep.subr.mxu0 0.0
    %1835 = vmatpush1.msra.mxu0 %v277
    %1836 = vmatprep.subr.mxu0 0.0
    %1837 = vmatpush1.msra.mxu0 %v276
    %1838 = vmatprep.subr.mxu0 0.0
    %1839 = vmatpush1.msra.mxu0 %v275
    %1840 = vmatprep.subr.mxu0 0.0
    %1841 = vmatpush1.msra.mxu0 %v274
    %1842 = vmatprep.subr.mxu0 0.0
    %1843 = vmatpush1.msra.mxu0 %v273
    %1844 = vmatprep.subr.mxu0 0.0
    %1845 = vmatpush1.msra.mxu0 %v272
    %1846 = vmatprep.subr.mxu0 0.0
    %1847 = vmatpush1.msra.mxu0 %v271
    %1848 = vmatprep.subr.mxu0 0.0
    %1849 = vmatpush2.msra.mxu0 0.0
    %1850 = vmatprep.subr.mxu0 0.0
    %1851 = vmatpush2.msra.mxu0 0.0
    %1852 = vmatprep.subr.mxu0 0.0
    %1853 = vmatpush2.msra.mxu0 0.0
    %1854 = vmatprep.subr.mxu0 0.0
    %1855 = vmatpush2.msra.mxu0 0.0
    %1856 = vmatprep.subr.mxu0 0.0
    %1857 = vmatpush2.msra.mxu0 0.0
    %1858 = vmatprep.subr.mxu0 0.0
    %1859 = vmatpush2.msra.mxu0 0.0
    %1860 = vmatprep.subr.mxu0 0.0
    %1861 = vmatpush2.msra.mxu0 0.0
    %1862 = vmatprep.subr.mxu0 0.0
    %1863 = vmatpush2.msra.mxu0 0.0
    %1864 = vmatprep.subr.mxu0 0.0
    %1865 = vmatpush2.msra.mxu0 0.0
    %1866 = vmatprep.subr.mxu0 0.0
    %1867 = vmatpush2.msra.mxu0 0.0
    %1868 = vmatprep.subr.mxu0 0.0
    %1869 = vmatpush2.msra.mxu0 0.0
    %1870 = vmatprep.subr.mxu0 0.0
    %1871 = vmatpush2.msra.mxu0 0.0
    %1872 = vmatprep.subr.mxu0 0.0
    %1873 = vmatpush2.msra.mxu0 0.0
    %1874 = vmatprep.subr.mxu0 0.0
    %1875 = vmatpush2.msra.mxu0 0.0
    %1876 = vmatprep.subr.mxu0 0.0
    %1877 = vmatpush2.msra.mxu0 0.0
    %1878 = vmatprep.subr.mxu0 0.0
    %1879 = vmatpush2.msra.mxu0 0.0
    %1880 = vmatprep.mubr.f32.mxu0 0.0
    %1881 = vmatmul.mubr.f32.gmra.mxu0 %v1815
    %v1882 = vpop.f32.mrf.mxu0
    %v1883 = vadd.f32 %v557, %v1882
    %v1884 = vpop.f32.mrf.mxu0
    %1885 = vdwg.mxu0
    %1886 = vmax.index.xlane.f32.xlu0 %v1883
    %v1887 = vpop.xlane.xlu0 %1886
    %v1888 = vlaneseq
    %v1889 = vshrl.u32 %v1888, 7
    %v1890 = vsub.s32 %v74, %v1889
    %v1891 = vrot.slane %v1887, %v1890
    %1892 = vst.msk [vmem:[#allocation10 + $0x4] sm:$0x1] %vm635, %v1891
    %vm1893 = vcmp.eq.s32.totalorder %v74, %v1887
    %v1894 = vsel %vm1893, 1, 0
    %v1895 = vcvt.s32.f32 %v1894
    %1896 = vmatprep.subr.mxu0 %v169
    %1897 = vmatpush1.msra.mxu0 %v168
    %1898 = vmatprep.subr.mxu0 %v163
    %1899 = vmatpush1.msra.mxu0 %v162
    %1900 = vmatprep.subr.mxu0 %v157
    %1901 = vmatpush1.msra.mxu0 %v156
    %1902 = vmatprep.subr.mxu0 %v151
    %1903 = vmatpush1.msra.mxu0 %v150
    %1904 = vmatprep.subr.mxu0 %v145
    %1905 = vmatpush1.msra.mxu0 %v144
    %1906 = vmatprep.subr.mxu0 %v139
    %1907 = vmatpush1.msra.mxu0 %v138
    %1908 = vmatprep.subr.mxu0 %v133
    %1909 = vmatpush1.msra.mxu0 %v132
    %1910 = vmatprep.subr.mxu0 %v127
    %1911 = vmatpush1.msra.mxu0 %v126
    %1912 = vmatprep.subr.mxu0 %v121
    %1913 = vmatpush1.msra.mxu0 %v120
    %1914 = vmatprep.subr.mxu0 %v115
    %1915 = vmatpush1.msra.mxu0 %v114
    %1916 = vmatprep.subr.mxu0 %v109
    %1917 = vmatpush1.msra.mxu0 %v108
    %1918 = vmatprep.subr.mxu0 %v103
    %1919 = vmatpush1.msra.mxu0 %v102
    %1920 = vmatprep.subr.mxu0 %v97
    %1921 = vmatpush1.msra.mxu0 %v96
    %1922 = vmatprep.subr.mxu0 %v91
    %1923 = vmatpush1.msra.mxu0 %v90
    %1924 = vmatprep.subr.mxu0 %v85
    %1925 = vmatpush1.msra.mxu0 %v84
    %1926 = vmatprep.subr.mxu0 %v79
    %1927 = vmatpush1.msra.mxu0 %v78
    %1928 = vmatprep.subr.mxu0 %v265
    %1929 = vmatpush2.msra.mxu0 %v264
    %1930 = vmatprep.subr.mxu0 %v259
    %1931 = vmatpush2.msra.mxu0 %v258
    %1932 = vmatprep.subr.mxu0 %v253
    %1933 = vmatpush2.msra.mxu0 %v252
    %1934 = vmatprep.subr.mxu0 %v247
    %1935 = vmatpush2.msra.mxu0 %v246
    %1936 = vmatprep.subr.mxu0 %v241
    %1937 = vmatpush2.msra.mxu0 %v240
    %1938 = vmatprep.subr.mxu0 %v235
    %1939 = vmatpush2.msra.mxu0 %v234
    %1940 = vmatprep.subr.mxu0 %v229
    %1941 = vmatpush2.msra.mxu0 %v228
    %1942 = vmatprep.subr.mxu0 %v223
    %1943 = vmatpush2.msra.mxu0 %v222
    %1944 = vmatprep.subr.mxu0 %v217
    %1945 = vmatpush2.msra.mxu0 %v216
    %1946 = vmatprep.subr.mxu0 %v211
    %1947 = vmatpush2.msra.mxu0 %v210
    %1948 = vmatprep.subr.mxu0 %v205
    %1949 = vmatpush2.msra.mxu0 %v204
    %1950 = vmatprep.subr.mxu0 %v199
    %1951 = vmatpush2.msra.mxu0 %v198
    %1952 = vmatprep.subr.mxu0 %v193
    %1953 = vmatpush2.msra.mxu0 %v192
    %1954 = vmatprep.subr.mxu0 %v187
    %1955 = vmatpush2.msra.mxu0 %v186
    %1956 = vmatprep.subr.mxu0 %v181
    %1957 = vmatpush2.msra.mxu0 %v180
    %1958 = vmatprep.subr.mxu0 %v175
    %1959 = vmatpush2.msra.mxu0 %v174
    %1960 = vmatprep.mubr.f32.mxu0 %v1815
    %1961 = vmatmul.mubr.f32.gmra.mxu0 %v1895
    %v1962 = vpop.f32.mrf.mxu0
    %v1963 = vadd.f32 %v292, %v1962
    %v1964 = vpop.f32.mrf.mxu0
    %v1965 = vadd.f32 %v296, %v1964
    %1966 = vdwg.mxu0
    %1967 = vmatprep.subr.mxu0 %v171
    %1968 = vmatpush1.msra.mxu0 %v170
    %1969 = vmatprep.subr.mxu0 %v165
    %1970 = vmatpush1.msra.mxu0 %v164
    %1971 = vmatprep.subr.mxu0 %v159
    %1972 = vmatpush1.msra.mxu0 %v158
    %1973 = vmatprep.subr.mxu0 %v153
    %1974 = vmatpush1.msra.mxu0 %v152
    %1975 = vmatprep.subr.mxu0 %v147
    %1976 = vmatpush1.msra.mxu0 %v146
    %1977 = vmatprep.subr.mxu0 %v141
    %1978 = vmatpush1.msra.mxu0 %v140
    %1979 = vmatprep.subr.mxu0 %v135
    %1980 = vmatpush1.msra.mxu0 %v134
    %1981 = vmatprep.subr.mxu0 %v129
    %1982 = vmatpush1.msra.mxu0 %v128
    %1983 = vmatprep.subr.mxu0 %v123
    %1984 = vmatpush1.msra.mxu0 %v122
    %1985 = vmatprep.subr.mxu0 %v117
    %1986 = vmatpush1.msra.mxu0 %v116
    %1987 = vmatprep.subr.mxu0 %v111
    %1988 = vmatpush1.msra.mxu0 %v110
    %1989 = vmatprep.subr.mxu0 %v105
    %1990 = vmatpush1.msra.mxu0 %v104
    %1991 = vmatprep.subr.mxu0 %v99
    %1992 = vmatpush1.msra.mxu0 %v98
    %1993 = vmatprep.subr.mxu0 %v93
    %1994 = vmatpush1.msra.mxu0 %v92
    %1995 = vmatprep.subr.mxu0 %v87
    %1996 = vmatpush1.msra.mxu0 %v86
    %1997 = vmatprep.subr.mxu0 %v81
    %1998 = vmatpush1.msra.mxu0 %v80
    %1999 = vmatprep.subr.mxu0 %v267
    %2000 = vmatpush2.msra.mxu0 %v266
    %2001 = vmatprep.subr.mxu0 %v261
    %2002 = vmatpush2.msra.mxu0 %v260
    %2003 = vmatprep.subr.mxu0 %v255
    %2004 = vmatpush2.msra.mxu0 %v254
    %2005 = vmatprep.subr.mxu0 %v249
    %2006 = vmatpush2.msra.mxu0 %v248
    %2007 = vmatprep.subr.mxu0 %v243
    %2008 = vmatpush2.msra.mxu0 %v242
    %2009 = vmatprep.subr.mxu0 %v237
    %2010 = vmatpush2.msra.mxu0 %v236
    %2011 = vmatprep.subr.mxu0 %v231
    %2012 = vmatpush2.msra.mxu0 %v230
    %2013 = vmatprep.subr.mxu0 %v225
    %2014 = vmatpush2.msra.mxu0 %v224
    %2015 = vmatprep.subr.mxu0 %v219
    %2016 = vmatpush2.msra.mxu0 %v218
    %2017 = vmatprep.subr.mxu0 %v213
    %2018 = vmatpush2.msra.mxu0 %v212
    %2019 = vmatprep.subr.mxu0 %v207
    %2020 = vmatpush2.msra.mxu0 %v206
    %2021 = vmatprep.subr.mxu0 %v201
    %2022 = vmatpush2.msra.mxu0 %v200
    %2023 = vmatprep.subr.mxu0 %v195
    %2024 = vmatpush2.msra.mxu0 %v194
    %2025 = vmatprep.subr.mxu0 %v189
    %2026 = vmatpush2.msra.mxu0 %v188
    %2027 = vmatprep.subr.mxu0 %v183
    %2028 = vmatpush2.msra.mxu0 %v182
    %2029 = vmatprep.subr.mxu0 %v177
    %2030 = vmatpush2.msra.mxu0 %v176
    %2031 = vmatprep.mubr.f32.mxu0 %v1815
    %2032 = vmatmul.mubr.f32.gmra.mxu0 %v1895
    %v2033 = vpop.f32.mrf.mxu0
    %v2034 = vadd.f32 %v300, %v2033
    %v2035 = vpop.f32.mrf.mxu0
    %v2036 = vadd.f32 %v304, %v2035
    %2037 = vdwg.mxu0
    %2038 = vmatprep.subr.mxu0 %v173
    %2039 = vmatpush1.msra.mxu0 %v172
    %2040 = vmatprep.subr.mxu0 %v167
    %2041 = vmatpush1.msra.mxu0 %v166
    %2042 = vmatprep.subr.mxu0 %v161
    %2043 = vmatpush1.msra.mxu0 %v160
    %2044 = vmatprep.subr.mxu0 %v155
    %2045 = vmatpush1.msra.mxu0 %v154
    %2046 = vmatprep.subr.mxu0 %v149
    %2047 = vmatpush1.msra.mxu0 %v148
    %2048 = vmatprep.subr.mxu0 %v143
    %2049 = vmatpush1.msra.mxu0 %v142
    %2050 = vmatprep.subr.mxu0 %v137
    %2051 = vmatpush1.msra.mxu0 %v136
    %2052 = vmatprep.subr.mxu0 %v131
    %2053 = vmatpush1.msra.mxu0 %v130
    %2054 = vmatprep.subr.mxu0 %v125
    %2055 = vmatpush1.msra.mxu0 %v124
    %2056 = vmatprep.subr.mxu0 %v119
    %2057 = vmatpush1.msra.mxu0 %v118
    %2058 = vmatprep.subr.mxu0 %v113
    %2059 = vmatpush1.msra.mxu0 %v112
    %2060 = vmatprep.subr.mxu0 %v107
    %2061 = vmatpush1.msra.mxu0 %v106
    %2062 = vmatprep.subr.mxu0 %v101
    %2063 = vmatpush1.msra.mxu0 %v100
    %2064 = vmatprep.subr.mxu0 %v95
    %2065 = vmatpush1.msra.mxu0 %v94
    %2066 = vmatprep.subr.mxu0 %v89
    %2067 = vmatpush1.msra.mxu0 %v88
    %2068 = vmatprep.subr.mxu0 %v83
    %2069 = vmatpush1.msra.mxu0 %v82
    %2070 = vmatprep.subr.mxu0 %v269
    %2071 = vmatpush2.msra.mxu0 %v268
    %2072 = vmatprep.subr.mxu0 %v263
    %2073 = vmatpush2.msra.mxu0 %v262
    %2074 = vmatprep.subr.mxu0 %v257
    %2075 = vmatpush2.msra.mxu0 %v256
    %2076 = vmatprep.subr.mxu0 %v251
    %2077 = vmatpush2.msra.mxu0 %v250
    %2078 = vmatprep.subr.mxu0 %v245
    %2079 = vmatpush2.msra.mxu0 %v244
    %2080 = vmatprep.subr.mxu0 %v239
    %2081 = vmatpush2.msra.mxu0 %v238
    %2082 = vmatprep.subr.mxu0 %v233
    %2083 = vmatpush2.msra.mxu0 %v232
    %2084 = vmatprep.subr.mxu0 %v227
    %2085 = vmatpush2.msra.mxu0 %v226
    %2086 = vmatprep.subr.mxu0 %v221
    %2087 = vmatpush2.msra.mxu0 %v220
    %2088 = vmatprep.subr.mxu0 %v215
    %2089 = vmatpush2.msra.mxu0 %v214
    %2090 = vmatprep.subr.mxu0 %v209
    %2091 = vmatpush2.msra.mxu0 %v208
    %2092 = vmatprep.subr.mxu0 %v203
    %2093 = vmatpush2.msra.mxu0 %v202
    %2094 = vmatprep.subr.mxu0 %v197
    %2095 = vmatpush2.msra.mxu0 %v196
    %2096 = vmatprep.subr.mxu0 %v191
    %2097 = vmatpush2.msra.mxu0 %v190
    %2098 = vmatprep.subr.mxu0 %v185
    %2099 = vmatpush2.msra.mxu0 %v184
    %2100 = vmatprep.subr.mxu0 %v179
    %2101 = vmatpush2.msra.mxu0 %v178
    %2102 = vmatprep.mubr.f32.mxu0 %v1815
    %2103 = vmatmul.mubr.f32.gmra.mxu0 %v1895
    %v2104 = vpop.f32.mrf.mxu0
    %v2105 = vadd.f32 %v308, %v2104
    %v2106 = vpop.f32.mrf.mxu0
    %v2107 = vadd.f32 %v312, %v2106
    %2108 = vdwg.mxu0
    %v2109 = vadd.f32 %v1963, %v2036
    %v2110 = vxor.u32 %v2109, 2147483648
    %v2111 = vmul.f32 %v2110, 1.442695
    %v2112 = vpow.pop %v2111
    %v2113 = vadd.f32 %v2112, 1.0
    %v2114 = vrcp.pop %v2113
    %v2115 = vmul.f32 1.0, %v2114
    %v2116 = vadd.f32 %v1965, %v2105
    %v2117 = vxor.u32 %v2116, 2147483648
    %v2118 = vmul.f32 %v2117, 1.442695
    %v2119 = vpow.pop %v2118
    %v2120 = vadd.f32 %v2119, 1.0
    %v2121 = vrcp.pop %v2120
    %v2122 = vmul.f32 1.0, %v2121
    %v2123 = vmul.f32 %v2115, %v2107
    %v2124 = vadd.f32 %v2034, %v2123
    %v2125 = vtanh.pop %v2124
    %v2126 = vsub.f32 1.0, %v2122
    %v2127 = vmul.f32 %v2126, %v2125
    %v2128 = vmul.f32 %v2122, %v1815
    %v2129 = vadd.f32 %v2127, %v2128
    %2130 = vmatprep.subr.mxu0 0.0
    %2131 = vmatpush1.msra.mxu0 %v286
    %2132 = vmatprep.subr.mxu0 0.0
    %2133 = vmatpush1.msra.mxu0 %v285
    %2134 = vmatprep.subr.mxu0 0.0
    %2135 = vmatpush1.msra.mxu0 %v284
    %2136 = vmatprep.subr.mxu0 0.0
    %2137 = vmatpush1.msra.mxu0 %v283
    %2138 = vmatprep.subr.mxu0 0.0
    %2139 = vmatpush1.msra.mxu0 %v282
    %2140 = vmatprep.subr.mxu0 0.0
    %2141 = vmatpush1.msra.mxu0 %v281
    %2142 = vmatprep.subr.mxu0 0.0
    %2143 = vmatpush1.msra.mxu0 %v280
    %2144 = vmatprep.subr.mxu0 0.0
    %2145 = vmatpush1.msra.mxu0 %v279
    %2146 = vmatprep.subr.mxu0 0.0
    %2147 = vmatpush1.msra.mxu0 %v278
    %2148 = vmatprep.subr.mxu0 0.0
    %2149 = vmatpush1.msra.mxu0 %v277
    %2150 = vmatprep.subr.mxu0 0.0
    %2151 = vmatpush1.msra.mxu0 %v276
    %2152 = vmatprep.subr.mxu0 0.0
    %2153 = vmatpush1.msra.mxu0 %v275
    %2154 = vmatprep.subr.mxu0 0.0
    %2155 = vmatpush1.msra.mxu0 %v274
    %2156 = vmatprep.subr.mxu0 0.0
    %2157 = vmatpush1.msra.mxu0 %v273
    %2158 = vmatprep.subr.mxu0 0.0
    %2159 = vmatpush1.msra.mxu0 %v272
    %2160 = vmatprep.subr.mxu0 0.0
    %2161 = vmatpush1.msra.mxu0 %v271
    %2162 = vmatprep.subr.mxu0 0.0
    %2163 = vmatpush2.msra.mxu0 0.0
    %2164 = vmatprep.subr.mxu0 0.0
    %2165 = vmatpush2.msra.mxu0 0.0
    %2166 = vmatprep.subr.mxu0 0.0
    %2167 = vmatpush2.msra.mxu0 0.0
    %2168 = vmatprep.subr.mxu0 0.0
    %2169 = vmatpush2.msra.mxu0 0.0
    %2170 = vmatprep.subr.mxu0 0.0
    %2171 = vmatpush2.msra.mxu0 0.0
    %2172 = vmatprep.subr.mxu0 0.0
    %2173 = vmatpush2.msra.mxu0 0.0
    %2174 = vmatprep.subr.mxu0 0.0
    %2175 = vmatpush2.msra.mxu0 0.0
    %2176 = vmatprep.subr.mxu0 0.0
    %2177 = vmatpush2.msra.mxu0 0.0
    %2178 = vmatprep.subr.mxu0 0.0
    %2179 = vmatpush2.msra.mxu0 0.0
    %2180 = vmatprep.subr.mxu0 0.0
    %2181 = vmatpush2.msra.mxu0 0.0
    %2182 = vmatprep.subr.mxu0 0.0
    %2183 = vmatpush2.msra.mxu0 0.0
    %2184 = vmatprep.subr.mxu0 0.0
    %2185 = vmatpush2.msra.mxu0 0.0
    %2186 = vmatprep.subr.mxu0 0.0
    %2187 = vmatpush2.msra.mxu0 0.0
    %2188 = vmatprep.subr.mxu0 0.0
    %2189 = vmatpush2.msra.mxu0 0.0
    %2190 = vmatprep.subr.mxu0 0.0
    %2191 = vmatpush2.msra.mxu0 0.0
    %2192 = vmatprep.subr.mxu0 0.0
    %2193 = vmatpush2.msra.mxu0 0.0
    %2194 = vmatprep.mubr.f32.mxu0 0.0
    %2195 = vmatmul.mubr.f32.gmra.mxu0 %v2129
    %v2196 = vpop.f32.mrf.mxu0
    %v2197 = vadd.f32 %v557, %v2196
    %v2198 = vpop.f32.mrf.mxu0
    %2199 = vdwg.mxu0
    %2200 = vmax.index.xlane.f32.xlu0 %v2197
    %v2201 = vpop.xlane.xlu0 %2200
    %v2202 = vlaneseq
    %v2203 = vshrl.u32 %v2202, 7
    %v2204 = vsub.s32 %v74, %v2203
    %v2205 = vrot.slane %v2201, %v2204
    %2206 = vst.msk [vmem:[#allocation10 + $0x5] sm:$0x1] %vm635, %v2205
    %vm2207 = vcmp.eq.s32.totalorder %v74, %v2201
    %v2208 = vsel %vm2207, 1, 0
    %v2209 = vcvt.s32.f32 %v2208
    %2210 = vmatprep.subr.mxu0 %v169
    %2211 = vmatpush1.msra.mxu0 %v168
    %2212 = vmatprep.subr.mxu0 %v163
    %2213 = vmatpush1.msra.mxu0 %v162
    %2214 = vmatprep.subr.mxu0 %v157
    %2215 = vmatpush1.msra.mxu0 %v156
    %2216 = vmatprep.subr.mxu0 %v151
    %2217 = vmatpush1.msra.mxu0 %v150
    %2218 = vmatprep.subr.mxu0 %v145
    %2219 = vmatpush1.msra.mxu0 %v144
    %2220 = vmatprep.subr.mxu0 %v139
    %2221 = vmatpush1.msra.mxu0 %v138
    %2222 = vmatprep.subr.mxu0 %v133
    %2223 = vmatpush1.msra.mxu0 %v132
    %2224 = vmatprep.subr.mxu0 %v127
    %2225 = vmatpush1.msra.mxu0 %v126
    %2226 = vmatprep.subr.mxu0 %v121
    %2227 = vmatpush1.msra.mxu0 %v120
    %2228 = vmatprep.subr.mxu0 %v115
    %2229 = vmatpush1.msra.mxu0 %v114
    %2230 = vmatprep.subr.mxu0 %v109
    %2231 = vmatpush1.msra.mxu0 %v108
    %2232 = vmatprep.subr.mxu0 %v103
    %2233 = vmatpush1.msra.mxu0 %v102
    %2234 = vmatprep.subr.mxu0 %v97
    %2235 = vmatpush1.msra.mxu0 %v96
    %2236 = vmatprep.subr.mxu0 %v91
    %2237 = vmatpush1.msra.mxu0 %v90
    %2238 = vmatprep.subr.mxu0 %v85
    %2239 = vmatpush1.msra.mxu0 %v84
    %2240 = vmatprep.subr.mxu0 %v79
    %2241 = vmatpush1.msra.mxu0 %v78
    %2242 = vmatprep.subr.mxu0 %v265
    %2243 = vmatpush2.msra.mxu0 %v264
    %2244 = vmatprep.subr.mxu0 %v259
    %2245 = vmatpush2.msra.mxu0 %v258
    %2246 = vmatprep.subr.mxu0 %v253
    %2247 = vmatpush2.msra.mxu0 %v252
    %2248 = vmatprep.subr.mxu0 %v247
    %2249 = vmatpush2.msra.mxu0 %v246
    %2250 = vmatprep.subr.mxu0 %v241
    %2251 = vmatpush2.msra.mxu0 %v240
    %2252 = vmatprep.subr.mxu0 %v235
    %2253 = vmatpush2.msra.mxu0 %v234
    %2254 = vmatprep.subr.mxu0 %v229
    %2255 = vmatpush2.msra.mxu0 %v228
    %2256 = vmatprep.subr.mxu0 %v223
    %2257 = vmatpush2.msra.mxu0 %v222
    %2258 = vmatprep.subr.mxu0 %v217
    %2259 = vmatpush2.msra.mxu0 %v216
    %2260 = vmatprep.subr.mxu0 %v211
    %2261 = vmatpush2.msra.mxu0 %v210
    %2262 = vmatprep.subr.mxu0 %v205
    %2263 = vmatpush2.msra.mxu0 %v204
    %2264 = vmatprep.subr.mxu0 %v199
    %2265 = vmatpush2.msra.mxu0 %v198
    %2266 = vmatprep.subr.mxu0 %v193
    %2267 = vmatpush2.msra.mxu0 %v192
    %2268 = vmatprep.subr.mxu0 %v187
    %2269 = vmatpush2.msra.mxu0 %v186
    %2270 = vmatprep.subr.mxu0 %v181
    %2271 = vmatpush2.msra.mxu0 %v180
    %2272 = vmatprep.subr.mxu0 %v175
    %2273 = vmatpush2.msra.mxu0 %v174
    %2274 = vmatprep.mubr.f32.mxu0 %v2129
    %2275 = vmatmul.mubr.f32.gmra.mxu0 %v2209
    %v2276 = vpop.f32.mrf.mxu0
    %v2277 = vadd.f32 %v292, %v2276
    %v2278 = vpop.f32.mrf.mxu0
    %v2279 = vadd.f32 %v296, %v2278
    %2280 = vdwg.mxu0
    %2281 = vmatprep.subr.mxu0 %v171
    %2282 = vmatpush1.msra.mxu0 %v170
    %2283 = vmatprep.subr.mxu0 %v165
    %2284 = vmatpush1.msra.mxu0 %v164
    %2285 = vmatprep.subr.mxu0 %v159
    %2286 = vmatpush1.msra.mxu0 %v158
    %2287 = vmatprep.subr.mxu0 %v153
    %2288 = vmatpush1.msra.mxu0 %v152
    %2289 = vmatprep.subr.mxu0 %v147
    %2290 = vmatpush1.msra.mxu0 %v146
    %2291 = vmatprep.subr.mxu0 %v141
    %2292 = vmatpush1.msra.mxu0 %v140
    %2293 = vmatprep.subr.mxu0 %v135
    %2294 = vmatpush1.msra.mxu0 %v134
    %2295 = vmatprep.subr.mxu0 %v129
    %2296 = vmatpush1.msra.mxu0 %v128
    %2297 = vmatprep.subr.mxu0 %v123
    %2298 = vmatpush1.msra.mxu0 %v122
    %2299 = vmatprep.subr.mxu0 %v117
    %2300 = vmatpush1.msra.mxu0 %v116
    %2301 = vmatprep.subr.mxu0 %v111
    %2302 = vmatpush1.msra.mxu0 %v110
    %2303 = vmatprep.subr.mxu0 %v105
    %2304 = vmatpush1.msra.mxu0 %v104
    %2305 = vmatprep.subr.mxu0 %v99
    %2306 = vmatpush1.msra.mxu0 %v98
    %2307 = vmatprep.subr.mxu0 %v93
    %2308 = vmatpush1.msra.mxu0 %v92
    %2309 = vmatprep.subr.mxu0 %v87
    %2310 = vmatpush1.msra.mxu0 %v86
    %2311 = vmatprep.subr.mxu0 %v81
    %2312 = vmatpush1.msra.mxu0 %v80
    %2313 = vmatprep.subr.mxu0 %v267
    %2314 = vmatpush2.msra.mxu0 %v266
    %2315 = vmatprep.subr.mxu0 %v261
    %2316 = vmatpush2.msra.mxu0 %v260
    %2317 = vmatprep.subr.mxu0 %v255
    %2318 = vmatpush2.msra.mxu0 %v254
    %2319 = vmatprep.subr.mxu0 %v249
    %2320 = vmatpush2.msra.mxu0 %v248
    %2321 = vmatprep.subr.mxu0 %v243
    %2322 = vmatpush2.msra.mxu0 %v242
    %2323 = vmatprep.subr.mxu0 %v237
    %2324 = vmatpush2.msra.mxu0 %v236
    %2325 = vmatprep.subr.mxu0 %v231
    %2326 = vmatpush2.msra.mxu0 %v230
    %2327 = vmatprep.subr.mxu0 %v225
    %2328 = vmatpush2.msra.mxu0 %v224
    %2329 = vmatprep.subr.mxu0 %v219
    %2330 = vmatpush2.msra.mxu0 %v218
    %2331 = vmatprep.subr.mxu0 %v213
    %2332 = vmatpush2.msra.mxu0 %v212
    %2333 = vmatprep.subr.mxu0 %v207
    %2334 = vmatpush2.msra.mxu0 %v206
    %2335 = vmatprep.subr.mxu0 %v201
    %2336 = vmatpush2.msra.mxu0 %v200
    %2337 = vmatprep.subr.mxu0 %v195
    %2338 = vmatpush2.msra.mxu0 %v194
    %2339 = vmatprep.subr.mxu0 %v189
    %2340 = vmatpush2.msra.mxu0 %v188
    %2341 = vmatprep.subr.mxu0 %v183
    %2342 = vmatpush2.msra.mxu0 %v182
    %2343 = vmatprep.subr.mxu0 %v177
    %2344 = vmatpush2.msra.mxu0 %v176
    %2345 = vmatprep.mubr.f32.mxu0 %v2129
    %2346 = vmatmul.mubr.f32.gmra.mxu0 %v2209
    %v2347 = vpop.f32.mrf.mxu0
    %v2348 = vadd.f32 %v300, %v2347
    %v2349 = vpop.f32.mrf.mxu0
    %v2350 = vadd.f32 %v304, %v2349
    %2351 = vdwg.mxu0
    %2352 = vmatprep.subr.mxu0 %v173
    %2353 = vmatpush1.msra.mxu0 %v172
    %2354 = vmatprep.subr.mxu0 %v167
    %2355 = vmatpush1.msra.mxu0 %v166
    %2356 = vmatprep.subr.mxu0 %v161
    %2357 = vmatpush1.msra.mxu0 %v160
    %2358 = vmatprep.subr.mxu0 %v155
    %2359 = vmatpush1.msra.mxu0 %v154
    %2360 = vmatprep.subr.mxu0 %v149
    %2361 = vmatpush1.msra.mxu0 %v148
    %2362 = vmatprep.subr.mxu0 %v143
    %2363 = vmatpush1.msra.mxu0 %v142
    %2364 = vmatprep.subr.mxu0 %v137
    %2365 = vmatpush1.msra.mxu0 %v136
    %2366 = vmatprep.subr.mxu0 %v131
    %2367 = vmatpush1.msra.mxu0 %v130
    %2368 = vmatprep.subr.mxu0 %v125
    %2369 = vmatpush1.msra.mxu0 %v124
    %2370 = vmatprep.subr.mxu0 %v119
    %2371 = vmatpush1.msra.mxu0 %v118
    %2372 = vmatprep.subr.mxu0 %v113
    %2373 = vmatpush1.msra.mxu0 %v112
    %2374 = vmatprep.subr.mxu0 %v107
    %2375 = vmatpush1.msra.mxu0 %v106
    %2376 = vmatprep.subr.mxu0 %v101
    %2377 = vmatpush1.msra.mxu0 %v100
    %2378 = vmatprep.subr.mxu0 %v95
    %2379 = vmatpush1.msra.mxu0 %v94
    %2380 = vmatprep.subr.mxu0 %v89
    %2381 = vmatpush1.msra.mxu0 %v88
    %2382 = vmatprep.subr.mxu0 %v83
    %2383 = vmatpush1.msra.mxu0 %v82
    %2384 = vmatprep.subr.mxu0 %v269
    %2385 = vmatpush2.msra.mxu0 %v268
    %2386 = vmatprep.subr.mxu0 %v263
    %2387 = vmatpush2.msra.mxu0 %v262
    %2388 = vmatprep.subr.mxu0 %v257
    %2389 = vmatpush2.msra.mxu0 %v256
    %2390 = vmatprep.subr.mxu0 %v251
    %2391 = vmatpush2.msra.mxu0 %v250
    %2392 = vmatprep.subr.mxu0 %v245
    %2393 = vmatpush2.msra.mxu0 %v244
    %2394 = vmatprep.subr.mxu0 %v239
    %2395 = vmatpush2.msra.mxu0 %v238
    %2396 = vmatprep.subr.mxu0 %v233
    %2397 = vmatpush2.msra.mxu0 %v232
    %2398 = vmatprep.subr.mxu0 %v227
    %2399 = vmatpush2.msra.mxu0 %v226
    %2400 = vmatprep.subr.mxu0 %v221
    %2401 = vmatpush2.msra.mxu0 %v220
    %2402 = vmatprep.subr.mxu0 %v215
    %2403 = vmatpush2.msra.mxu0 %v214
    %2404 = vmatprep.subr.mxu0 %v209
    %2405 = vmatpush2.msra.mxu0 %v208
    %2406 = vmatprep.subr.mxu0 %v203
    %2407 = vmatpush2.msra.mxu0 %v202
    %2408 = vmatprep.subr.mxu0 %v197
    %2409 = vmatpush2.msra.mxu0 %v196
    %2410 = vmatprep.subr.mxu0 %v191
    %2411 = vmatpush2.msra.mxu0 %v190
    %2412 = vmatprep.subr.mxu0 %v185
    %2413 = vmatpush2.msra.mxu0 %v184
    %2414 = vmatprep.subr.mxu0 %v179
    %2415 = vmatpush2.msra.mxu0 %v178
    %2416 = vmatprep.mubr.f32.mxu0 %v2129
    %2417 = vmatmul.mubr.f32.gmra.mxu0 %v2209
    %v2418 = vpop.f32.mrf.mxu0
    %v2419 = vadd.f32 %v308, %v2418
    %v2420 = vpop.f32.mrf.mxu0
    %v2421 = vadd.f32 %v312, %v2420
    %2422 = vdwg.mxu0
    %v2423 = vadd.f32 %v2277, %v2350
    %v2424 = vxor.u32 %v2423, 2147483648
    %v2425 = vmul.f32 %v2424, 1.442695
    %v2426 = vpow.pop %v2425
    %v2427 = vadd.f32 %v2426, 1.0
    %v2428 = vrcp.pop %v2427
    %v2429 = vmul.f32 1.0, %v2428
    %v2430 = vadd.f32 %v2279, %v2419
    %v2431 = vxor.u32 %v2430, 2147483648
    %v2432 = vmul.f32 %v2431, 1.442695
    %v2433 = vpow.pop %v2432
    %v2434 = vadd.f32 %v2433, 1.0
    %v2435 = vrcp.pop %v2434
    %v2436 = vmul.f32 1.0, %v2435
    %v2437 = vmul.f32 %v2429, %v2421
    %v2438 = vadd.f32 %v2348, %v2437
    %v2439 = vtanh.pop %v2438
    %v2440 = vsub.f32 1.0, %v2436
    %v2441 = vmul.f32 %v2440, %v2439
    %v2442 = vmul.f32 %v2436, %v2129
    %v2443 = vadd.f32 %v2441, %v2442
    %2444 = vmatprep.subr.mxu0 0.0
    %2445 = vmatpush1.msra.mxu0 %v286
    %2446 = vmatprep.subr.mxu0 0.0
    %2447 = vmatpush1.msra.mxu0 %v285
    %2448 = vmatprep.subr.mxu0 0.0
    %2449 = vmatpush1.msra.mxu0 %v284
    %2450 = vmatprep.subr.mxu0 0.0
    %2451 = vmatpush1.msra.mxu0 %v283
    %2452 = vmatprep.subr.mxu0 0.0
    %2453 = vmatpush1.msra.mxu0 %v282
    %2454 = vmatprep.subr.mxu0 0.0
    %2455 = vmatpush1.msra.mxu0 %v281
    %2456 = vmatprep.subr.mxu0 0.0
    %2457 = vmatpush1.msra.mxu0 %v280
    %2458 = vmatprep.subr.mxu0 0.0
    %2459 = vmatpush1.msra.mxu0 %v279
    %2460 = vmatprep.subr.mxu0 0.0
    %2461 = vmatpush1.msra.mxu0 %v278
    %2462 = vmatprep.subr.mxu0 0.0
    %2463 = vmatpush1.msra.mxu0 %v277
    %2464 = vmatprep.subr.mxu0 0.0
    %2465 = vmatpush1.msra.mxu0 %v276
    %2466 = vmatprep.subr.mxu0 0.0
    %2467 = vmatpush1.msra.mxu0 %v275
    %2468 = vmatprep.subr.mxu0 0.0
    %2469 = vmatpush1.msra.mxu0 %v274
    %2470 = vmatprep.subr.mxu0 0.0
    %2471 = vmatpush1.msra.mxu0 %v273
    %2472 = vmatprep.subr.mxu0 0.0
    %2473 = vmatpush1.msra.mxu0 %v272
    %2474 = vmatprep.subr.mxu0 0.0
    %2475 = vmatpush1.msra.mxu0 %v271
    %2476 = vmatprep.subr.mxu0 0.0
    %2477 = vmatpush2.msra.mxu0 0.0
    %2478 = vmatprep.subr.mxu0 0.0
    %2479 = vmatpush2.msra.mxu0 0.0
    %2480 = vmatprep.subr.mxu0 0.0
    %2481 = vmatpush2.msra.mxu0 0.0
    %2482 = vmatprep.subr.mxu0 0.0
    %2483 = vmatpush2.msra.mxu0 0.0
    %2484 = vmatprep.subr.mxu0 0.0
    %2485 = vmatpush2.msra.mxu0 0.0
    %2486 = vmatprep.subr.mxu0 0.0
    %2487 = vmatpush2.msra.mxu0 0.0
    %2488 = vmatprep.subr.mxu0 0.0
    %2489 = vmatpush2.msra.mxu0 0.0
    %2490 = vmatprep.subr.mxu0 0.0
    %2491 = vmatpush2.msra.mxu0 0.0
    %2492 = vmatprep.subr.mxu0 0.0
    %2493 = vmatpush2.msra.mxu0 0.0
    %2494 = vmatprep.subr.mxu0 0.0
    %2495 = vmatpush2.msra.mxu0 0.0
    %2496 = vmatprep.subr.mxu0 0.0
    %2497 = vmatpush2.msra.mxu0 0.0
    %2498 = vmatprep.subr.mxu0 0.0
    %2499 = vmatpush2.msra.mxu0 0.0
    %2500 = vmatprep.subr.mxu0 0.0
    %2501 = vmatpush2.msra.mxu0 0.0
    %2502 = vmatprep.subr.mxu0 0.0
    %2503 = vmatpush2.msra.mxu0 0.0
    %2504 = vmatprep.subr.mxu0 0.0
    %2505 = vmatpush2.msra.mxu0 0.0
    %2506 = vmatprep.subr.mxu0 0.0
    %2507 = vmatpush2.msra.mxu0 0.0
    %2508 = vmatprep.mubr.f32.mxu0 0.0
    %2509 = vmatmul.mubr.f32.gmra.mxu0 %v2443
    %v2510 = vpop.f32.mrf.mxu0
    %v2511 = vadd.f32 %v557, %v2510
    %v2512 = vpop.f32.mrf.mxu0
    %2513 = vdwg.mxu0
    %2514 = vmax.index.xlane.f32.xlu0 %v2511
    %v2515 = vpop.xlane.xlu0 %2514
    %v2516 = vlaneseq
    %v2517 = vshrl.u32 %v2516, 7
    %v2518 = vsub.s32 %v74, %v2517
    %v2519 = vrot.slane %v2515, %v2518
    %2520 = vst.msk [vmem:[#allocation10 + $0x6] sm:$0x1] %vm635, %v2519
    %vm2521 = vcmp.eq.s32.totalorder %v74, %v2515
    %v2522 = vsel %vm2521, 1, 0
    %v2523 = vcvt.s32.f32 %v2522
    %2524 = vmatprep.subr.mxu0 %v169
    %2525 = vmatpush1.msra.mxu0 %v168
    %2526 = vmatprep.subr.mxu0 %v163
    %2527 = vmatpush1.msra.mxu0 %v162
    %2528 = vmatprep.subr.mxu0 %v157
    %2529 = vmatpush1.msra.mxu0 %v156
    %2530 = vmatprep.subr.mxu0 %v151
    %2531 = vmatpush1.msra.mxu0 %v150
    %2532 = vmatprep.subr.mxu0 %v145
    %2533 = vmatpush1.msra.mxu0 %v144
    %2534 = vmatprep.subr.mxu0 %v139
    %2535 = vmatpush1.msra.mxu0 %v138
    %2536 = vmatprep.subr.mxu0 %v133
    %2537 = vmatpush1.msra.mxu0 %v132
    %2538 = vmatprep.subr.mxu0 %v127
    %2539 = vmatpush1.msra.mxu0 %v126
    %2540 = vmatprep.subr.mxu0 %v121
    %2541 = vmatpush1.msra.mxu0 %v120
    %2542 = vmatprep.subr.mxu0 %v115
    %2543 = vmatpush1.msra.mxu0 %v114
    %2544 = vmatprep.subr.mxu0 %v109
    %2545 = vmatpush1.msra.mxu0 %v108
    %2546 = vmatprep.subr.mxu0 %v103
    %2547 = vmatpush1.msra.mxu0 %v102
    %2548 = vmatprep.subr.mxu0 %v97
    %2549 = vmatpush1.msra.mxu0 %v96
    %2550 = vmatprep.subr.mxu0 %v91
    %2551 = vmatpush1.msra.mxu0 %v90
    %2552 = vmatprep.subr.mxu0 %v85
    %2553 = vmatpush1.msra.mxu0 %v84
    %2554 = vmatprep.subr.mxu0 %v79
    %2555 = vmatpush1.msra.mxu0 %v78
    %2556 = vmatprep.subr.mxu0 %v265
    %2557 = vmatpush2.msra.mxu0 %v264
    %2558 = vmatprep.subr.mxu0 %v259
    %2559 = vmatpush2.msra.mxu0 %v258
    %2560 = vmatprep.subr.mxu0 %v253
    %2561 = vmatpush2.msra.mxu0 %v252
    %2562 = vmatprep.subr.mxu0 %v247
    %2563 = vmatpush2.msra.mxu0 %v246
    %2564 = vmatprep.subr.mxu0 %v241
    %2565 = vmatpush2.msra.mxu0 %v240
    %2566 = vmatprep.subr.mxu0 %v235
    %2567 = vmatpush2.msra.mxu0 %v234
    %2568 = vmatprep.subr.mxu0 %v229
    %2569 = vmatpush2.msra.mxu0 %v228
    %2570 = vmatprep.subr.mxu0 %v223
    %2571 = vmatpush2.msra.mxu0 %v222
    %2572 = vmatprep.subr.mxu0 %v217
    %2573 = vmatpush2.msra.mxu0 %v216
    %2574 = vmatprep.subr.mxu0 %v211
    %2575 = vmatpush2.msra.mxu0 %v210
    %2576 = vmatprep.subr.mxu0 %v205
    %2577 = vmatpush2.msra.mxu0 %v204
    %2578 = vmatprep.subr.mxu0 %v199
    %2579 = vmatpush2.msra.mxu0 %v198
    %2580 = vmatprep.subr.mxu0 %v193
    %2581 = vmatpush2.msra.mxu0 %v192
    %2582 = vmatprep.subr.mxu0 %v187
    %2583 = vmatpush2.msra.mxu0 %v186
    %2584 = vmatprep.subr.mxu0 %v181
    %2585 = vmatpush2.msra.mxu0 %v180
    %2586 = vmatprep.subr.mxu0 %v175
    %2587 = vmatpush2.msra.mxu0 %v174
    %2588 = vmatprep.mubr.f32.mxu0 %v2443
    %2589 = vmatmul.mubr.f32.gmra.mxu0 %v2523
    %v2590 = vpop.f32.mrf.mxu0
    %v2591 = vadd.f32 %v292, %v2590
    %v2592 = vpop.f32.mrf.mxu0
    %v2593 = vadd.f32 %v296, %v2592
    %2594 = vdwg.mxu0
    %2595 = vmatprep.subr.mxu0 %v171
    %2596 = vmatpush1.msra.mxu0 %v170
    %2597 = vmatprep.subr.mxu0 %v165
    %2598 = vmatpush1.msra.mxu0 %v164
    %2599 = vmatprep.subr.mxu0 %v159
    %2600 = vmatpush1.msra.mxu0 %v158
    %2601 = vmatprep.subr.mxu0 %v153
    %2602 = vmatpush1.msra.mxu0 %v152
    %2603 = vmatprep.subr.mxu0 %v147
    %2604 = vmatpush1.msra.mxu0 %v146
    %2605 = vmatprep.subr.mxu0 %v141
    %2606 = vmatpush1.msra.mxu0 %v140
    %2607 = vmatprep.subr.mxu0 %v135
    %2608 = vmatpush1.msra.mxu0 %v134
    %2609 = vmatprep.subr.mxu0 %v129
    %2610 = vmatpush1.msra.mxu0 %v128
    %2611 = vmatprep.subr.mxu0 %v123
    %2612 = vmatpush1.msra.mxu0 %v122
    %2613 = vmatprep.subr.mxu0 %v117
    %2614 = vmatpush1.msra.mxu0 %v116
    %2615 = vmatprep.subr.mxu0 %v111
    %2616 = vmatpush1.msra.mxu0 %v110
    %2617 = vmatprep.subr.mxu0 %v105
    %2618 = vmatpush1.msra.mxu0 %v104
    %2619 = vmatprep.subr.mxu0 %v99
    %2620 = vmatpush1.msra.mxu0 %v98
    %2621 = vmatprep.subr.mxu0 %v93
    %2622 = vmatpush1.msra.mxu0 %v92
    %2623 = vmatprep.subr.mxu0 %v87
    %2624 = vmatpush1.msra.mxu0 %v86
    %2625 = vmatprep.subr.mxu0 %v81
    %2626 = vmatpush1.msra.mxu0 %v80
    %2627 = vmatprep.subr.mxu0 %v267
    %2628 = vmatpush2.msra.mxu0 %v266
    %2629 = vmatprep.subr.mxu0 %v261
    %2630 = vmatpush2.msra.mxu0 %v260
    %2631 = vmatprep.subr.mxu0 %v255
    %2632 = vmatpush2.msra.mxu0 %v254
    %2633 = vmatprep.subr.mxu0 %v249
    %2634 = vmatpush2.msra.mxu0 %v248
    %2635 = vmatprep.subr.mxu0 %v243
    %2636 = vmatpush2.msra.mxu0 %v242
    %2637 = vmatprep.subr.mxu0 %v237
    %2638 = vmatpush2.msra.mxu0 %v236
    %2639 = vmatprep.subr.mxu0 %v231
    %2640 = vmatpush2.msra.mxu0 %v230
    %2641 = vmatprep.subr.mxu0 %v225
    %2642 = vmatpush2.msra.mxu0 %v224
    %2643 = vmatprep.subr.mxu0 %v219
    %2644 = vmatpush2.msra.mxu0 %v218
    %2645 = vmatprep.subr.mxu0 %v213
    %2646 = vmatpush2.msra.mxu0 %v212
    %2647 = vmatprep.subr.mxu0 %v207
    %2648 = vmatpush2.msra.mxu0 %v206
    %2649 = vmatprep.subr.mxu0 %v201
    %2650 = vmatpush2.msra.mxu0 %v200
    %2651 = vmatprep.subr.mxu0 %v195
    %2652 = vmatpush2.msra.mxu0 %v194
    %2653 = vmatprep.subr.mxu0 %v189
    %2654 = vmatpush2.msra.mxu0 %v188
    %2655 = vmatprep.subr.mxu0 %v183
    %2656 = vmatpush2.msra.mxu0 %v182
    %2657 = vmatprep.subr.mxu0 %v177
    %2658 = vmatpush2.msra.mxu0 %v176
    %2659 = vmatprep.mubr.f32.mxu0 %v2443
    %2660 = vmatmul.mubr.f32.gmra.mxu0 %v2523
    %v2661 = vpop.f32.mrf.mxu0
    %v2662 = vadd.f32 %v300, %v2661
    %v2663 = vpop.f32.mrf.mxu0
    %v2664 = vadd.f32 %v304, %v2663
    %2665 = vdwg.mxu0
    %2666 = vmatprep.subr.mxu0 %v173
    %2667 = vmatpush1.msra.mxu0 %v172
    %2668 = vmatprep.subr.mxu0 %v167
    %2669 = vmatpush1.msra.mxu0 %v166
    %2670 = vmatprep.subr.mxu0 %v161
    %2671 = vmatpush1.msra.mxu0 %v160
    %2672 = vmatprep.subr.mxu0 %v155
    %2673 = vmatpush1.msra.mxu0 %v154
    %2674 = vmatprep.subr.mxu0 %v149
    %2675 = vmatpush1.msra.mxu0 %v148
    %2676 = vmatprep.subr.mxu0 %v143
    %2677 = vmatpush1.msra.mxu0 %v142
    %2678 = vmatprep.subr.mxu0 %v137
    %2679 = vmatpush1.msra.mxu0 %v136
    %2680 = vmatprep.subr.mxu0 %v131
    %2681 = vmatpush1.msra.mxu0 %v130
    %2682 = vmatprep.subr.mxu0 %v125
    %2683 = vmatpush1.msra.mxu0 %v124
    %2684 = vmatprep.subr.mxu0 %v119
    %2685 = vmatpush1.msra.mxu0 %v118
    %2686 = vmatprep.subr.mxu0 %v113
    %2687 = vmatpush1.msra.mxu0 %v112
    %2688 = vmatprep.subr.mxu0 %v107
    %2689 = vmatpush1.msra.mxu0 %v106
    %2690 = vmatprep.subr.mxu0 %v101
    %2691 = vmatpush1.msra.mxu0 %v100
    %2692 = vmatprep.subr.mxu0 %v95
    %2693 = vmatpush1.msra.mxu0 %v94
    %2694 = vmatprep.subr.mxu0 %v89
    %2695 = vmatpush1.msra.mxu0 %v88
    %2696 = vmatprep.subr.mxu0 %v83
    %2697 = vmatpush1.msra.mxu0 %v82
    %2698 = vmatprep.subr.mxu0 %v269
    %2699 = vmatpush2.msra.mxu0 %v268
    %2700 = vmatprep.subr.mxu0 %v263
    %2701 = vmatpush2.msra.mxu0 %v262
    %2702 = vmatprep.subr.mxu0 %v257
    %2703 = vmatpush2.msra.mxu0 %v256
    %2704 = vmatprep.subr.mxu0 %v251
    %2705 = vmatpush2.msra.mxu0 %v250
    %2706 = vmatprep.subr.mxu0 %v245
    %2707 = vmatpush2.msra.mxu0 %v244
    %2708 = vmatprep.subr.mxu0 %v239
    %2709 = vmatpush2.msra.mxu0 %v238
    %2710 = vmatprep.subr.mxu0 %v233
    %2711 = vmatpush2.msra.mxu0 %v232
    %2712 = vmatprep.subr.mxu0 %v227
    %2713 = vmatpush2.msra.mxu0 %v226
    %2714 = vmatprep.subr.mxu0 %v221
    %2715 = vmatpush2.msra.mxu0 %v220
    %2716 = vmatprep.subr.mxu0 %v215
    %2717 = vmatpush2.msra.mxu0 %v214
    %2718 = vmatprep.subr.mxu0 %v209
    %2719 = vmatpush2.msra.mxu0 %v208
    %2720 = vmatprep.subr.mxu0 %v203
    %2721 = vmatpush2.msra.mxu0 %v202
    %2722 = vmatprep.subr.mxu0 %v197
    %2723 = vmatpush2.msra.mxu0 %v196
    %2724 = vmatprep.subr.mxu0 %v191
    %2725 = vmatpush2.msra.mxu0 %v190
    %2726 = vmatprep.subr.mxu0 %v185
    %2727 = vmatpush2.msra.mxu0 %v184
    %2728 = vmatprep.subr.mxu0 %v179
    %2729 = vmatpush2.msra.mxu0 %v178
    %2730 = vmatprep.mubr.f32.mxu0 %v2443
    %2731 = vmatmul.mubr.f32.gmra.mxu0 %v2523
    %v2732 = vpop.f32.mrf.mxu0
    %v2733 = vadd.f32 %v308, %v2732
    %v2734 = vpop.f32.mrf.mxu0
    %v2735 = vadd.f32 %v312, %v2734
    %2736 = vdwg.mxu0
    %v2737 = vadd.f32 %v2591, %v2664
    %v2738 = vxor.u32 %v2737, 2147483648
    %v2739 = vmul.f32 %v2738, 1.442695
    %v2740 = vpow.pop %v2739
    %v2741 = vadd.f32 %v2740, 1.0
    %v2742 = vrcp.pop %v2741
    %v2743 = vmul.f32 1.0, %v2742
    %v2744 = vadd.f32 %v2593, %v2733
    %v2745 = vxor.u32 %v2744, 2147483648
    %v2746 = vmul.f32 %v2745, 1.442695
    %v2747 = vpow.pop %v2746
    %v2748 = vadd.f32 %v2747, 1.0
    %v2749 = vrcp.pop %v2748
    %v2750 = vmul.f32 1.0, %v2749
    %v2751 = vmul.f32 %v2743, %v2735
    %v2752 = vadd.f32 %v2662, %v2751
    %v2753 = vtanh.pop %v2752
    %v2754 = vsub.f32 1.0, %v2750
    %v2755 = vmul.f32 %v2754, %v2753
    %v2756 = vmul.f32 %v2750, %v2443
    %v2757 = vadd.f32 %v2755, %v2756
    %2758 = vmatprep.subr.mxu0 0.0
    %2759 = vmatpush1.msra.mxu0 %v286
    %2760 = vmatprep.subr.mxu0 0.0
    %2761 = vmatpush1.msra.mxu0 %v285
    %2762 = vmatprep.subr.mxu0 0.0
    %2763 = vmatpush1.msra.mxu0 %v284
    %2764 = vmatprep.subr.mxu0 0.0
    %2765 = vmatpush1.msra.mxu0 %v283
    %2766 = vmatprep.subr.mxu0 0.0
    %2767 = vmatpush1.msra.mxu0 %v282
    %2768 = vmatprep.subr.mxu0 0.0
    %2769 = vmatpush1.msra.mxu0 %v281
    %2770 = vmatprep.subr.mxu0 0.0
    %2771 = vmatpush1.msra.mxu0 %v280
    %2772 = vmatprep.subr.mxu0 0.0
    %2773 = vmatpush1.msra.mxu0 %v279
    %2774 = vmatprep.subr.mxu0 0.0
    %2775 = vmatpush1.msra.mxu0 %v278
    %2776 = vmatprep.subr.mxu0 0.0
    %2777 = vmatpush1.msra.mxu0 %v277
    %2778 = vmatprep.subr.mxu0 0.0
    %2779 = vmatpush1.msra.mxu0 %v276
    %2780 = vmatprep.subr.mxu0 0.0
    %2781 = vmatpush1.msra.mxu0 %v275
    %2782 = vmatprep.subr.mxu0 0.0
    %2783 = vmatpush1.msra.mxu0 %v274
    %2784 = vmatprep.subr.mxu0 0.0
    %2785 = vmatpush1.msra.mxu0 %v273
    %2786 = vmatprep.subr.mxu0 0.0
    %2787 = vmatpush1.msra.mxu0 %v272
    %2788 = vmatprep.subr.mxu0 0.0
    %2789 = vmatpush1.msra.mxu0 %v271
    %2790 = vmatprep.subr.mxu0 0.0
    %2791 = vmatpush2.msra.mxu0 0.0
    %2792 = vmatprep.subr.mxu0 0.0
    %2793 = vmatpush2.msra.mxu0 0.0
    %2794 = vmatprep.subr.mxu0 0.0
    %2795 = vmatpush2.msra.mxu0 0.0
    %2796 = vmatprep.subr.mxu0 0.0
    %2797 = vmatpush2.msra.mxu0 0.0
    %2798 = vmatprep.subr.mxu0 0.0
    %2799 = vmatpush2.msra.mxu0 0.0
    %2800 = vmatprep.subr.mxu0 0.0
    %2801 = vmatpush2.msra.mxu0 0.0
    %2802 = vmatprep.subr.mxu0 0.0
    %2803 = vmatpush2.msra.mxu0 0.0
    %2804 = vmatprep.subr.mxu0 0.0
    %2805 = vmatpush2.msra.mxu0 0.0
    %2806 = vmatprep.subr.mxu0 0.0
    %2807 = vmatpush2.msra.mxu0 0.0
    %2808 = vmatprep.subr.mxu0 0.0
    %2809 = vmatpush2.msra.mxu0 0.0
    %2810 = vmatprep.subr.mxu0 0.0
    %2811 = vmatpush2.msra.mxu0 0.0
    %2812 = vmatprep.subr.mxu0 0.0
    %2813 = vmatpush2.msra.mxu0 0.0
    %2814 = vmatprep.subr.mxu0 0.0
    %2815 = vmatpush2.msra.mxu0 0.0
    %2816 = vmatprep.subr.mxu0 0.0
    %2817 = vmatpush2.msra.mxu0 0.0
    %2818 = vmatprep.subr.mxu0 0.0
    %2819 = vmatpush2.msra.mxu0 0.0
    %2820 = vmatprep.subr.mxu0 0.0
    %2821 = vmatpush2.msra.mxu0 0.0
    %2822 = vmatprep.mubr.f32.mxu0 0.0
    %2823 = vmatmul.mubr.f32.gmra.mxu0 %v2757
    %v2824 = vpop.f32.mrf.mxu0
    %v2825 = vadd.f32 %v557, %v2824
    %v2826 = vpop.f32.mrf.mxu0
    %2827 = vdwg.mxu0
    %2828 = vmax.index.xlane.f32.xlu0 %v2825
    %v2829 = vpop.xlane.xlu0 %2828
    %v2830 = vlaneseq
    %v2831 = vshrl.u32 %v2830, 7
    %v2832 = vsub.s32 %v74, %v2831
    %v2833 = vrot.slane %v2829, %v2832
    %2834 = vst.msk [vmem:[#allocation10 + $0x7] sm:$0x1] %vm635, %v2833
    // Predicated region
    $region38: #{tpu_custom_call.1} parent=1 // pred_check
      _
    $region39: #{tpu_custom_call.1} parent=1 // pred_check_branch
      %2836 = sbr.rel (0) target = $region41
    $region40: #{tpu_custom_call.1} parent=1 // pred_region
      %s2838 = ssub.s32 128, 128
      %2839 = vsyncadd [#allocation4], %s2838
      %s2841 = sshll.u32 [#allocation10], 4
      %s2842 = int_to_ptr.vmem [resolvable:$true] %s2841
      %2844 = dma.vmem_to_hbm [thread:$0]  %s2842, 128, %s5, [#allocation4]
    $region41: #{tpu_custom_call.1} parent=1 // pred_fallthru
      _
    // Predicated region
    $region42: #{tpu_custom_call.1} parent=1 // pred_check
      _
    $region43: #{tpu_custom_call.1} parent=1 // pred_check_branch
      %2846 = sbr.rel (0) target = $region45
    $region44: #{tpu_custom_call.1} parent=1 // pred_region
      %2847 = dma.done [#allocation4], 128
    $region45: #{tpu_custom_call.1} parent=1 // pred_fallthru
      _
    %2848 = vsyncpa [#allocation3], 1
    %2849 = vsyncpa [#allocation6], 1
    %2850 = vsyncpa [#allocation9], 1
    %2851 = vsyncpa [#allocation4], 1

</llo_original>
